<compile_context>
chip_gen: v7x
topology: tpu7x:2x2x1
jax: 0.10.0
libtpu: 0.0.40
codegen_flags: <defaults>
</compile_context>

<pallas_src>
import functools

import jax
import jax.numpy as jnp
from jax.experimental import pallas as pl
from jax.experimental.pallas import tpu as pltpu

# Module hyperparameters (first entries of the lists in the reference file).
INPUT_SIZE = 38
OUTPUT_SIZE = 1
HIDDEN_SIZE = 16
NUM_LAYERS = 2


def _make_lstm_kernel(num_layers: int, hidden: int):
    """Builds the single-invocation kernel (time & layer loops unrolled)."""
    H = hidden
    L = num_layers
    H4 = 4 * H

    def kernel(*refs):
        x_ref = refs[0]                              # (B, T, D)
        w_ih0_ref, w_hh0_ref, b0_ref = refs[1:4]     # (D,4H), (H,4H), (1,4H)
        cat_refs = refs[4:4 + 2 * (L - 1):2]         # (2H, 4H) per layer >= 1
        bias_refs = refs[5:4 + 2 * (L - 1):2]        # (1, 4H)  per layer >= 1
        w_out_ref = refs[4 + 2 * (L - 1)]            # (H, O)
        b_out_ref = refs[5 + 2 * (L - 1)]            # (1, O)
        out_ref = refs[6 + 2 * (L - 1)]              # (B*T, O)

        B, T, D = x_ref.shape

        # ---- layer-0 input projection for ALL timesteps (one MXU matmul) ---
        x_flat = x_ref[...].reshape(B * T, D)
        xw0 = (jnp.dot(x_flat, w_ih0_ref[...],
                       preferred_element_type=jnp.float32)
               + b0_ref[...]).reshape(B, T, H4)
        # Pre-split into T vreg-resident (B, 4H) operands, off the serial path.
        xw0_t = [xw0[:, t, :] for t in range(T)]

        # ---- load weights once (resident as values) ------------------------
        w_hh0 = w_hh0_ref[...]
        w_cats = [r[...] for r in cat_refs]
        # Hoist per-step bias broadcasts out of the unrolled loop.
        b_bc = [jnp.broadcast_to(r[...], (B, H4)) for r in bias_refs]

        # ---- one-EUP-pass gate nonlinearity ---------------------------------
        # Gate order is [i, f, g, o] (PyTorch).  sigmoid(x)=0.5*tanh(0.5x)+0.5,
        # so with pre/post = 0.5 on i/f/o chunks and pre=1, post=0 on the g
        # chunk, a single packed tanh covers all four gates.
        lane = jax.lax.broadcasted_iota(jnp.int32, (B, H4), 1)
        is_g = (lane >= 2 * H) & (lane < 3 * H)
        pre_bc = jnp.where(is_g, 1.0, 0.5).astype(jnp.float32)   # also post-mul
        post_bc = jnp.where(is_g, 0.0, 0.5).astype(jnp.float32)

        def cell(gates, c_prev):
            z = jnp.tanh(gates * pre_bc) * pre_bc + post_bc   # 1 EUP pass
            i_g = z[:, 0 * H:1 * H]
            f_g = z[:, 1 * H:2 * H]
            g_g = z[:, 2 * H:3 * H]
            o_g = z[:, 3 * H:4 * H]
            c_new = f_g * c_prev + i_g * g_g
            h_new = o_g * jnp.tanh(c_new)                      # 1 EUP pass
            return h_new, c_new

        zero = jnp.zeros((B, H), jnp.float32)
        h = [zero] * L
        c = [zero] * L
        h_outs = []   # final-layer hidden states stay in vregs

        # ---- statically-unrolled time recurrence (T is small) --------------
        for t in range(T):
            # Layer 0: only the recurrent matmul is on the critical path.
            gates0 = xw0_t[t] + jnp.dot(h[0], w_hh0,
                                        preferred_element_type=jnp.float32)
            h[0], c[0] = cell(gates0, c[0])
            # Layers >= 1: single fused [h_below, h_self] @ [W_ih; W_hh].
            # (Lane concat of two in-vreg (B,H) values; if it ever round-trips
            #  VMEM, split back into two dots with both RHS staged.)
            for l in range(1, L):
                inp = jnp.concatenate([h[l - 1], h[l]], axis=-1)   # (B, 2H)
                gates = jnp.dot(inp, w_cats[l - 1],
                                preferred_element_type=jnp.float32) + b_bc[l - 1]
                h[l], c[l] = cell(gates, c[l])
            h_outs.append(h[L - 1])

        # ---- stack register-resident h_t once, one output matmul, one store -
        h_all = jnp.stack(h_outs, axis=1).reshape(B * T, H)    # (B*T, H)
        out_ref[...] = (jnp.dot(h_all, w_out_ref[...],
                                preferred_element_type=jnp.float32)
                        + b_out_ref[...])

    return kernel


@functools.partial(jax.jit, static_argnames=("num_layers", "hidden"))
def fund_lstm_forward(x, params, *, num_layers=NUM_LAYERS, hidden=HIDDEN_SIZE):
    """x: (B, T, D) float32.  params: dict of pre-transposed weights."""
    B, T, D = x.shape
    O = params["w_out"].shape[1]

    inputs = [x, params["w_ih_0"], params["w_hh_0"], params["b_0"]]
    for l in range(1, num_layers):
        # Stack W_ih / W_hh so the kernel does one matmul per layer-step.
        w_cat = jnp.concatenate(
            [params[f"w_ih_{l}"], params[f"w_hh_{l}"]], axis=0)  # (2H, 4H)
        inputs += [w_cat, params[f"b_{l}"]]
    inputs += [params["w_out"], params["b_out"]]

    vmem = pl.BlockSpec(memory_space=pltpu.MemorySpace.VMEM)
    out_flat = pl.pallas_call(
        _make_lstm_kernel(num_layers, hidden),
        out_shape=jax.ShapeDtypeStruct((B * T, O), jnp.float32),
        in_specs=[vmem] * len(inputs),
        out_specs=vmem,
    )(*inputs)

    out_full = out_flat.reshape(B, T, O)
    # out = self.output(out[:, -61:, :])  -- negative slice clamps like PyTorch.
    return out_full[:, -61:, :]


def init_params(key, input_size, hidden, num_layers, output_size):
    """Deterministic init mimicking PyTorch's U(-1/sqrt(H), 1/sqrt(H))."""
    bound = 1.0 / jnp.sqrt(jnp.float32(hidden))
    params = {}
    for l in range(num_layers):
        in_dim = input_size if l == 0 else hidden
        key, k1, k2, k3, k4 = jax.random.split(key, 5)
        w_ih = jax.random.uniform(k1, (4 * hidden, in_dim), jnp.float32,
                                  -bound, bound)
        w_hh = jax.random.uniform(k2, (4 * hidden, hidden), jnp.float32,
                                  -bound, bound)
        b_ih = jax.random.uniform(k3, (4 * hidden,), jnp.float32, -bound, bound)
        b_hh = jax.random.uniform(k4, (4 * hidden,), jnp.float32, -bound, bound)
        params[f"w_ih_{l}"] = w_ih.T                 # (in_dim, 4H)
        params[f"w_hh_{l}"] = w_hh.T                 # (H, 4H)
        params[f"b_{l}"] = (b_ih + b_hh)[None, :]    # (1, 4H)
    key, k1, k2 = jax.random.split(key, 3)
    bound_o = 1.0 / jnp.sqrt(jnp.float32(hidden))
    w_out = jax.random.uniform(k1, (output_size, hidden), jnp.float32,
                               -bound_o, bound_o)
    b_out = jax.random.uniform(k2, (output_size,), jnp.float32,
                               -bound_o, bound_o)
    params["w_out"] = w_out.T            # (H, O)
    params["b_out"] = b_out[None, :]     # (1, O)
    return params


def reference_forward(x, params, num_layers=NUM_LAYERS, hidden=HIDDEN_SIZE):
    """Pure-JAX reference of the same math, for a correctness check."""
    B, T, D = x.shape
    layer_in = x
    for l in range(num_layers):
        w_ih = params[f"w_ih_{l}"]
        w_hh = params[f"w_hh_{l}"]
        b = params[f"b_{l}"]

        def step(carry, xt):
            h, c = carry
            gates = xt @ w_ih + h @ w_hh + b
            i = jax.nn.sigmoid(gates[:, 0 * hidden:1 * hidden])
            f = jax.nn.sigmoid(gates[:, 1 * hidden:2 * hidden])
            g = jnp.tanh(gates[:, 2 * hidden:3 * hidden])
            o = jax.nn.sigmoid(gates[:, 3 * hidden:4 * hidden])
            c = f * c + i * g
            h = o * jnp.tanh(c)
            return (h, c), h

        init = (jnp.zeros((B, hidden), jnp.float32),
                jnp.zeros((B, hidden), jnp.float32))
        _, hs = jax.lax.scan(step, init, jnp.swapaxes(layer_in, 0, 1))
        layer_in = jnp.swapaxes(hs, 0, 1)
    out = layer_in @ params["w_out"] + params["b_out"]
    return out[:, -61:, :]


if __name__ == "__main__":
    key = jax.random.PRNGKey(0)
    key, kx, kp = jax.random.split(key, 3)

    # B=8 fills the f32 sublane dim (same per-step cost as B=2) — the review's
    # dominant throughput lever; still a small demo shape.
    B, T = 8, 8
    x = jax.random.normal(kx, (B, T, INPUT_SIZE), jnp.float32)
    params = init_params(kp, INPUT_SIZE, HIDDEN_SIZE, NUM_LAYERS, OUTPUT_SIZE)

    out = fund_lstm_forward(x, params)
    out = jax.block_until_ready(out)

    ref = reference_forward(x, params)
    assert out.shape == (B, min(T, 61), OUTPUT_SIZE), out.shape
    assert jnp.allclose(out, ref, atol=1e-4, rtol=1e-4), "mismatch vs reference"

    print("KERNEL_OK")
</pallas_src>

<mosaic_0001>
module attributes {stable_mosaic.version = 11 : i64} {
  func.func @kernel(%arg0: memref<8x8x38xf32, #tpu.memory_space<vmem>>, %arg1: memref<38x64xf32, #tpu.memory_space<vmem>>, %arg2: memref<16x64xf32, #tpu.memory_space<vmem>>, %arg3: memref<1x64xf32, #tpu.memory_space<vmem>>, %arg4: memref<32x64xf32, #tpu.memory_space<vmem>>, %arg5: memref<1x64xf32, #tpu.memory_space<vmem>>, %arg6: memref<16x1xf32, #tpu.memory_space<vmem>>, %arg7: memref<1x1xf32, #tpu.memory_space<vmem>>, %arg8: memref<64x1xf32, #tpu.memory_space<vmem>>) attributes {dimension_semantics = [], scalar_prefetch = 0 : i64, scratch_operands = 0 : i64, tpu.core_type = #tpu.core_type<tc>} {
    %c0 = arith.constant 0 : index
    %c0_0 = arith.constant 0 : index
    %c0_1 = arith.constant 0 : index
    %0 = vector.load %arg0[%c0, %c0_0, %c0_1] : memref<8x8x38xf32, #tpu.memory_space<vmem>>, vector<8x8x38xf32>
    %1 = vector.shape_cast %0 : vector<8x8x38xf32> to vector<64x38xf32>
    %c0_2 = arith.constant 0 : index
    %c0_3 = arith.constant 0 : index
    %2 = vector.load %arg1[%c0_2, %c0_3] : memref<38x64xf32, #tpu.memory_space<vmem>>, vector<38x64xf32>
    %cst = arith.constant dense<0.000000e+00> : vector<64x64xf32>
    %3 = tpu.matmul %1, %2, %cst {dimension_numbers = #tpu.dot_dimension_numbers<[1], [0], [0], [1], [0, 0, 1, 1], [], []>} : vector<64x38xf32>, vector<38x64xf32>, vector<64x64xf32> -> vector<64x64xf32>
    %c0_4 = arith.constant 0 : index
    %c0_5 = arith.constant 0 : index
    %4 = vector.load %arg3[%c0_4, %c0_5] : memref<1x64xf32, #tpu.memory_space<vmem>>, vector<1x64xf32>
    %5 = vector.broadcast %4 : vector<1x64xf32> to vector<64x64xf32>
    %6 = arith.addf %3, %5 : vector<64x64xf32>
    %7 = vector.shape_cast %6 : vector<64x64xf32> to vector<8x8x64xf32>
    %8 = vector.extract_strided_slice %7 {offsets = [0, 0, 0], sizes = [8, 1, 64], strides = [1, 1, 1]} : vector<8x8x64xf32> to vector<8x1x64xf32>
    %9 = vector.shape_cast %8 : vector<8x1x64xf32> to vector<8x64xf32>
    %10 = vector.extract_strided_slice %7 {offsets = [0, 1, 0], sizes = [8, 1, 64], strides = [1, 1, 1]} : vector<8x8x64xf32> to vector<8x1x64xf32>
    %11 = vector.shape_cast %10 : vector<8x1x64xf32> to vector<8x64xf32>
    %12 = vector.extract_strided_slice %7 {offsets = [0, 2, 0], sizes = [8, 1, 64], strides = [1, 1, 1]} : vector<8x8x64xf32> to vector<8x1x64xf32>
    %13 = vector.shape_cast %12 : vector<8x1x64xf32> to vector<8x64xf32>
    %14 = vector.extract_strided_slice %7 {offsets = [0, 3, 0], sizes = [8, 1, 64], strides = [1, 1, 1]} : vector<8x8x64xf32> to vector<8x1x64xf32>
    %15 = vector.shape_cast %14 : vector<8x1x64xf32> to vector<8x64xf32>
    %16 = vector.extract_strided_slice %7 {offsets = [0, 4, 0], sizes = [8, 1, 64], strides = [1, 1, 1]} : vector<8x8x64xf32> to vector<8x1x64xf32>
    %17 = vector.shape_cast %16 : vector<8x1x64xf32> to vector<8x64xf32>
    %18 = vector.extract_strided_slice %7 {offsets = [0, 5, 0], sizes = [8, 1, 64], strides = [1, 1, 1]} : vector<8x8x64xf32> to vector<8x1x64xf32>
    %19 = vector.shape_cast %18 : vector<8x1x64xf32> to vector<8x64xf32>
    %20 = vector.extract_strided_slice %7 {offsets = [0, 6, 0], sizes = [8, 1, 64], strides = [1, 1, 1]} : vector<8x8x64xf32> to vector<8x1x64xf32>
    %21 = vector.shape_cast %20 : vector<8x1x64xf32> to vector<8x64xf32>
    %22 = vector.extract_strided_slice %7 {offsets = [0, 7, 0], sizes = [8, 1, 64], strides = [1, 1, 1]} : vector<8x8x64xf32> to vector<8x1x64xf32>
    %23 = vector.shape_cast %22 : vector<8x1x64xf32> to vector<8x64xf32>
    %c0_6 = arith.constant 0 : index
    %c0_7 = arith.constant 0 : index
    %24 = vector.load %arg2[%c0_6, %c0_7] : memref<16x64xf32, #tpu.memory_space<vmem>>, vector<16x64xf32>
    %c0_8 = arith.constant 0 : index
    %c0_9 = arith.constant 0 : index
    %25 = vector.load %arg4[%c0_8, %c0_9] : memref<32x64xf32, #tpu.memory_space<vmem>>, vector<32x64xf32>
    %c0_10 = arith.constant 0 : index
    %c0_11 = arith.constant 0 : index
    %26 = vector.load %arg5[%c0_10, %c0_11] : memref<1x64xf32, #tpu.memory_space<vmem>>, vector<1x64xf32>
    %27 = vector.shape_cast %26 : vector<1x64xf32> to vector<1x64xf32>
    %28 = vector.broadcast %27 : vector<1x64xf32> to vector<8x64xf32>
    %29 = tpu.iota {dimensions = array<i32: 1>} : vector<8x64xi32>
    %c32_i32 = arith.constant 32 : i32
    %30 = vector.broadcast %c32_i32 : i32 to vector<8x64xi32>
    %31 = arith.cmpi sge, %29, %30 : vector<8x64xi32>
    %c48_i32 = arith.constant 48 : i32
    %32 = vector.broadcast %c48_i32 : i32 to vector<8x64xi32>
    %33 = arith.cmpi slt, %29, %32 : vector<8x64xi32>
    %34 = arith.andi %31, %33 : vector<8x64xi1>
    %cst_12 = arith.constant 1.000000e+00 : f32
    %cst_13 = arith.constant 5.000000e-01 : f32
    %35 = vector.broadcast %cst_12 : f32 to vector<8x64xf32>
    %36 = vector.broadcast %cst_13 : f32 to vector<8x64xf32>
    %37 = arith.select %34, %35, %36 : vector<8x64xi1>, vector<8x64xf32>
    %cst_14 = arith.constant 0.000000e+00 : f32
    %cst_15 = arith.constant 5.000000e-01 : f32
    %38 = vector.broadcast %cst_14 : f32 to vector<8x64xf32>
    %39 = vector.broadcast %cst_15 : f32 to vector<8x64xf32>
    %40 = arith.select %34, %38, %39 : vector<8x64xi1>, vector<8x64xf32>
    %cst_16 = arith.constant 0.000000e+00 : f32
    %41 = vector.broadcast %cst_16 : f32 to vector<8x16xf32>
    %cst_17 = arith.constant dense<0.000000e+00> : vector<8x64xf32>
    %42 = tpu.matmul %41, %24, %cst_17 {dimension_numbers = #tpu.dot_dimension_numbers<[1], [0], [0], [1], [0, 0, 1, 1], [], []>} : vector<8x16xf32>, vector<16x64xf32>, vector<8x64xf32> -> vector<8x64xf32>
    %43 = arith.addf %9, %42 : vector<8x64xf32>
    %44 = arith.mulf %43, %37 : vector<8x64xf32>
    %45 = math.tanh %44 : vector<8x64xf32>
    %46 = arith.mulf %45, %37 : vector<8x64xf32>
    %47 = arith.addf %46, %40 : vector<8x64xf32>
    %48 = vector.extract_strided_slice %47 {offsets = [0, 0], sizes = [8, 16], strides = [1, 1]} : vector<8x64xf32> to vector<8x16xf32>
    %49 = vector.extract_strided_slice %47 {offsets = [0, 16], sizes = [8, 16], strides = [1, 1]} : vector<8x64xf32> to vector<8x16xf32>
    %50 = vector.extract_strided_slice %47 {offsets = [0, 32], sizes = [8, 16], strides = [1, 1]} : vector<8x64xf32> to vector<8x16xf32>
    %51 = vector.extract_strided_slice %47 {offsets = [0, 48], sizes = [8, 16], strides = [1, 1]} : vector<8x64xf32> to vector<8x16xf32>
    %52 = arith.mulf %49, %41 : vector<8x16xf32>
    %53 = arith.mulf %48, %50 : vector<8x16xf32>
    %54 = arith.addf %52, %53 : vector<8x16xf32>
    %55 = math.tanh %54 : vector<8x16xf32>
    %56 = arith.mulf %51, %55 : vector<8x16xf32>
    %57 = tpu.concatenate %56, %41 in 1 : vector<8x16xf32>, vector<8x16xf32> -> vector<8x32xf32>
    %cst_18 = arith.constant dense<0.000000e+00> : vector<8x64xf32>
    %58 = tpu.matmul %57, %25, %cst_18 {dimension_numbers = #tpu.dot_dimension_numbers<[1], [0], [0], [1], [0, 0, 1, 1], [], []>} : vector<8x32xf32>, vector<32x64xf32>, vector<8x64xf32> -> vector<8x64xf32>
    %59 = arith.addf %58, %28 : vector<8x64xf32>
    %60 = arith.mulf %59, %37 : vector<8x64xf32>
    %61 = math.tanh %60 : vector<8x64xf32>
    %62 = arith.mulf %61, %37 : vector<8x64xf32>
    %63 = arith.addf %62, %40 : vector<8x64xf32>
    %64 = vector.extract_strided_slice %63 {offsets = [0, 0], sizes = [8, 16], strides = [1, 1]} : vector<8x64xf32> to vector<8x16xf32>
    %65 = vector.extract_strided_slice %63 {offsets = [0, 16], sizes = [8, 16], strides = [1, 1]} : vector<8x64xf32> to vector<8x16xf32>
    %66 = vector.extract_strided_slice %63 {offsets = [0, 32], sizes = [8, 16], strides = [1, 1]} : vector<8x64xf32> to vector<8x16xf32>
    %67 = vector.extract_strided_slice %63 {offsets = [0, 48], sizes = [8, 16], strides = [1, 1]} : vector<8x64xf32> to vector<8x16xf32>
    %68 = arith.mulf %65, %41 : vector<8x16xf32>
    %69 = arith.mulf %64, %66 : vector<8x16xf32>
    %70 = arith.addf %68, %69 : vector<8x16xf32>
    %71 = math.tanh %70 : vector<8x16xf32>
    %72 = arith.mulf %67, %71 : vector<8x16xf32>
    %cst_19 = arith.constant dense<0.000000e+00> : vector<8x64xf32>
    %73 = tpu.matmul %56, %24, %cst_19 {dimension_numbers = #tpu.dot_dimension_numbers<[1], [0], [0], [1], [0, 0, 1, 1], [], []>} : vector<8x16xf32>, vector<16x64xf32>, vector<8x64xf32> -> vector<8x64xf32>
    %74 = arith.addf %11, %73 : vector<8x64xf32>
    %75 = arith.mulf %74, %37 : vector<8x64xf32>
    %76 = math.tanh %75 : vector<8x64xf32>
    %77 = arith.mulf %76, %37 : vector<8x64xf32>
    %78 = arith.addf %77, %40 : vector<8x64xf32>
    %79 = vector.extract_strided_slice %78 {offsets = [0, 0], sizes = [8, 16], strides = [1, 1]} : vector<8x64xf32> to vector<8x16xf32>
    %80 = vector.extract_strided_slice %78 {offsets = [0, 16], sizes = [8, 16], strides = [1, 1]} : vector<8x64xf32> to vector<8x16xf32>
    %81 = vector.extract_strided_slice %78 {offsets = [0, 32], sizes = [8, 16], strides = [1, 1]} : vector<8x64xf32> to vector<8x16xf32>
    %82 = vector.extract_strided_slice %78 {offsets = [0, 48], sizes = [8, 16], strides = [1, 1]} : vector<8x64xf32> to vector<8x16xf32>
    %83 = arith.mulf %80, %54 : vector<8x16xf32>
    %84 = arith.mulf %79, %81 : vector<8x16xf32>
    %85 = arith.addf %83, %84 : vector<8x16xf32>
    %86 = math.tanh %85 : vector<8x16xf32>
    %87 = arith.mulf %82, %86 : vector<8x16xf32>
    %88 = tpu.concatenate %87, %72 in 1 : vector<8x16xf32>, vector<8x16xf32> -> vector<8x32xf32>
    %cst_20 = arith.constant dense<0.000000e+00> : vector<8x64xf32>
    %89 = tpu.matmul %88, %25, %cst_20 {dimension_numbers = #tpu.dot_dimension_numbers<[1], [0], [0], [1], [0, 0, 1, 1], [], []>} : vector<8x32xf32>, vector<32x64xf32>, vector<8x64xf32> -> vector<8x64xf32>
    %90 = arith.addf %89, %28 : vector<8x64xf32>
    %91 = arith.mulf %90, %37 : vector<8x64xf32>
    %92 = math.tanh %91 : vector<8x64xf32>
    %93 = arith.mulf %92, %37 : vector<8x64xf32>
    %94 = arith.addf %93, %40 : vector<8x64xf32>
    %95 = vector.extract_strided_slice %94 {offsets = [0, 0], sizes = [8, 16], strides = [1, 1]} : vector<8x64xf32> to vector<8x16xf32>
    %96 = vector.extract_strided_slice %94 {offsets = [0, 16], sizes = [8, 16], strides = [1, 1]} : vector<8x64xf32> to vector<8x16xf32>
    %97 = vector.extract_strided_slice %94 {offsets = [0, 32], sizes = [8, 16], strides = [1, 1]} : vector<8x64xf32> to vector<8x16xf32>
    %98 = vector.extract_strided_slice %94 {offsets = [0, 48], sizes = [8, 16], strides = [1, 1]} : vector<8x64xf32> to vector<8x16xf32>
    %99 = arith.mulf %96, %70 : vector<8x16xf32>
    %100 = arith.mulf %95, %97 : vector<8x16xf32>
    %101 = arith.addf %99, %100 : vector<8x16xf32>
    %102 = math.tanh %101 : vector<8x16xf32>
    %103 = arith.mulf %98, %102 : vector<8x16xf32>
    %cst_21 = arith.constant dense<0.000000e+00> : vector<8x64xf32>
    %104 = tpu.matmul %87, %24, %cst_21 {dimension_numbers = #tpu.dot_dimension_numbers<[1], [0], [0], [1], [0, 0, 1, 1], [], []>} : vector<8x16xf32>, vector<16x64xf32>, vector<8x64xf32> -> vector<8x64xf32>
    %105 = arith.addf %13, %104 : vector<8x64xf32>
    %106 = arith.mulf %105, %37 : vector<8x64xf32>
    %107 = math.tanh %106 : vector<8x64xf32>
    %108 = arith.mulf %107, %37 : vector<8x64xf32>
    %109 = arith.addf %108, %40 : vector<8x64xf32>
    %110 = vector.extract_strided_slice %109 {offsets = [0, 0], sizes = [8, 16], strides = [1, 1]} : vector<8x64xf32> to vector<8x16xf32>
    %111 = vector.extract_strided_slice %109 {offsets = [0, 16], sizes = [8, 16], strides = [1, 1]} : vector<8x64xf32> to vector<8x16xf32>
    %112 = vector.extract_strided_slice %109 {offsets = [0, 32], sizes = [8, 16], strides = [1, 1]} : vector<8x64xf32> to vector<8x16xf32>
    %113 = vector.extract_strided_slice %109 {offsets = [0, 48], sizes = [8, 16], strides = [1, 1]} : vector<8x64xf32> to vector<8x16xf32>
    %114 = arith.mulf %111, %85 : vector<8x16xf32>
    %115 = arith.mulf %110, %112 : vector<8x16xf32>
    %116 = arith.addf %114, %115 : vector<8x16xf32>
    %117 = math.tanh %116 : vector<8x16xf32>
    %118 = arith.mulf %113, %117 : vector<8x16xf32>
    %119 = tpu.concatenate %118, %103 in 1 : vector<8x16xf32>, vector<8x16xf32> -> vector<8x32xf32>
    %cst_22 = arith.constant dense<0.000000e+00> : vector<8x64xf32>
    %120 = tpu.matmul %119, %25, %cst_22 {dimension_numbers = #tpu.dot_dimension_numbers<[1], [0], [0], [1], [0, 0, 1, 1], [], []>} : vector<8x32xf32>, vector<32x64xf32>, vector<8x64xf32> -> vector<8x64xf32>
    %121 = arith.addf %120, %28 : vector<8x64xf32>
    %122 = arith.mulf %121, %37 : vector<8x64xf32>
    %123 = math.tanh %122 : vector<8x64xf32>
    %124 = arith.mulf %123, %37 : vector<8x64xf32>
    %125 = arith.addf %124, %40 : vector<8x64xf32>
    %126 = vector.extract_strided_slice %125 {offsets = [0, 0], sizes = [8, 16], strides = [1, 1]} : vector<8x64xf32> to vector<8x16xf32>
    %127 = vector.extract_strided_slice %125 {offsets = [0, 16], sizes = [8, 16], strides = [1, 1]} : vector<8x64xf32> to vector<8x16xf32>
    %128 = vector.extract_strided_slice %125 {offsets = [0, 32], sizes = [8, 16], strides = [1, 1]} : vector<8x64xf32> to vector<8x16xf32>
    %129 = vector.extract_strided_slice %125 {offsets = [0, 48], sizes = [8, 16], strides = [1, 1]} : vector<8x64xf32> to vector<8x16xf32>
    %130 = arith.mulf %127, %101 : vector<8x16xf32>
    %131 = arith.mulf %126, %128 : vector<8x16xf32>
    %132 = arith.addf %130, %131 : vector<8x16xf32>
    %133 = math.tanh %132 : vector<8x16xf32>
    %134 = arith.mulf %129, %133 : vector<8x16xf32>
    %cst_23 = arith.constant dense<0.000000e+00> : vector<8x64xf32>
    %135 = tpu.matmul %118, %24, %cst_23 {dimension_numbers = #tpu.dot_dimension_numbers<[1], [0], [0], [1], [0, 0, 1, 1], [], []>} : vector<8x16xf32>, vector<16x64xf32>, vector<8x64xf32> -> vector<8x64xf32>
    %136 = arith.addf %15, %135 : vector<8x64xf32>
    %137 = arith.mulf %136, %37 : vector<8x64xf32>
    %138 = math.tanh %137 : vector<8x64xf32>
    %139 = arith.mulf %138, %37 : vector<8x64xf32>
    %140 = arith.addf %139, %40 : vector<8x64xf32>
    %141 = vector.extract_strided_slice %140 {offsets = [0, 0], sizes = [8, 16], strides = [1, 1]} : vector<8x64xf32> to vector<8x16xf32>
    %142 = vector.extract_strided_slice %140 {offsets = [0, 16], sizes = [8, 16], strides = [1, 1]} : vector<8x64xf32> to vector<8x16xf32>
    %143 = vector.extract_strided_slice %140 {offsets = [0, 32], sizes = [8, 16], strides = [1, 1]} : vector<8x64xf32> to vector<8x16xf32>
    %144 = vector.extract_strided_slice %140 {offsets = [0, 48], sizes = [8, 16], strides = [1, 1]} : vector<8x64xf32> to vector<8x16xf32>
    %145 = arith.mulf %142, %116 : vector<8x16xf32>
    %146 = arith.mulf %141, %143 : vector<8x16xf32>
    %147 = arith.addf %145, %146 : vector<8x16xf32>
    %148 = math.tanh %147 : vector<8x16xf32>
    %149 = arith.mulf %144, %148 : vector<8x16xf32>
    %150 = tpu.concatenate %149, %134 in 1 : vector<8x16xf32>, vector<8x16xf32> -> vector<8x32xf32>
    %cst_24 = arith.constant dense<0.000000e+00> : vector<8x64xf32>
    %151 = tpu.matmul %150, %25, %cst_24 {dimension_numbers = #tpu.dot_dimension_numbers<[1], [0], [0], [1], [0, 0, 1, 1], [], []>} : vector<8x32xf32>, vector<32x64xf32>, vector<8x64xf32> -> vector<8x64xf32>
    %152 = arith.addf %151, %28 : vector<8x64xf32>
    %153 = arith.mulf %152, %37 : vector<8x64xf32>
    %154 = math.tanh %153 : vector<8x64xf32>
    %155 = arith.mulf %154, %37 : vector<8x64xf32>
    %156 = arith.addf %155, %40 : vector<8x64xf32>
    %157 = vector.extract_strided_slice %156 {offsets = [0, 0], sizes = [8, 16], strides = [1, 1]} : vector<8x64xf32> to vector<8x16xf32>
    %158 = vector.extract_strided_slice %156 {offsets = [0, 16], sizes = [8, 16], strides = [1, 1]} : vector<8x64xf32> to vector<8x16xf32>
    %159 = vector.extract_strided_slice %156 {offsets = [0, 32], sizes = [8, 16], strides = [1, 1]} : vector<8x64xf32> to vector<8x16xf32>
    %160 = vector.extract_strided_slice %156 {offsets = [0, 48], sizes = [8, 16], strides = [1, 1]} : vector<8x64xf32> to vector<8x16xf32>
    %161 = arith.mulf %158, %132 : vector<8x16xf32>
    %162 = arith.mulf %157, %159 : vector<8x16xf32>
    %163 = arith.addf %161, %162 : vector<8x16xf32>
    %164 = math.tanh %163 : vector<8x16xf32>
    %165 = arith.mulf %160, %164 : vector<8x16xf32>
    %cst_25 = arith.constant dense<0.000000e+00> : vector<8x64xf32>
    %166 = tpu.matmul %149, %24, %cst_25 {dimension_numbers = #tpu.dot_dimension_numbers<[1], [0], [0], [1], [0, 0, 1, 1], [], []>} : vector<8x16xf32>, vector<16x64xf32>, vector<8x64xf32> -> vector<8x64xf32>
    %167 = arith.addf %17, %166 : vector<8x64xf32>
    %168 = arith.mulf %167, %37 : vector<8x64xf32>
    %169 = math.tanh %168 : vector<8x64xf32>
    %170 = arith.mulf %169, %37 : vector<8x64xf32>
    %171 = arith.addf %170, %40 : vector<8x64xf32>
    %172 = vector.extract_strided_slice %171 {offsets = [0, 0], sizes = [8, 16], strides = [1, 1]} : vector<8x64xf32> to vector<8x16xf32>
    %173 = vector.extract_strided_slice %171 {offsets = [0, 16], sizes = [8, 16], strides = [1, 1]} : vector<8x64xf32> to vector<8x16xf32>
    %174 = vector.extract_strided_slice %171 {offsets = [0, 32], sizes = [8, 16], strides = [1, 1]} : vector<8x64xf32> to vector<8x16xf32>
    %175 = vector.extract_strided_slice %171 {offsets = [0, 48], sizes = [8, 16], strides = [1, 1]} : vector<8x64xf32> to vector<8x16xf32>
    %176 = arith.mulf %173, %147 : vector<8x16xf32>
    %177 = arith.mulf %172, %174 : vector<8x16xf32>
    %178 = arith.addf %176, %177 : vector<8x16xf32>
    %179 = math.tanh %178 : vector<8x16xf32>
    %180 = arith.mulf %175, %179 : vector<8x16xf32>
    %181 = tpu.concatenate %180, %165 in 1 : vector<8x16xf32>, vector<8x16xf32> -> vector<8x32xf32>
    %cst_26 = arith.constant dense<0.000000e+00> : vector<8x64xf32>
    %182 = tpu.matmul %181, %25, %cst_26 {dimension_numbers = #tpu.dot_dimension_numbers<[1], [0], [0], [1], [0, 0, 1, 1], [], []>} : vector<8x32xf32>, vector<32x64xf32>, vector<8x64xf32> -> vector<8x64xf32>
    %183 = arith.addf %182, %28 : vector<8x64xf32>
    %184 = arith.mulf %183, %37 : vector<8x64xf32>
    %185 = math.tanh %184 : vector<8x64xf32>
    %186 = arith.mulf %185, %37 : vector<8x64xf32>
    %187 = arith.addf %186, %40 : vector<8x64xf32>
    %188 = vector.extract_strided_slice %187 {offsets = [0, 0], sizes = [8, 16], strides = [1, 1]} : vector<8x64xf32> to vector<8x16xf32>
    %189 = vector.extract_strided_slice %187 {offsets = [0, 16], sizes = [8, 16], strides = [1, 1]} : vector<8x64xf32> to vector<8x16xf32>
    %190 = vector.extract_strided_slice %187 {offsets = [0, 32], sizes = [8, 16], strides = [1, 1]} : vector<8x64xf32> to vector<8x16xf32>
    %191 = vector.extract_strided_slice %187 {offsets = [0, 48], sizes = [8, 16], strides = [1, 1]} : vector<8x64xf32> to vector<8x16xf32>
    %192 = arith.mulf %189, %163 : vector<8x16xf32>
    %193 = arith.mulf %188, %190 : vector<8x16xf32>
    %194 = arith.addf %192, %193 : vector<8x16xf32>
    %195 = math.tanh %194 : vector<8x16xf32>
    %196 = arith.mulf %191, %195 : vector<8x16xf32>
    %cst_27 = arith.constant dense<0.000000e+00> : vector<8x64xf32>
    %197 = tpu.matmul %180, %24, %cst_27 {dimension_numbers = #tpu.dot_dimension_numbers<[1], [0], [0], [1], [0, 0, 1, 1], [], []>} : vector<8x16xf32>, vector<16x64xf32>, vector<8x64xf32> -> vector<8x64xf32>
    %198 = arith.addf %19, %197 : vector<8x64xf32>
    %199 = arith.mulf %198, %37 : vector<8x64xf32>
    %200 = math.tanh %199 : vector<8x64xf32>
    %201 = arith.mulf %200, %37 : vector<8x64xf32>
    %202 = arith.addf %201, %40 : vector<8x64xf32>
    %203 = vector.extract_strided_slice %202 {offsets = [0, 0], sizes = [8, 16], strides = [1, 1]} : vector<8x64xf32> to vector<8x16xf32>
    %204 = vector.extract_strided_slice %202 {offsets = [0, 16], sizes = [8, 16], strides = [1, 1]} : vector<8x64xf32> to vector<8x16xf32>
    %205 = vector.extract_strided_slice %202 {offsets = [0, 32], sizes = [8, 16], strides = [1, 1]} : vector<8x64xf32> to vector<8x16xf32>
    %206 = vector.extract_strided_slice %202 {offsets = [0, 48], sizes = [8, 16], strides = [1, 1]} : vector<8x64xf32> to vector<8x16xf32>
    %207 = arith.mulf %204, %178 : vector<8x16xf32>
    %208 = arith.mulf %203, %205 : vector<8x16xf32>
    %209 = arith.addf %207, %208 : vector<8x16xf32>
    %210 = math.tanh %209 : vector<8x16xf32>
    %211 = arith.mulf %206, %210 : vector<8x16xf32>
    %212 = tpu.concatenate %211, %196 in 1 : vector<8x16xf32>, vector<8x16xf32> -> vector<8x32xf32>
    %cst_28 = arith.constant dense<0.000000e+00> : vector<8x64xf32>
    %213 = tpu.matmul %212, %25, %cst_28 {dimension_numbers = #tpu.dot_dimension_numbers<[1], [0], [0], [1], [0, 0, 1, 1], [], []>} : vector<8x32xf32>, vector<32x64xf32>, vector<8x64xf32> -> vector<8x64xf32>
    %214 = arith.addf %213, %28 : vector<8x64xf32>
    %215 = arith.mulf %214, %37 : vector<8x64xf32>
    %216 = math.tanh %215 : vector<8x64xf32>
    %217 = arith.mulf %216, %37 : vector<8x64xf32>
    %218 = arith.addf %217, %40 : vector<8x64xf32>
    %219 = vector.extract_strided_slice %218 {offsets = [0, 0], sizes = [8, 16], strides = [1, 1]} : vector<8x64xf32> to vector<8x16xf32>
    %220 = vector.extract_strided_slice %218 {offsets = [0, 16], sizes = [8, 16], strides = [1, 1]} : vector<8x64xf32> to vector<8x16xf32>
    %221 = vector.extract_strided_slice %218 {offsets = [0, 32], sizes = [8, 16], strides = [1, 1]} : vector<8x64xf32> to vector<8x16xf32>
    %222 = vector.extract_strided_slice %218 {offsets = [0, 48], sizes = [8, 16], strides = [1, 1]} : vector<8x64xf32> to vector<8x16xf32>
    %223 = arith.mulf %220, %194 : vector<8x16xf32>
    %224 = arith.mulf %219, %221 : vector<8x16xf32>
    %225 = arith.addf %223, %224 : vector<8x16xf32>
    %226 = math.tanh %225 : vector<8x16xf32>
    %227 = arith.mulf %222, %226 : vector<8x16xf32>
    %cst_29 = arith.constant dense<0.000000e+00> : vector<8x64xf32>
    %228 = tpu.matmul %211, %24, %cst_29 {dimension_numbers = #tpu.dot_dimension_numbers<[1], [0], [0], [1], [0, 0, 1, 1], [], []>} : vector<8x16xf32>, vector<16x64xf32>, vector<8x64xf32> -> vector<8x64xf32>
    %229 = arith.addf %21, %228 : vector<8x64xf32>
    %230 = arith.mulf %229, %37 : vector<8x64xf32>
    %231 = math.tanh %230 : vector<8x64xf32>
    %232 = arith.mulf %231, %37 : vector<8x64xf32>
    %233 = arith.addf %232, %40 : vector<8x64xf32>
    %234 = vector.extract_strided_slice %233 {offsets = [0, 0], sizes = [8, 16], strides = [1, 1]} : vector<8x64xf32> to vector<8x16xf32>
    %235 = vector.extract_strided_slice %233 {offsets = [0, 16], sizes = [8, 16], strides = [1, 1]} : vector<8x64xf32> to vector<8x16xf32>
    %236 = vector.extract_strided_slice %233 {offsets = [0, 32], sizes = [8, 16], strides = [1, 1]} : vector<8x64xf32> to vector<8x16xf32>
    %237 = vector.extract_strided_slice %233 {offsets = [0, 48], sizes = [8, 16], strides = [1, 1]} : vector<8x64xf32> to vector<8x16xf32>
    %238 = arith.mulf %235, %209 : vector<8x16xf32>
    %239 = arith.mulf %234, %236 : vector<8x16xf32>
    %240 = arith.addf %238, %239 : vector<8x16xf32>
    %241 = math.tanh %240 : vector<8x16xf32>
    %242 = arith.mulf %237, %241 : vector<8x16xf32>
    %243 = tpu.concatenate %242, %227 in 1 : vector<8x16xf32>, vector<8x16xf32> -> vector<8x32xf32>
    %cst_30 = arith.constant dense<0.000000e+00> : vector<8x64xf32>
    %244 = tpu.matmul %243, %25, %cst_30 {dimension_numbers = #tpu.dot_dimension_numbers<[1], [0], [0], [1], [0, 0, 1, 1], [], []>} : vector<8x32xf32>, vector<32x64xf32>, vector<8x64xf32> -> vector<8x64xf32>
    %245 = arith.addf %244, %28 : vector<8x64xf32>
    %246 = arith.mulf %245, %37 : vector<8x64xf32>
    %247 = math.tanh %246 : vector<8x64xf32>
    %248 = arith.mulf %247, %37 : vector<8x64xf32>
    %249 = arith.addf %248, %40 : vector<8x64xf32>
    %250 = vector.extract_strided_slice %249 {offsets = [0, 0], sizes = [8, 16], strides = [1, 1]} : vector<8x64xf32> to vector<8x16xf32>
    %251 = vector.extract_strided_slice %249 {offsets = [0, 16], sizes = [8, 16], strides = [1, 1]} : vector<8x64xf32> to vector<8x16xf32>
    %252 = vector.extract_strided_slice %249 {offsets = [0, 32], sizes = [8, 16], strides = [1, 1]} : vector<8x64xf32> to vector<8x16xf32>
    %253 = vector.extract_strided_slice %249 {offsets = [0, 48], sizes = [8, 16], strides = [1, 1]} : vector<8x64xf32> to vector<8x16xf32>
    %254 = arith.mulf %251, %225 : vector<8x16xf32>
    %255 = arith.mulf %250, %252 : vector<8x16xf32>
    %256 = arith.addf %254, %255 : vector<8x16xf32>
    %257 = math.tanh %256 : vector<8x16xf32>
    %258 = arith.mulf %253, %257 : vector<8x16xf32>
    %cst_31 = arith.constant dense<0.000000e+00> : vector<8x64xf32>
    %259 = tpu.matmul %242, %24, %cst_31 {dimension_numbers = #tpu.dot_dimension_numbers<[1], [0], [0], [1], [0, 0, 1, 1], [], []>} : vector<8x16xf32>, vector<16x64xf32>, vector<8x64xf32> -> vector<8x64xf32>
    %260 = arith.addf %23, %259 : vector<8x64xf32>
    %261 = arith.mulf %260, %37 : vector<8x64xf32>
    %262 = math.tanh %261 : vector<8x64xf32>
    %263 = arith.mulf %262, %37 : vector<8x64xf32>
    %264 = arith.addf %263, %40 : vector<8x64xf32>
    %265 = vector.extract_strided_slice %264 {offsets = [0, 0], sizes = [8, 16], strides = [1, 1]} : vector<8x64xf32> to vector<8x16xf32>
    %266 = vector.extract_strided_slice %264 {offsets = [0, 16], sizes = [8, 16], strides = [1, 1]} : vector<8x64xf32> to vector<8x16xf32>
    %267 = vector.extract_strided_slice %264 {offsets = [0, 32], sizes = [8, 16], strides = [1, 1]} : vector<8x64xf32> to vector<8x16xf32>
    %268 = vector.extract_strided_slice %264 {offsets = [0, 48], sizes = [8, 16], strides = [1, 1]} : vector<8x64xf32> to vector<8x16xf32>
    %269 = arith.mulf %266, %240 : vector<8x16xf32>
    %270 = arith.mulf %265, %267 : vector<8x16xf32>
    %271 = arith.addf %269, %270 : vector<8x16xf32>
    %272 = math.tanh %271 : vector<8x16xf32>
    %273 = arith.mulf %268, %272 : vector<8x16xf32>
    %274 = tpu.concatenate %273, %258 in 1 : vector<8x16xf32>, vector<8x16xf32> -> vector<8x32xf32>
    %cst_32 = arith.constant dense<0.000000e+00> : vector<8x64xf32>
    %275 = tpu.matmul %274, %25, %cst_32 {dimension_numbers = #tpu.dot_dimension_numbers<[1], [0], [0], [1], [0, 0, 1, 1], [], []>} : vector<8x32xf32>, vector<32x64xf32>, vector<8x64xf32> -> vector<8x64xf32>
    %276 = arith.addf %275, %28 : vector<8x64xf32>
    %277 = arith.mulf %276, %37 : vector<8x64xf32>
    %278 = math.tanh %277 : vector<8x64xf32>
    %279 = arith.mulf %278, %37 : vector<8x64xf32>
    %280 = arith.addf %279, %40 : vector<8x64xf32>
    %281 = vector.extract_strided_slice %280 {offsets = [0, 0], sizes = [8, 16], strides = [1, 1]} : vector<8x64xf32> to vector<8x16xf32>
    %282 = vector.extract_strided_slice %280 {offsets = [0, 16], sizes = [8, 16], strides = [1, 1]} : vector<8x64xf32> to vector<8x16xf32>
    %283 = vector.extract_strided_slice %280 {offsets = [0, 32], sizes = [8, 16], strides = [1, 1]} : vector<8x64xf32> to vector<8x16xf32>
    %284 = vector.extract_strided_slice %280 {offsets = [0, 48], sizes = [8, 16], strides = [1, 1]} : vector<8x64xf32> to vector<8x16xf32>
    %285 = arith.mulf %282, %256 : vector<8x16xf32>
    %286 = arith.mulf %281, %283 : vector<8x16xf32>
    %287 = arith.addf %285, %286 : vector<8x16xf32>
    %288 = math.tanh %287 : vector<8x16xf32>
    %289 = arith.mulf %284, %288 : vector<8x16xf32>
    %290 = vector.shape_cast %72 : vector<8x16xf32> to vector<8x1x16xf32>
    %291 = vector.shape_cast %103 : vector<8x16xf32> to vector<8x1x16xf32>
    %292 = vector.shape_cast %134 : vector<8x16xf32> to vector<8x1x16xf32>
    %293 = vector.shape_cast %165 : vector<8x16xf32> to vector<8x1x16xf32>
    %294 = vector.shape_cast %196 : vector<8x16xf32> to vector<8x1x16xf32>
    %295 = vector.shape_cast %227 : vector<8x16xf32> to vector<8x1x16xf32>
    %296 = vector.shape_cast %258 : vector<8x16xf32> to vector<8x1x16xf32>
    %297 = vector.shape_cast %289 : vector<8x16xf32> to vector<8x1x16xf32>
    %298 = tpu.concatenate %290, %291, %292, %293, %294, %295, %296, %297 in 1 : vector<8x1x16xf32>, vector<8x1x16xf32>, vector<8x1x16xf32>, vector<8x1x16xf32>, vector<8x1x16xf32>, vector<8x1x16xf32>, vector<8x1x16xf32>, vector<8x1x16xf32> -> vector<8x8x16xf32>
    %299 = vector.shape_cast %298 : vector<8x8x16xf32> to vector<64x16xf32>
    %c0_33 = arith.constant 0 : index
    %c0_34 = arith.constant 0 : index
    %300 = vector.load %arg6[%c0_33, %c0_34] : memref<16x1xf32, #tpu.memory_space<vmem>>, vector<16x1xf32>
    %cst_35 = arith.constant dense<0.000000e+00> : vector<64x1xf32>
    %301 = tpu.matmul %299, %300, %cst_35 {dimension_numbers = #tpu.dot_dimension_numbers<[1], [0], [0], [1], [0, 0, 1, 1], [], []>} : vector<64x16xf32>, vector<16x1xf32>, vector<64x1xf32> -> vector<64x1xf32>
    %c0_36 = arith.constant 0 : index
    %c0_37 = arith.constant 0 : index
    %302 = vector.load %arg7[%c0_36, %c0_37] : memref<1x1xf32, #tpu.memory_space<vmem>>, vector<1x1xf32>
    %303 = vector.broadcast %302 : vector<1x1xf32> to vector<64x1xf32>
    %304 = arith.addf %301, %303 : vector<64x1xf32>
    %c0_38 = arith.constant 0 : index
    %c0_39 = arith.constant 0 : index
    %305 = vector.load %arg8[%c0_38, %c0_39] : memref<64x1xf32, #tpu.memory_space<vmem>>, vector<64x1xf32>
    tpu.vector_store %arg8[%c0_38, %c0_39], %304 {strides = array<i32>} : memref<64x1xf32, #tpu.memory_space<vmem>>, vector<64x1xf32>,
    return
  }
}

</mosaic_0001>

<llo_original>
// kernel: fund_lstm_forward.1
$region0: #{fund_lstm_forward.1}
  #allocation0 [shape = 'u32[]', space=smem, size = 0x4, offset = 0x4, fixed_abs, tag = 'smem constant byte address 0x4 - core index']
  #allocation1 [shape = 'u32[144,128]{1,0:T(1,128)}', space=vmem, size = 0x12000, scoped, tag = 'internal scratch']
  #allocation2 [shape = 'f32[1,1]{1,0:T(1,128)S(1)}', space=vmem, size = 0x200, scoped, tag = 'scoped memory for fund_lstm_forward.1']
  %s0 = inlined_call_operand.vmem [shape: f32[8,8,38], index: 0, kind: input, shape index: {}]
  %s1 = inlined_call_operand.hbm [shape: f32[38,64], index: 1, kind: input, shape index: {}]
  %s2 = inlined_call_operand.hbm [shape: f32[16,64], index: 2, kind: input, shape index: {}]
  %s3 = inlined_call_operand.hbm [shape: f32[1,64], index: 3, kind: input, shape index: {}]
  %s4 = inlined_call_operand.vmem [shape: f32[32,64], index: 4, kind: input, shape index: {}]
  %s5 = inlined_call_operand.hbm [shape: f32[1,64], index: 5, kind: input, shape index: {}]
  %s6 = inlined_call_operand.vmem [shape: f32[16,1], index: 6, kind: input, shape index: {}]
  %s7 = inlined_call_operand.<no memory space> [shape: f32[1,1], index: 7, kind: input, shape index: {}]
  %s8 = inlined_call_operand.vmem [shape: f32[64,1], index: 8, kind: output, shape index: {}]
  %s9 = sld [smem:[#allocation0]]
  $region58: #{fund_lstm_forward.1} parent=0
    _
  %s11 = ssub.s32 1, %s9
  %s12 = scalar_select 0, %s11, %s9
  %v13 = vstv %s7
  %14 = vst [vmem:[#allocation2] sm:$0x1] %v13
  $region1: #{fund_lstm_forward.1} parent=0
    #allocation3 [shape = 'u8[20480]{0}', space=vmem, size = 0x5000, scoped, tag = 'input window, operand 1, single buffered']
    #allocation4 [shape = 's32[1]{0}', space=sflag, size = 0x4, scoped, tag = 'scoped memory for fund_lstm_forward.1']
    #allocation5 [shape = 'u8[8192]{0}', space=vmem, size = 0x2000, scoped, tag = 'input window, operand 2, single buffered']
    #allocation6 [shape = 's32[1]{0}', space=sflag, size = 0x4, scoped, tag = 'scoped memory for fund_lstm_forward.1']
    #allocation7 [shape = 'u8[512]{0}', space=vmem, size = 0x400, scoped, tag = 'input window, operand 3, single buffered']
    #allocation8 [shape = 'u8[512]{0}', space=vmem, size = 0x400, scoped, tag = 'input window, operand 5, single buffered']
    #allocation9 [shape = 's32[1]{0}', space=sflag, size = 0x4, scoped, tag = 'scoped memory for fund_lstm_forward.1']
    %15 = vsyncpa [#allocation4], 0
    %16 = vsyncpa [#allocation6], 0
    %17 = vsyncpa [#allocation9], 0
    // Predicated region
    $region2: #{fund_lstm_forward.1} parent=1 // pred_check
      _
    $region3: #{fund_lstm_forward.1} parent=1 // pred_check_branch
      %19 = sbr.rel (0) target = $region5
    $region4: #{fund_lstm_forward.1} parent=1 // pred_region
      _
    $region5: #{fund_lstm_forward.1} parent=1 // pred_fallthru
      _
    // Predicated region
    $region6: #{fund_lstm_forward.1} parent=1 // pred_check
      _
    $region7: #{fund_lstm_forward.1} parent=1 // pred_check_branch
      %21 = sbr.rel (0) target = $region9
    $region8: #{fund_lstm_forward.1} parent=1 // pred_region
      %s23 = ssub.s32 640, 640
      %24 = vsyncadd [#allocation4], %s23
      %s25 = sshll.u32 [#allocation3], 4
      %s26 = int_to_ptr.vmem [resolvable:$true] %s25
      %31 = dma.hbm_to_vmem [thread:$0]  %s1, 640, %s26, [#allocation4], 128, 128, 8
    $region9: #{fund_lstm_forward.1} parent=1 // pred_fallthru
      _
    // Predicated region
    $region10: #{fund_lstm_forward.1} parent=1 // pred_check
      _
    $region11: #{fund_lstm_forward.1} parent=1 // pred_check_branch
      %33 = sbr.rel (0) target = $region13
    $region12: #{fund_lstm_forward.1} parent=1 // pred_region
      %s35 = ssub.s32 256, 256
      %36 = vsyncadd [#allocation6], %s35
      %s37 = sshll.u32 [#allocation5], 4
      %s38 = int_to_ptr.vmem [resolvable:$true] %s37
      %43 = dma.hbm_to_vmem [thread:$0]  %s2, 256, %s38, [#allocation6], 128, 128, 8
    $region13: #{fund_lstm_forward.1} parent=1 // pred_fallthru
      _
    // Predicated region
    $region14: #{fund_lstm_forward.1} parent=1 // pred_check
      _
    $region15: #{fund_lstm_forward.1} parent=1 // pred_check_branch
      %45 = sbr.rel (0) target = $region17
    $region16: #{fund_lstm_forward.1} parent=1 // pred_region
      %s47 = ssub.s32 16, 16
      %48 = vsyncadd [#allocation6], %s47
      %s50 = sshll.u32 [#allocation7], 4
      %s51 = int_to_ptr.vmem [resolvable:$true] %s50
      %53 = dma.hbm_to_vmem [thread:$0]  %s3, 16, %s51, [#allocation6]
    $region17: #{fund_lstm_forward.1} parent=1 // pred_fallthru
      _
    // Predicated region
    $region18: #{fund_lstm_forward.1} parent=1 // pred_check
      _
    $region19: #{fund_lstm_forward.1} parent=1 // pred_check_branch
      %55 = sbr.rel (0) target = $region21
    $region20: #{fund_lstm_forward.1} parent=1 // pred_region
      _
    $region21: #{fund_lstm_forward.1} parent=1 // pred_fallthru
      _
    // Predicated region
    $region22: #{fund_lstm_forward.1} parent=1 // pred_check
      _
    $region23: #{fund_lstm_forward.1} parent=1 // pred_check_branch
      %57 = sbr.rel (0) target = $region25
    $region24: #{fund_lstm_forward.1} parent=1 // pred_region
      %s59 = ssub.s32 16, 16
      %60 = vsyncadd [#allocation9], %s59
      %s62 = sshll.u32 [#allocation8], 4
      %s63 = int_to_ptr.vmem [resolvable:$true] %s62
      %65 = dma.hbm_to_vmem [thread:$0]  %s5, 16, %s63, [#allocation9]
    $region25: #{fund_lstm_forward.1} parent=1 // pred_fallthru
      _
    // Predicated region
    $region26: #{fund_lstm_forward.1} parent=1 // pred_check
      _
    $region27: #{fund_lstm_forward.1} parent=1 // pred_check_branch
      %67 = sbr.rel (0) target = $region29
    $region28: #{fund_lstm_forward.1} parent=1 // pred_region
      _
    $region29: #{fund_lstm_forward.1} parent=1 // pred_fallthru
      _
    // Predicated region
    $region30: #{fund_lstm_forward.1} parent=1 // pred_check
      _
    $region31: #{fund_lstm_forward.1} parent=1 // pred_check_branch
      %69 = sbr.rel (0) target = $region33
    $region32: #{fund_lstm_forward.1} parent=1 // pred_region
      _
    $region33: #{fund_lstm_forward.1} parent=1 // pred_fallthru
      _
    // Predicated region
    $region34: #{fund_lstm_forward.1} parent=1 // pred_check
      _
    $region35: #{fund_lstm_forward.1} parent=1 // pred_check_branch
      %71 = sbr.rel (0) target = $region37
    $region36: #{fund_lstm_forward.1} parent=1 // pred_region
      %72 = dma.done [#allocation4], 640
    $region37: #{fund_lstm_forward.1} parent=1 // pred_fallthru
      _
    // Predicated region
    $region38: #{fund_lstm_forward.1} parent=1 // pred_check
      _
    $region39: #{fund_lstm_forward.1} parent=1 // pred_check_branch
      %74 = sbr.rel (0) target = $region41
    $region40: #{fund_lstm_forward.1} parent=1 // pred_region
      %75 = dma.done [#allocation6], 256
    $region41: #{fund_lstm_forward.1} parent=1 // pred_fallthru
      _
    // Predicated region
    $region42: #{fund_lstm_forward.1} parent=1 // pred_check
      _
    $region43: #{fund_lstm_forward.1} parent=1 // pred_check_branch
      %77 = sbr.rel (0) target = $region45
    $region44: #{fund_lstm_forward.1} parent=1 // pred_region
      %78 = dma.done [#allocation6], 16
    $region45: #{fund_lstm_forward.1} parent=1 // pred_fallthru
      _
    // Predicated region
    $region46: #{fund_lstm_forward.1} parent=1 // pred_check
      _
    $region47: #{fund_lstm_forward.1} parent=1 // pred_check_branch
      %80 = sbr.rel (0) target = $region49
    $region48: #{fund_lstm_forward.1} parent=1 // pred_region
      %81 = dma.done [#allocation9], 16
    $region49: #{fund_lstm_forward.1} parent=1 // pred_fallthru
      _
    %v82 = vld [vmem:[%s0] sm:$0xff]
    %v83 = vld [vmem:[%s0 + $0x8] sm:$0xff]
    %v84 = vld [vmem:[%s0 + $0x10] sm:$0xff]
    %v85 = vld [vmem:[%s0 + $0x18] sm:$0xff]
    %v86 = vld [vmem:[%s0 + $0x20] sm:$0xff]
    %v87 = vld [vmem:[%s0 + $0x28] sm:$0xff]
    %v88 = vld [vmem:[%s0 + $0x30] sm:$0xff]
    %v89 = vld [vmem:[%s0 + $0x38] sm:$0xff]
    %v90 = vld [vmem:[#allocation3] sm:$0xff]
    %v91 = vld [vmem:[#allocation3 + $0x8] sm:$0xff]
    %v92 = vld [vmem:[#allocation3 + $0x10] sm:$0xff]
    %v93 = vld [vmem:[#allocation3 + $0x18] sm:$0xff]
    %v94 = vld [vmem:[#allocation3 + $0x20] sm:$0x3f]
    %v95 = vld [vmem:[#allocation7] sm:$0x1]
    %v97 = vlaneseq
    %v98 = vshrl.u32 %v97, 7
    %v99 = vsub.s32 0, %v98
    %v100 = vrot.slane %v95, %v99
    %vm102 = vcmask 310272
    %v104 = vsel %vm102, %v82, 0
    %v107 = vsel %vm102, %v83, 0
    %v110 = vsel %vm102, %v84, 0
    %v113 = vsel %vm102, %v85, 0
    %v116 = vsel %vm102, %v86, 0
    %v119 = vsel %vm102, %v87, 0
    %v122 = vsel %vm102, %v88, 0
    %v125 = vsel %vm102, %v89, 0
    %vm127 = vcmask 1045504
    %v129 = vsel %vm127, %v94, 0
    %131 = vmatprep.subr.mxu0 0.0
    %132 = vmatpush1.msra.mxu0 %v90
    %133 = vmatprep.subr.mxu0 0.0
    %134 = vmatpush1.msra.mxu0 %v91
    %135 = vmatprep.subr.mxu0 0.0
    %136 = vmatpush1.msra.mxu0 %v92
    %137 = vmatprep.subr.mxu0 0.0
    %138 = vmatpush1.msra.mxu0 %v93
    %139 = vmatprep.subr.mxu0 0.0
    %140 = vmatpush1.msra.mxu0 %v129
    %141 = vmatprep.subr.mxu0 0.0
    %142 = vmatpush1.msra.mxu0 0.0
    %143 = vmatprep.subr.mxu0 0.0
    %144 = vmatpush1.msra.mxu0 0.0
    %145 = vmatprep.subr.mxu0 0.0
    %146 = vmatpush1.msra.mxu0 0.0
    %147 = vmatprep.subr.mxu0 0.0
    %148 = vmatpush1.msra.mxu0 0.0
    %149 = vmatprep.subr.mxu0 0.0
    %150 = vmatpush1.msra.mxu0 0.0
    %151 = vmatprep.subr.mxu0 0.0
    %152 = vmatpush1.msra.mxu0 0.0
    %153 = vmatprep.subr.mxu0 0.0
    %154 = vmatpush1.msra.mxu0 0.0
    %155 = vmatprep.subr.mxu0 0.0
    %156 = vmatpush1.msra.mxu0 0.0
    %157 = vmatprep.subr.mxu0 0.0
    %158 = vmatpush1.msra.mxu0 0.0
    %159 = vmatprep.subr.mxu0 0.0
    %160 = vmatpush1.msra.mxu0 0.0
    %161 = vmatprep.subr.mxu0 0.0
    %162 = vmatpush1.msra.mxu0 0.0
    %163 = vmatprep.subr.mxu0 0.0
    %164 = vmatpush1.msra.mxu0 0.0
    %165 = vmatprep.subr.mxu0 0.0
    %166 = vmatpush1.msra.mxu0 0.0
    %167 = vmatprep.subr.mxu0 0.0
    %168 = vmatpush1.msra.mxu0 0.0
    %169 = vmatprep.subr.mxu0 0.0
    %170 = vmatpush1.msra.mxu0 0.0
    %171 = vmatprep.subr.mxu0 0.0
    %172 = vmatpush1.msra.mxu0 0.0
    %173 = vmatprep.subr.mxu0 0.0
    %174 = vmatpush1.msra.mxu0 0.0
    %175 = vmatprep.subr.mxu0 0.0
    %176 = vmatpush1.msra.mxu0 0.0
    %177 = vmatprep.subr.mxu0 0.0
    %178 = vmatpush1.msra.mxu0 0.0
    %179 = vmatprep.subr.mxu0 0.0
    %180 = vmatpush1.msra.mxu0 0.0
    %181 = vmatprep.subr.mxu0 0.0
    %182 = vmatpush1.msra.mxu0 0.0
    %183 = vmatprep.subr.mxu0 0.0
    %184 = vmatpush1.msra.mxu0 0.0
    %185 = vmatprep.subr.mxu0 0.0
    %186 = vmatpush1.msra.mxu0 0.0
    %187 = vmatprep.subr.mxu0 0.0
    %188 = vmatpush1.msra.mxu0 0.0
    %189 = vmatprep.subr.mxu0 0.0
    %190 = vmatpush1.msra.mxu0 0.0
    %191 = vmatprep.subr.mxu0 0.0
    %192 = vmatpush1.msra.mxu0 0.0
    %193 = vmatprep.subr.mxu0 0.0
    %194 = vmatpush1.msra.mxu0 0.0
    %195 = vmatprep.mubr.f32.mxu0 0.0
    %196 = vmatmul.mubr.f32.gmra.mrb[0].mxu0 %v104
    %v197 = vpop.f32.mrb[0].mxu0
    %v198 = vadd.f32 %v100, %v197
    %v199 = vpop.f32.mrb[0].mxu0
    %200 = vmatprep.mubr.f32.mxu0 0.0
    %201 = vmatmul.mubr.f32.gmra.mrb[0].mxu0 %v107
    %v202 = vpop.f32.mrb[0].mxu0
    %v203 = vadd.f32 %v100, %v202
    %v204 = vpop.f32.mrb[0].mxu0
    %205 = vmatprep.mubr.f32.mxu0 0.0
    %206 = vmatmul.mubr.f32.gmra.mrb[0].mxu0 %v110
    %v207 = vpop.f32.mrb[0].mxu0
    %v208 = vadd.f32 %v100, %v207
    %v209 = vpop.f32.mrb[0].mxu0
    %210 = vmatprep.mubr.f32.mxu0 0.0
    %211 = vmatmul.mubr.f32.gmra.mrb[0].mxu0 %v113
    %v212 = vpop.f32.mrb[0].mxu0
    %v213 = vadd.f32 %v100, %v212
    %v214 = vpop.f32.mrb[0].mxu0
    %215 = vmatprep.mubr.f32.mxu0 0.0
    %216 = vmatmul.mubr.f32.gmra.mrb[0].mxu0 %v116
    %v217 = vpop.f32.mrb[0].mxu0
    %v218 = vadd.f32 %v100, %v217
    %v219 = vpop.f32.mrb[0].mxu0
    %220 = vmatprep.mubr.f32.mxu0 0.0
    %221 = vmatmul.mubr.f32.gmra.mrb[0].mxu0 %v119
    %v222 = vpop.f32.mrb[0].mxu0
    %v223 = vadd.f32 %v100, %v222
    %v224 = vpop.f32.mrb[0].mxu0
    %225 = vmatprep.mubr.f32.mxu0 0.0
    %226 = vmatmul.mubr.f32.gmra.mrb[0].mxu0 %v122
    %v227 = vpop.f32.mrb[0].mxu0
    %v228 = vadd.f32 %v100, %v227
    %v229 = vpop.f32.mrb[0].mxu0
    %230 = vmatprep.mubr.f32.mxu0 0.0
    %231 = vmatmul.mubr.f32.gmra.mrb[0].mxu0 %v125
    %v232 = vpop.f32.mrb[0].mxu0
    %v233 = vadd.f32 %v100, %v232
    %v234 = vpop.f32.mrb[0].mxu0
    %235 = vdwg.mxu0
    %v236 = vld [vmem:[#allocation5] sm:$0xff]
    %v237 = vld [vmem:[#allocation5 + $0x8] sm:$0xff]
    %v238 = vld [vmem:[%s4] sm:$0xff]
    %v239 = vld [vmem:[%s4 + $0x8] sm:$0xff]
    %v240 = vld [vmem:[%s4 + $0x10] sm:$0xff]
    %v241 = vld [vmem:[%s4 + $0x18] sm:$0xff]
    %v242 = vld [vmem:[#allocation8] sm:$0x1]
    %v244 = vlaneseq
    %v245 = vshrl.u32 %v244, 7
    %v246 = vsub.s32 0, %v245
    %v247 = vrot.slane %v242, %v246
    %v249 = vlaneseq
    %v250 = vand.u32 %v249, 127
    %vm251 = vcmp.ge.s32.totalorder %v250, 32
    %vm252 = vcmp.lt.s32.totalorder %v250, 48
    %vm253 = vmand %vm251, %vm252
    %v254 = vsel %vm253, 1.0, 0.5
    %v255 = vsel %vm253, 0.0, 0.5
    %vm256 = vcmask 130048
    %v258 = vsel %vm256, 0.0, 0
    %260 = vmatprep.subr.mxu0 0.0
    %261 = vmatpush1.msra.mxu0 %v236
    %262 = vmatprep.subr.mxu0 0.0
    %263 = vmatpush1.msra.mxu0 %v237
    %264 = vmatprep.subr.mxu0 0.0
    %265 = vmatpush1.msra.mxu0 0.0
    %266 = vmatprep.subr.mxu0 0.0
    %267 = vmatpush1.msra.mxu0 0.0
    %268 = vmatprep.subr.mxu0 0.0
    %269 = vmatpush1.msra.mxu0 0.0
    %270 = vmatprep.subr.mxu0 0.0
    %271 = vmatpush1.msra.mxu0 0.0
    %272 = vmatprep.subr.mxu0 0.0
    %273 = vmatpush1.msra.mxu0 0.0
    %274 = vmatprep.subr.mxu0 0.0
    %275 = vmatpush1.msra.mxu0 0.0
    %276 = vmatprep.subr.mxu0 0.0
    %277 = vmatpush1.msra.mxu0 0.0
    %278 = vmatprep.subr.mxu0 0.0
    %279 = vmatpush1.msra.mxu0 0.0
    %280 = vmatprep.subr.mxu0 0.0
    %281 = vmatpush1.msra.mxu0 0.0
    %282 = vmatprep.subr.mxu0 0.0
    %283 = vmatpush1.msra.mxu0 0.0
    %284 = vmatprep.subr.mxu0 0.0
    %285 = vmatpush1.msra.mxu0 0.0
    %286 = vmatprep.subr.mxu0 0.0
    %287 = vmatpush1.msra.mxu0 0.0
    %288 = vmatprep.subr.mxu0 0.0
    %289 = vmatpush1.msra.mxu0 0.0
    %290 = vmatprep.subr.mxu0 0.0
    %291 = vmatpush1.msra.mxu0 0.0
    %292 = vmatprep.subr.mxu0 0.0
    %293 = vmatpush1.msra.mxu0 0.0
    %294 = vmatprep.subr.mxu0 0.0
    %295 = vmatpush1.msra.mxu0 0.0
    %296 = vmatprep.subr.mxu0 0.0
    %297 = vmatpush1.msra.mxu0 0.0
    %298 = vmatprep.subr.mxu0 0.0
    %299 = vmatpush1.msra.mxu0 0.0
    %300 = vmatprep.subr.mxu0 0.0
    %301 = vmatpush1.msra.mxu0 0.0
    %302 = vmatprep.subr.mxu0 0.0
    %303 = vmatpush1.msra.mxu0 0.0
    %304 = vmatprep.subr.mxu0 0.0
    %305 = vmatpush1.msra.mxu0 0.0
    %306 = vmatprep.subr.mxu0 0.0
    %307 = vmatpush1.msra.mxu0 0.0
    %308 = vmatprep.subr.mxu0 0.0
    %309 = vmatpush1.msra.mxu0 0.0
    %310 = vmatprep.subr.mxu0 0.0
    %311 = vmatpush1.msra.mxu0 0.0
    %312 = vmatprep.subr.mxu0 0.0
    %313 = vmatpush1.msra.mxu0 0.0
    %314 = vmatprep.subr.mxu0 0.0
    %315 = vmatpush1.msra.mxu0 0.0
    %316 = vmatprep.subr.mxu0 0.0
    %317 = vmatpush1.msra.mxu0 0.0
    %318 = vmatprep.subr.mxu0 0.0
    %319 = vmatpush1.msra.mxu0 0.0
    %320 = vmatprep.subr.mxu0 0.0
    %321 = vmatpush1.msra.mxu0 0.0
    %322 = vmatprep.subr.mxu0 0.0
    %323 = vmatpush1.msra.mxu0 0.0
    %324 = vmatprep.mubr.f32.mxu0 0.0
    %325 = vmatmul.mubr.f32.gmra.mrb[0].mxu0 %v258
    %v326 = vpop.f32.mrb[0].mxu0
    %v327 = vadd.f32 0.0, %v326
    %v328 = vpop.f32.mrb[0].mxu0
    %329 = vdwg.mxu0
    %v331 = vrot.slane %v327, 1
    %v332 = vrot.slane %v327, 2
    %v333 = vrot.slane %v327, 3
    %v334 = vrot.slane %v327, 4
    %v335 = vrot.slane %v327, 5
    %v336 = vrot.slane %v327, 6
    %v337 = vrot.slane %v327, 7
    %v346 = vadd.f32 %v198, %v327
    %v347 = vadd.f32 %v203, %v331
    %v348 = vadd.f32 %v208, %v332
    %v349 = vadd.f32 %v213, %v333
    %v350 = vadd.f32 %v218, %v334
    %v351 = vadd.f32 %v223, %v335
    %v352 = vadd.f32 %v228, %v336
    %v353 = vadd.f32 %v233, %v337
    %v354 = vmul.f32 %v346, %v254
    %v355 = vmul.f32 %v347, %v254
    %v356 = vmul.f32 %v348, %v254
    %v357 = vmul.f32 %v349, %v254
    %v358 = vmul.f32 %v350, %v254
    %v359 = vmul.f32 %v351, %v254
    %v360 = vmul.f32 %v352, %v254
    %v361 = vmul.f32 %v353, %v254
    %v362 = vtanh.pop %v354
    %v363 = vtanh.pop %v355
    %v364 = vtanh.pop %v356
    %v365 = vtanh.pop %v357
    %v366 = vtanh.pop %v358
    %v367 = vtanh.pop %v359
    %v368 = vtanh.pop %v360
    %v369 = vtanh.pop %v361
    %v370 = vmul.f32 %v362, %v254
    %v371 = vmul.f32 %v363, %v254
    %v372 = vmul.f32 %v364, %v254
    %v373 = vmul.f32 %v365, %v254
    %v374 = vmul.f32 %v366, %v254
    %v375 = vmul.f32 %v367, %v254
    %v376 = vmul.f32 %v368, %v254
    %v377 = vmul.f32 %v369, %v254
    %v378 = vadd.f32 %v370, %v255
    %v379 = vadd.f32 %v371, %v255
    %v380 = vadd.f32 %v372, %v255
    %v381 = vadd.f32 %v373, %v255
    %v382 = vadd.f32 %v374, %v255
    %v383 = vadd.f32 %v375, %v255
    %v384 = vadd.f32 %v376, %v255
    %v385 = vadd.f32 %v377, %v255
    %v386 = vmul.f32 %v378, 0.0
    %v387 = vmul.f32 %v379, 0.0
    %v388 = vmul.f32 %v380, 0.0
    %v389 = vmul.f32 %v381, 0.0
    %v390 = vmul.f32 %v382, 0.0
    %v391 = vmul.f32 %v383, 0.0
    %v392 = vmul.f32 %v384, 0.0
    %v393 = vmul.f32 %v385, 0.0
    %402 = vrot.lane.b32.xlu0 %v378, 96
    %v403 = vpop.permute.xlu0 %402
    %404 = vrot.lane.b32.xlu0 %v379, 96
    %v405 = vpop.permute.xlu0 %404
    %406 = vrot.lane.b32.xlu0 %v380, 96
    %v407 = vpop.permute.xlu0 %406
    %408 = vrot.lane.b32.xlu0 %v381, 96
    %v409 = vpop.permute.xlu0 %408
    %410 = vrot.lane.b32.xlu0 %v382, 96
    %v411 = vpop.permute.xlu0 %410
    %412 = vrot.lane.b32.xlu0 %v383, 96
    %v413 = vpop.permute.xlu0 %412
    %414 = vrot.lane.b32.xlu0 %v384, 96
    %v415 = vpop.permute.xlu0 %414
    %416 = vrot.lane.b32.xlu0 %v385, 96
    %v417 = vpop.permute.xlu0 %416
    %v426 = vmul.f32 %v378, %v403
    %v427 = vmul.f32 %v379, %v405
    %v428 = vmul.f32 %v380, %v407
    %v429 = vmul.f32 %v381, %v409
    %v430 = vmul.f32 %v382, %v411
    %v431 = vmul.f32 %v383, %v413
    %v432 = vmul.f32 %v384, %v415
    %v433 = vmul.f32 %v385, %v417
    %442 = vrot.lane.b32.xlu0 %v426, 16
    %v443 = vpop.permute.xlu0 %442
    %444 = vrot.lane.b32.xlu0 %v427, 16
    %v445 = vpop.permute.xlu0 %444
    %446 = vrot.lane.b32.xlu0 %v428, 16
    %v447 = vpop.permute.xlu0 %446
    %448 = vrot.lane.b32.xlu0 %v429, 16
    %v449 = vpop.permute.xlu0 %448
    %450 = vrot.lane.b32.xlu0 %v430, 16
    %v451 = vpop.permute.xlu0 %450
    %452 = vrot.lane.b32.xlu0 %v431, 16
    %v453 = vpop.permute.xlu0 %452
    %454 = vrot.lane.b32.xlu0 %v432, 16
    %v455 = vpop.permute.xlu0 %454
    %456 = vrot.lane.b32.xlu0 %v433, 16
    %v457 = vpop.permute.xlu0 %456
    %v466 = vadd.f32 %v386, %v443
    %v467 = vadd.f32 %v387, %v445
    %v468 = vadd.f32 %v388, %v447
    %v469 = vadd.f32 %v389, %v449
    %v470 = vadd.f32 %v390, %v451
    %v471 = vadd.f32 %v391, %v453
    %v472 = vadd.f32 %v392, %v455
    %v473 = vadd.f32 %v393, %v457
    %v474 = vtanh.pop %v466
    %v475 = vtanh.pop %v467
    %v476 = vtanh.pop %v468
    %v477 = vtanh.pop %v469
    %v478 = vtanh.pop %v470
    %v479 = vtanh.pop %v471
    %v480 = vtanh.pop %v472
    %v481 = vtanh.pop %v473
    %490 = vrot.lane.b32.xlu0 %v474, 32
    %v491 = vpop.permute.xlu0 %490
    %492 = vrot.lane.b32.xlu0 %v475, 32
    %v493 = vpop.permute.xlu0 %492
    %494 = vrot.lane.b32.xlu0 %v476, 32
    %v495 = vpop.permute.xlu0 %494
    %496 = vrot.lane.b32.xlu0 %v477, 32
    %v497 = vpop.permute.xlu0 %496
    %498 = vrot.lane.b32.xlu0 %v478, 32
    %v499 = vpop.permute.xlu0 %498
    %500 = vrot.lane.b32.xlu0 %v479, 32
    %v501 = vpop.permute.xlu0 %500
    %502 = vrot.lane.b32.xlu0 %v480, 32
    %v503 = vpop.permute.xlu0 %502
    %504 = vrot.lane.b32.xlu0 %v481, 32
    %v505 = vpop.permute.xlu0 %504
    %v514 = vmul.f32 %v378, %v491
    %v515 = vmul.f32 %v379, %v493
    %v516 = vmul.f32 %v380, %v495
    %v517 = vmul.f32 %v381, %v497
    %v518 = vmul.f32 %v382, %v499
    %v519 = vmul.f32 %v383, %v501
    %v520 = vmul.f32 %v384, %v503
    %v521 = vmul.f32 %v385, %v505
    %v530 = vrot.slane %v515, 7
    %vm531 = vcmask 1041409
    %v532 = vsel %vm531, %v530, %v514
    %v533 = vrot.slane %v516, 6
    %vm534 = vcmask 1042434
    %v535 = vsel %vm534, %v533, %v532
    %v536 = vrot.slane %v517, 5
    %vm537 = vcmask 1043459
    %v538 = vsel %vm537, %v536, %v535
    %v539 = vrot.slane %v518, 4
    %vm540 = vcmask 1044484
    %v541 = vsel %vm540, %v539, %v538
    %v542 = vrot.slane %v519, 3
    %vm543 = vcmask 1045509
    %v544 = vsel %vm543, %v542, %v541
    %v545 = vrot.slane %v520, 2
    %vm546 = vcmask 1046534
    %v547 = vsel %vm546, %v545, %v544
    %v548 = vrot.slane %v521, 1
    %vm549 = vcmask 1047559
    %v550 = vsel %vm549, %v548, %v547
    %551 = vrot.lane.b32.xlu0 %v550, 80
    %v552 = vpop.permute.xlu0 %551
    %v554 = vsel %vm256, %v552, 0.0
    %vm555 = vcmask 261120
    %v557 = vsel %vm555, %v554, 0
    %559 = vmatprep.subr.mxu0 0.0
    %560 = vmatpush1.msra.mxu0 %v238
    %561 = vmatprep.subr.mxu0 0.0
    %562 = vmatpush1.msra.mxu0 %v239
    %563 = vmatprep.subr.mxu0 0.0
    %564 = vmatpush1.msra.mxu0 %v240
    %565 = vmatprep.subr.mxu0 0.0
    %566 = vmatpush1.msra.mxu0 %v241
    %567 = vmatprep.subr.mxu0 0.0
    %568 = vmatpush1.msra.mxu0 0.0
    %569 = vmatprep.subr.mxu0 0.0
    %570 = vmatpush1.msra.mxu0 0.0
    %571 = vmatprep.subr.mxu0 0.0
    %572 = vmatpush1.msra.mxu0 0.0
    %573 = vmatprep.subr.mxu0 0.0
    %574 = vmatpush1.msra.mxu0 0.0
    %575 = vmatprep.subr.mxu0 0.0
    %576 = vmatpush1.msra.mxu0 0.0
    %577 = vmatprep.subr.mxu0 0.0
    %578 = vmatpush1.msra.mxu0 0.0
    %579 = vmatprep.subr.mxu0 0.0
    %580 = vmatpush1.msra.mxu0 0.0
    %581 = vmatprep.subr.mxu0 0.0
    %582 = vmatpush1.msra.mxu0 0.0
    %583 = vmatprep.subr.mxu0 0.0
    %584 = vmatpush1.msra.mxu0 0.0
    %585 = vmatprep.subr.mxu0 0.0
    %586 = vmatpush1.msra.mxu0 0.0
    %587 = vmatprep.subr.mxu0 0.0
    %588 = vmatpush1.msra.mxu0 0.0
    %589 = vmatprep.subr.mxu0 0.0
    %590 = vmatpush1.msra.mxu0 0.0
    %591 = vmatprep.subr.mxu0 0.0
    %592 = vmatpush1.msra.mxu0 0.0
    %593 = vmatprep.subr.mxu0 0.0
    %594 = vmatpush1.msra.mxu0 0.0
    %595 = vmatprep.subr.mxu0 0.0
    %596 = vmatpush1.msra.mxu0 0.0
    %597 = vmatprep.subr.mxu0 0.0
    %598 = vmatpush1.msra.mxu0 0.0
    %599 = vmatprep.subr.mxu0 0.0
    %600 = vmatpush1.msra.mxu0 0.0
    %601 = vmatprep.subr.mxu0 0.0
    %602 = vmatpush1.msra.mxu0 0.0
    %603 = vmatprep.subr.mxu0 0.0
    %604 = vmatpush1.msra.mxu0 0.0
    %605 = vmatprep.subr.mxu0 0.0
    %606 = vmatpush1.msra.mxu0 0.0
    %607 = vmatprep.subr.mxu0 0.0
    %608 = vmatpush1.msra.mxu0 0.0
    %609 = vmatprep.subr.mxu0 0.0
    %610 = vmatpush1.msra.mxu0 0.0
    %611 = vmatprep.subr.mxu0 0.0
    %612 = vmatpush1.msra.mxu0 0.0
    %613 = vmatprep.subr.mxu0 0.0
    %614 = vmatpush1.msra.mxu0 0.0
    %615 = vmatprep.subr.mxu0 0.0
    %616 = vmatpush1.msra.mxu0 0.0
    %617 = vmatprep.subr.mxu0 0.0
    %618 = vmatpush1.msra.mxu0 0.0
    %619 = vmatprep.subr.mxu0 0.0
    %620 = vmatpush1.msra.mxu0 0.0
    %621 = vmatprep.subr.mxu0 0.0
    %622 = vmatpush1.msra.mxu0 0.0
    %623 = vmatprep.mubr.f32.mxu0 0.0
    %624 = vmatmul.mubr.f32.gmra.mrb[0].mxu0 %v557
    %v625 = vpop.f32.mrb[0].mxu0
    %v626 = vadd.f32 %v247, %v625
    %v627 = vpop.f32.mrb[0].mxu0
    %628 = vdwg.mxu0
    %v629 = vmul.f32 %v626, %v254
    %v630 = vtanh.pop %v629
    %v631 = vmul.f32 %v630, %v254
    %v632 = vadd.f32 %v631, %v255
    %v633 = vmul.f32 %v632, 0.0
    %635 = vrot.lane.b32.xlu0 %v632, 96
    %v636 = vpop.permute.xlu0 %635
    %v638 = vmul.f32 %v632, %v636
    %640 = vrot.lane.b32.xlu0 %v638, 16
    %v641 = vpop.permute.xlu0 %640
    %v643 = vadd.f32 %v633, %v641
    %v644 = vtanh.pop %v643
    %646 = vrot.lane.b32.xlu0 %v644, 32
    %v647 = vpop.permute.xlu0 %646
    %v649 = vmul.f32 %v632, %v647
    %v650 = vsel %vm256, %v552, 0
    %652 = vmatprep.subr.mxu0 0.0
    %653 = vmatpush1.msra.mxu0 %v236
    %654 = vmatprep.subr.mxu0 0.0
    %655 = vmatpush1.msra.mxu0 %v237
    %656 = vmatprep.subr.mxu0 0.0
    %657 = vmatpush1.msra.mxu0 0.0
    %658 = vmatprep.subr.mxu0 0.0
    %659 = vmatpush1.msra.mxu0 0.0
    %660 = vmatprep.subr.mxu0 0.0
    %661 = vmatpush1.msra.mxu0 0.0
    %662 = vmatprep.subr.mxu0 0.0
    %663 = vmatpush1.msra.mxu0 0.0
    %664 = vmatprep.subr.mxu0 0.0
    %665 = vmatpush1.msra.mxu0 0.0
    %666 = vmatprep.subr.mxu0 0.0
    %667 = vmatpush1.msra.mxu0 0.0
    %668 = vmatprep.subr.mxu0 0.0
    %669 = vmatpush1.msra.mxu0 0.0
    %670 = vmatprep.subr.mxu0 0.0
    %671 = vmatpush1.msra.mxu0 0.0
    %672 = vmatprep.subr.mxu0 0.0
    %673 = vmatpush1.msra.mxu0 0.0
    %674 = vmatprep.subr.mxu0 0.0
    %675 = vmatpush1.msra.mxu0 0.0
    %676 = vmatprep.subr.mxu0 0.0
    %677 = vmatpush1.msra.mxu0 0.0
    %678 = vmatprep.subr.mxu0 0.0
    %679 = vmatpush1.msra.mxu0 0.0
    %680 = vmatprep.subr.mxu0 0.0
    %681 = vmatpush1.msra.mxu0 0.0
    %682 = vmatprep.subr.mxu0 0.0
    %683 = vmatpush1.msra.mxu0 0.0
    %684 = vmatprep.subr.mxu0 0.0
    %685 = vmatpush1.msra.mxu0 0.0
    %686 = vmatprep.subr.mxu0 0.0
    %687 = vmatpush1.msra.mxu0 0.0
    %688 = vmatprep.subr.mxu0 0.0
    %689 = vmatpush1.msra.mxu0 0.0
    %690 = vmatprep.subr.mxu0 0.0
    %691 = vmatpush1.msra.mxu0 0.0
    %692 = vmatprep.subr.mxu0 0.0
    %693 = vmatpush1.msra.mxu0 0.0
    %694 = vmatprep.subr.mxu0 0.0
    %695 = vmatpush1.msra.mxu0 0.0
    %696 = vmatprep.subr.mxu0 0.0
    %697 = vmatpush1.msra.mxu0 0.0
    %698 = vmatprep.subr.mxu0 0.0
    %699 = vmatpush1.msra.mxu0 0.0
    %700 = vmatprep.subr.mxu0 0.0
    %701 = vmatpush1.msra.mxu0 0.0
    %702 = vmatprep.subr.mxu0 0.0
    %703 = vmatpush1.msra.mxu0 0.0
    %704 = vmatprep.subr.mxu0 0.0
    %705 = vmatpush1.msra.mxu0 0.0
    %706 = vmatprep.subr.mxu0 0.0
    %707 = vmatpush1.msra.mxu0 0.0
    %708 = vmatprep.subr.mxu0 0.0
    %709 = vmatpush1.msra.mxu0 0.0
    %710 = vmatprep.subr.mxu0 0.0
    %711 = vmatpush1.msra.mxu0 0.0
    %712 = vmatprep.subr.mxu0 0.0
    %713 = vmatpush1.msra.mxu0 0.0
    %714 = vmatprep.subr.mxu0 0.0
    %715 = vmatpush1.msra.mxu0 0.0
    %716 = vmatprep.mubr.f32.mxu0 0.0
    %717 = vmatmul.mubr.f32.gmra.mrb[0].mxu0 %v650
    %v718 = vpop.f32.mrb[0].mxu0
    %v719 = vadd.f32 0.0, %v718
    %v720 = vpop.f32.mrb[0].mxu0
    %721 = vdwg.mxu0
    %v723 = vrot.slane %v719, 7
    %v724 = vrot.slane %v719, 1
    %v725 = vrot.slane %v719, 2
    %v726 = vrot.slane %v719, 3
    %v727 = vrot.slane %v719, 4
    %v728 = vrot.slane %v719, 5
    %v729 = vrot.slane %v719, 6
    %v738 = vadd.f32 %v198, %v723
    %v739 = vadd.f32 %v203, %v719
    %v740 = vadd.f32 %v208, %v724
    %v741 = vadd.f32 %v213, %v725
    %v742 = vadd.f32 %v218, %v726
    %v743 = vadd.f32 %v223, %v727
    %v744 = vadd.f32 %v228, %v728
    %v745 = vadd.f32 %v233, %v729
    %v746 = vmul.f32 %v738, %v254
    %v747 = vmul.f32 %v739, %v254
    %v748 = vmul.f32 %v740, %v254
    %v749 = vmul.f32 %v741, %v254
    %v750 = vmul.f32 %v742, %v254
    %v751 = vmul.f32 %v743, %v254
    %v752 = vmul.f32 %v744, %v254
    %v753 = vmul.f32 %v745, %v254
    %v754 = vtanh.pop %v746
    %v755 = vtanh.pop %v747
    %v756 = vtanh.pop %v748
    %v757 = vtanh.pop %v749
    %v758 = vtanh.pop %v750
    %v759 = vtanh.pop %v751
    %v760 = vtanh.pop %v752
    %v761 = vtanh.pop %v753
    %v762 = vmul.f32 %v754, %v254
    %v763 = vmul.f32 %v755, %v254
    %v764 = vmul.f32 %v756, %v254
    %v765 = vmul.f32 %v757, %v254
    %v766 = vmul.f32 %v758, %v254
    %v767 = vmul.f32 %v759, %v254
    %v768 = vmul.f32 %v760, %v254
    %v769 = vmul.f32 %v761, %v254
    %v770 = vadd.f32 %v762, %v255
    %v771 = vadd.f32 %v763, %v255
    %v772 = vadd.f32 %v764, %v255
    %v773 = vadd.f32 %v765, %v255
    %v774 = vadd.f32 %v766, %v255
    %v775 = vadd.f32 %v767, %v255
    %v776 = vadd.f32 %v768, %v255
    %v777 = vadd.f32 %v769, %v255
    %v786 = vrot.slane %v466, 7
    %v787 = vrot.slane %v467, 7
    %v788 = vrot.slane %v468, 7
    %v789 = vrot.slane %v469, 7
    %v790 = vrot.slane %v470, 7
    %v791 = vrot.slane %v471, 7
    %v792 = vrot.slane %v472, 7
    %v793 = vrot.slane %v473, 7
    %v802 = vmul.f32 %v770, %v786
    %v803 = vmul.f32 %v771, %v787
    %v804 = vmul.f32 %v772, %v788
    %v805 = vmul.f32 %v773, %v789
    %v806 = vmul.f32 %v774, %v790
    %v807 = vmul.f32 %v775, %v791
    %v808 = vmul.f32 %v776, %v792
    %v809 = vmul.f32 %v777, %v793
    %818 = vrot.lane.b32.xlu0 %v770, 96
    %v819 = vpop.permute.xlu0 %818
    %820 = vrot.lane.b32.xlu0 %v771, 96
    %v821 = vpop.permute.xlu0 %820
    %822 = vrot.lane.b32.xlu0 %v772, 96
    %v823 = vpop.permute.xlu0 %822
    %824 = vrot.lane.b32.xlu0 %v773, 96
    %v825 = vpop.permute.xlu0 %824
    %826 = vrot.lane.b32.xlu0 %v774, 96
    %v827 = vpop.permute.xlu0 %826
    %828 = vrot.lane.b32.xlu0 %v775, 96
    %v829 = vpop.permute.xlu0 %828
    %830 = vrot.lane.b32.xlu0 %v776, 96
    %v831 = vpop.permute.xlu0 %830
    %832 = vrot.lane.b32.xlu0 %v777, 96
    %v833 = vpop.permute.xlu0 %832
    %v842 = vmul.f32 %v770, %v819
    %v843 = vmul.f32 %v771, %v821
    %v844 = vmul.f32 %v772, %v823
    %v845 = vmul.f32 %v773, %v825
    %v846 = vmul.f32 %v774, %v827
    %v847 = vmul.f32 %v775, %v829
    %v848 = vmul.f32 %v776, %v831
    %v849 = vmul.f32 %v777, %v833
    %858 = vrot.lane.b32.xlu0 %v842, 16
    %v859 = vpop.permute.xlu0 %858
    %860 = vrot.lane.b32.xlu0 %v843, 16
    %v861 = vpop.permute.xlu0 %860
    %862 = vrot.lane.b32.xlu0 %v844, 16
    %v863 = vpop.permute.xlu0 %862
    %864 = vrot.lane.b32.xlu0 %v845, 16
    %v865 = vpop.permute.xlu0 %864
    %866 = vrot.lane.b32.xlu0 %v846, 16
    %v867 = vpop.permute.xlu0 %866
    %868 = vrot.lane.b32.xlu0 %v847, 16
    %v869 = vpop.permute.xlu0 %868
    %870 = vrot.lane.b32.xlu0 %v848, 16
    %v871 = vpop.permute.xlu0 %870
    %872 = vrot.lane.b32.xlu0 %v849, 16
    %v873 = vpop.permute.xlu0 %872
    %v882 = vadd.f32 %v802, %v859
    %v883 = vadd.f32 %v803, %v861
    %v884 = vadd.f32 %v804, %v863
    %v885 = vadd.f32 %v805, %v865
    %v886 = vadd.f32 %v806, %v867
    %v887 = vadd.f32 %v807, %v869
    %v888 = vadd.f32 %v808, %v871
    %v889 = vadd.f32 %v809, %v873
    %v890 = vtanh.pop %v882
    %v891 = vtanh.pop %v883
    %v892 = vtanh.pop %v884
    %v893 = vtanh.pop %v885
    %v894 = vtanh.pop %v886
    %v895 = vtanh.pop %v887
    %v896 = vtanh.pop %v888
    %v897 = vtanh.pop %v889
    %906 = vrot.lane.b32.xlu0 %v890, 32
    %v907 = vpop.permute.xlu0 %906
    %908 = vrot.lane.b32.xlu0 %v891, 32
    %v909 = vpop.permute.xlu0 %908
    %910 = vrot.lane.b32.xlu0 %v892, 32
    %v911 = vpop.permute.xlu0 %910
    %912 = vrot.lane.b32.xlu0 %v893, 32
    %v913 = vpop.permute.xlu0 %912
    %914 = vrot.lane.b32.xlu0 %v894, 32
    %v915 = vpop.permute.xlu0 %914
    %916 = vrot.lane.b32.xlu0 %v895, 32
    %v917 = vpop.permute.xlu0 %916
    %918 = vrot.lane.b32.xlu0 %v896, 32
    %v919 = vpop.permute.xlu0 %918
    %920 = vrot.lane.b32.xlu0 %v897, 32
    %v921 = vpop.permute.xlu0 %920
    %v930 = vmul.f32 %v770, %v907
    %v931 = vmul.f32 %v771, %v909
    %v932 = vmul.f32 %v772, %v911
    %v933 = vmul.f32 %v773, %v913
    %v934 = vmul.f32 %v774, %v915
    %v935 = vmul.f32 %v775, %v917
    %v936 = vmul.f32 %v776, %v919
    %v937 = vmul.f32 %v777, %v921
    %v946 = vrot.slane %v931, 7
    %v947 = vsel %vm534, %v946, %v930
    %v948 = vrot.slane %v932, 6
    %v949 = vsel %vm537, %v948, %v947
    %v950 = vrot.slane %v933, 5
    %v951 = vsel %vm540, %v950, %v949
    %v952 = vrot.slane %v934, 4
    %v953 = vsel %vm543, %v952, %v951
    %v954 = vrot.slane %v935, 3
    %v955 = vsel %vm546, %v954, %v953
    %v956 = vrot.slane %v936, 2
    %v957 = vsel %vm549, %v956, %v955
    %v958 = vrot.slane %v937, 1
    %959 = vrot.lane.b32.xlu0 %v957, 80
    %v960 = vpop.permute.xlu0 %959
    %961 = vrot.lane.b32.xlu0 %v958, 80
    %v962 = vpop.permute.xlu0 %961
    %v966 = vrot.slane %v649, 7
    %967 = vrot.lane.b32.xlu0 %v966, 96
    %v968 = vpop.permute.xlu0 %967
    %v970 = vsel %vm256, %v960, %v968
    %v971 = vsel %vm256, %v962, %v968
    %vm974 = vcmask 1046528
    %v975 = vrot.slane %v970, 1
    %v976 = vrot.slane %v971, 1
    %v977 = vsel %vm974, %v975, %v976
    %v978 = vsel %vm555, %v977, 0
    %980 = vmatprep.subr.mxu0 0.0
    %981 = vmatpush1.msra.mxu0 %v238
    %982 = vmatprep.subr.mxu0 0.0
    %983 = vmatpush1.msra.mxu0 %v239
    %984 = vmatprep.subr.mxu0 0.0
    %985 = vmatpush1.msra.mxu0 %v240
    %986 = vmatprep.subr.mxu0 0.0
    %987 = vmatpush1.msra.mxu0 %v241
    %988 = vmatprep.subr.mxu0 0.0
    %989 = vmatpush1.msra.mxu0 0.0
    %990 = vmatprep.subr.mxu0 0.0
    %991 = vmatpush1.msra.mxu0 0.0
    %992 = vmatprep.subr.mxu0 0.0
    %993 = vmatpush1.msra.mxu0 0.0
    %994 = vmatprep.subr.mxu0 0.0
    %995 = vmatpush1.msra.mxu0 0.0
    %996 = vmatprep.subr.mxu0 0.0
    %997 = vmatpush1.msra.mxu0 0.0
    %998 = vmatprep.subr.mxu0 0.0
    %999 = vmatpush1.msra.mxu0 0.0
    %1000 = vmatprep.subr.mxu0 0.0
    %1001 = vmatpush1.msra.mxu0 0.0
    %1002 = vmatprep.subr.mxu0 0.0
    %1003 = vmatpush1.msra.mxu0 0.0
    %1004 = vmatprep.subr.mxu0 0.0
    %1005 = vmatpush1.msra.mxu0 0.0
    %1006 = vmatprep.subr.mxu0 0.0
    %1007 = vmatpush1.msra.mxu0 0.0
    %1008 = vmatprep.subr.mxu0 0.0
    %1009 = vmatpush1.msra.mxu0 0.0
    %1010 = vmatprep.subr.mxu0 0.0
    %1011 = vmatpush1.msra.mxu0 0.0
    %1012 = vmatprep.subr.mxu0 0.0
    %1013 = vmatpush1.msra.mxu0 0.0
    %1014 = vmatprep.subr.mxu0 0.0
    %1015 = vmatpush1.msra.mxu0 0.0
    %1016 = vmatprep.subr.mxu0 0.0
    %1017 = vmatpush1.msra.mxu0 0.0
    %1018 = vmatprep.subr.mxu0 0.0
    %1019 = vmatpush1.msra.mxu0 0.0
    %1020 = vmatprep.subr.mxu0 0.0
    %1021 = vmatpush1.msra.mxu0 0.0
    %1022 = vmatprep.subr.mxu0 0.0
    %1023 = vmatpush1.msra.mxu0 0.0
    %1024 = vmatprep.subr.mxu0 0.0
    %1025 = vmatpush1.msra.mxu0 0.0
    %1026 = vmatprep.subr.mxu0 0.0
    %1027 = vmatpush1.msra.mxu0 0.0
    %1028 = vmatprep.subr.mxu0 0.0
    %1029 = vmatpush1.msra.mxu0 0.0
    %1030 = vmatprep.subr.mxu0 0.0
    %1031 = vmatpush1.msra.mxu0 0.0
    %1032 = vmatprep.subr.mxu0 0.0
    %1033 = vmatpush1.msra.mxu0 0.0
    %1034 = vmatprep.subr.mxu0 0.0
    %1035 = vmatpush1.msra.mxu0 0.0
    %1036 = vmatprep.subr.mxu0 0.0
    %1037 = vmatpush1.msra.mxu0 0.0
    %1038 = vmatprep.subr.mxu0 0.0
    %1039 = vmatpush1.msra.mxu0 0.0
    %1040 = vmatprep.subr.mxu0 0.0
    %1041 = vmatpush1.msra.mxu0 0.0
    %1042 = vmatprep.subr.mxu0 0.0
    %1043 = vmatpush1.msra.mxu0 0.0
    %1044 = vmatprep.mubr.f32.mxu0 0.0
    %1045 = vmatmul.mubr.f32.gmra.mrb[0].mxu0 %v978
    %v1046 = vpop.f32.mrb[0].mxu0
    %v1047 = vadd.f32 %v247, %v1046
    %v1048 = vpop.f32.mrb[0].mxu0
    %1049 = vdwg.mxu0
    %v1050 = vmul.f32 %v1047, %v254
    %v1051 = vtanh.pop %v1050
    %v1052 = vmul.f32 %v1051, %v254
    %v1053 = vadd.f32 %v1052, %v255
    %v1054 = vmul.f32 %v1053, %v643
    %1056 = vrot.lane.b32.xlu0 %v1053, 96
    %v1057 = vpop.permute.xlu0 %1056
    %v1059 = vmul.f32 %v1053, %v1057
    %1061 = vrot.lane.b32.xlu0 %v1059, 16
    %v1062 = vpop.permute.xlu0 %1061
    %v1064 = vadd.f32 %v1054, %v1062
    %v1065 = vtanh.pop %v1064
    %1067 = vrot.lane.b32.xlu0 %v1065, 32
    %v1068 = vpop.permute.xlu0 %1067
    %v1070 = vmul.f32 %v1053, %v1068
    %v1071 = vrot.slane %v930, 1
    %v1072 = vsel %vm531, %v931, %v1071
    %v1073 = vrot.slane %v932, 7
    %v1074 = vsel %vm534, %v1073, %v1072
    %v1075 = vrot.slane %v933, 6
    %v1076 = vsel %vm537, %v1075, %v1074
    %v1077 = vrot.slane %v934, 5
    %v1078 = vsel %vm540, %v1077, %v1076
    %v1079 = vrot.slane %v935, 4
    %v1080 = vsel %vm543, %v1079, %v1078
    %v1081 = vrot.slane %v936, 3
    %v1082 = vsel %vm546, %v1081, %v1080
    %v1083 = vrot.slane %v937, 2
    %v1084 = vsel %vm549, %v1083, %v1082
    %1085 = vrot.lane.b32.xlu0 %v1084, 80
    %v1086 = vpop.permute.xlu0 %1085
    %v1087 = vsel %vm256, %v1086, 0
    %1089 = vmatprep.subr.mxu0 0.0
    %1090 = vmatpush1.msra.mxu0 %v236
    %1091 = vmatprep.subr.mxu0 0.0
    %1092 = vmatpush1.msra.mxu0 %v237
    %1093 = vmatprep.subr.mxu0 0.0
    %1094 = vmatpush1.msra.mxu0 0.0
    %1095 = vmatprep.subr.mxu0 0.0
    %1096 = vmatpush1.msra.mxu0 0.0
    %1097 = vmatprep.subr.mxu0 0.0
    %1098 = vmatpush1.msra.mxu0 0.0
    %1099 = vmatprep.subr.mxu0 0.0
    %1100 = vmatpush1.msra.mxu0 0.0
    %1101 = vmatprep.subr.mxu0 0.0
    %1102 = vmatpush1.msra.mxu0 0.0
    %1103 = vmatprep.subr.mxu0 0.0
    %1104 = vmatpush1.msra.mxu0 0.0
    %1105 = vmatprep.subr.mxu0 0.0
    %1106 = vmatpush1.msra.mxu0 0.0
    %1107 = vmatprep.subr.mxu0 0.0
    %1108 = vmatpush1.msra.mxu0 0.0
    %1109 = vmatprep.subr.mxu0 0.0
    %1110 = vmatpush1.msra.mxu0 0.0
    %1111 = vmatprep.subr.mxu0 0.0
    %1112 = vmatpush1.msra.mxu0 0.0
    %1113 = vmatprep.subr.mxu0 0.0
    %1114 = vmatpush1.msra.mxu0 0.0
    %1115 = vmatprep.subr.mxu0 0.0
    %1116 = vmatpush1.msra.mxu0 0.0
    %1117 = vmatprep.subr.mxu0 0.0
    %1118 = vmatpush1.msra.mxu0 0.0
    %1119 = vmatprep.subr.mxu0 0.0
    %1120 = vmatpush1.msra.mxu0 0.0
    %1121 = vmatprep.subr.mxu0 0.0
    %1122 = vmatpush1.msra.mxu0 0.0
    %1123 = vmatprep.subr.mxu0 0.0
    %1124 = vmatpush1.msra.mxu0 0.0
    %1125 = vmatprep.subr.mxu0 0.0
    %1126 = vmatpush1.msra.mxu0 0.0
    %1127 = vmatprep.subr.mxu0 0.0
    %1128 = vmatpush1.msra.mxu0 0.0
    %1129 = vmatprep.subr.mxu0 0.0
    %1130 = vmatpush1.msra.mxu0 0.0
    %1131 = vmatprep.subr.mxu0 0.0
    %1132 = vmatpush1.msra.mxu0 0.0
    %1133 = vmatprep.subr.mxu0 0.0
    %1134 = vmatpush1.msra.mxu0 0.0
    %1135 = vmatprep.subr.mxu0 0.0
    %1136 = vmatpush1.msra.mxu0 0.0
    %1137 = vmatprep.subr.mxu0 0.0
    %1138 = vmatpush1.msra.mxu0 0.0
    %1139 = vmatprep.subr.mxu0 0.0
    %1140 = vmatpush1.msra.mxu0 0.0
    %1141 = vmatprep.subr.mxu0 0.0
    %1142 = vmatpush1.msra.mxu0 0.0
    %1143 = vmatprep.subr.mxu0 0.0
    %1144 = vmatpush1.msra.mxu0 0.0
    %1145 = vmatprep.subr.mxu0 0.0
    %1146 = vmatpush1.msra.mxu0 0.0
    %1147 = vmatprep.subr.mxu0 0.0
    %1148 = vmatpush1.msra.mxu0 0.0
    %1149 = vmatprep.subr.mxu0 0.0
    %1150 = vmatpush1.msra.mxu0 0.0
    %1151 = vmatprep.subr.mxu0 0.0
    %1152 = vmatpush1.msra.mxu0 0.0
    %1153 = vmatprep.mubr.f32.mxu0 0.0
    %1154 = vmatmul.mubr.f32.gmra.mrb[0].mxu0 %v1087
    %v1155 = vpop.f32.mrb[0].mxu0
    %v1156 = vadd.f32 0.0, %v1155
    %v1157 = vpop.f32.mrb[0].mxu0
    %1158 = vdwg.mxu0
    %v1160 = vrot.slane %v1156, 6
    %v1161 = vrot.slane %v1156, 7
    %v1162 = vrot.slane %v1156, 1
    %v1163 = vrot.slane %v1156, 2
    %v1164 = vrot.slane %v1156, 3
    %v1165 = vrot.slane %v1156, 4
    %v1166 = vrot.slane %v1156, 5
    %v1175 = vadd.f32 %v198, %v1160
    %v1176 = vadd.f32 %v203, %v1161
    %v1177 = vadd.f32 %v208, %v1156
    %v1178 = vadd.f32 %v213, %v1162
    %v1179 = vadd.f32 %v218, %v1163
    %v1180 = vadd.f32 %v223, %v1164
    %v1181 = vadd.f32 %v228, %v1165
    %v1182 = vadd.f32 %v233, %v1166
    %v1183 = vmul.f32 %v1175, %v254
    %v1184 = vmul.f32 %v1176, %v254
    %v1185 = vmul.f32 %v1177, %v254
    %v1186 = vmul.f32 %v1178, %v254
    %v1187 = vmul.f32 %v1179, %v254
    %v1188 = vmul.f32 %v1180, %v254
    %v1189 = vmul.f32 %v1181, %v254
    %v1190 = vmul.f32 %v1182, %v254
    %v1191 = vtanh.pop %v1183
    %v1192 = vtanh.pop %v1184
    %v1193 = vtanh.pop %v1185
    %v1194 = vtanh.pop %v1186
    %v1195 = vtanh.pop %v1187
    %v1196 = vtanh.pop %v1188
    %v1197 = vtanh.pop %v1189
    %v1198 = vtanh.pop %v1190
    %v1199 = vmul.f32 %v1191, %v254
    %v1200 = vmul.f32 %v1192, %v254
    %v1201 = vmul.f32 %v1193, %v254
    %v1202 = vmul.f32 %v1194, %v254
    %v1203 = vmul.f32 %v1195, %v254
    %v1204 = vmul.f32 %v1196, %v254
    %v1205 = vmul.f32 %v1197, %v254
    %v1206 = vmul.f32 %v1198, %v254
    %v1207 = vadd.f32 %v1199, %v255
    %v1208 = vadd.f32 %v1200, %v255
    %v1209 = vadd.f32 %v1201, %v255
    %v1210 = vadd.f32 %v1202, %v255
    %v1211 = vadd.f32 %v1203, %v255
    %v1212 = vadd.f32 %v1204, %v255
    %v1213 = vadd.f32 %v1205, %v255
    %v1214 = vadd.f32 %v1206, %v255
    %v1223 = vrot.slane %v882, 7
    %v1224 = vrot.slane %v883, 7
    %v1225 = vrot.slane %v884, 7
    %v1226 = vrot.slane %v885, 7
    %v1227 = vrot.slane %v886, 7
    %v1228 = vrot.slane %v887, 7
    %v1229 = vrot.slane %v888, 7
    %v1230 = vrot.slane %v889, 7
    %v1239 = vmul.f32 %v1207, %v1223
    %v1240 = vmul.f32 %v1208, %v1224
    %v1241 = vmul.f32 %v1209, %v1225
    %v1242 = vmul.f32 %v1210, %v1226
    %v1243 = vmul.f32 %v1211, %v1227
    %v1244 = vmul.f32 %v1212, %v1228
    %v1245 = vmul.f32 %v1213, %v1229
    %v1246 = vmul.f32 %v1214, %v1230
    %1255 = vrot.lane.b32.xlu0 %v1207, 96
    %v1256 = vpop.permute.xlu0 %1255
    %1257 = vrot.lane.b32.xlu0 %v1208, 96
    %v1258 = vpop.permute.xlu0 %1257
    %1259 = vrot.lane.b32.xlu0 %v1209, 96
    %v1260 = vpop.permute.xlu0 %1259
    %1261 = vrot.lane.b32.xlu0 %v1210, 96
    %v1262 = vpop.permute.xlu0 %1261
    %1263 = vrot.lane.b32.xlu0 %v1211, 96
    %v1264 = vpop.permute.xlu0 %1263
    %1265 = vrot.lane.b32.xlu0 %v1212, 96
    %v1266 = vpop.permute.xlu0 %1265
    %1267 = vrot.lane.b32.xlu0 %v1213, 96
    %v1268 = vpop.permute.xlu0 %1267
    %1269 = vrot.lane.b32.xlu0 %v1214, 96
    %v1270 = vpop.permute.xlu0 %1269
    %v1279 = vmul.f32 %v1207, %v1256
    %v1280 = vmul.f32 %v1208, %v1258
    %v1281 = vmul.f32 %v1209, %v1260
    %v1282 = vmul.f32 %v1210, %v1262
    %v1283 = vmul.f32 %v1211, %v1264
    %v1284 = vmul.f32 %v1212, %v1266
    %v1285 = vmul.f32 %v1213, %v1268
    %v1286 = vmul.f32 %v1214, %v1270
    %1295 = vrot.lane.b32.xlu0 %v1279, 16
    %v1296 = vpop.permute.xlu0 %1295
    %1297 = vrot.lane.b32.xlu0 %v1280, 16
    %v1298 = vpop.permute.xlu0 %1297
    %1299 = vrot.lane.b32.xlu0 %v1281, 16
    %v1300 = vpop.permute.xlu0 %1299
    %1301 = vrot.lane.b32.xlu0 %v1282, 16
    %v1302 = vpop.permute.xlu0 %1301
    %1303 = vrot.lane.b32.xlu0 %v1283, 16
    %v1304 = vpop.permute.xlu0 %1303
    %1305 = vrot.lane.b32.xlu0 %v1284, 16
    %v1306 = vpop.permute.xlu0 %1305
    %1307 = vrot.lane.b32.xlu0 %v1285, 16
    %v1308 = vpop.permute.xlu0 %1307
    %1309 = vrot.lane.b32.xlu0 %v1286, 16
    %v1310 = vpop.permute.xlu0 %1309
    %v1319 = vadd.f32 %v1239, %v1296
    %v1320 = vadd.f32 %v1240, %v1298
    %v1321 = vadd.f32 %v1241, %v1300
    %v1322 = vadd.f32 %v1242, %v1302
    %v1323 = vadd.f32 %v1243, %v1304
    %v1324 = vadd.f32 %v1244, %v1306
    %v1325 = vadd.f32 %v1245, %v1308
    %v1326 = vadd.f32 %v1246, %v1310
    %v1327 = vtanh.pop %v1319
    %v1328 = vtanh.pop %v1320
    %v1329 = vtanh.pop %v1321
    %v1330 = vtanh.pop %v1322
    %v1331 = vtanh.pop %v1323
    %v1332 = vtanh.pop %v1324
    %v1333 = vtanh.pop %v1325
    %v1334 = vtanh.pop %v1326
    %1343 = vrot.lane.b32.xlu0 %v1327, 32
    %v1344 = vpop.permute.xlu0 %1343
    %1345 = vrot.lane.b32.xlu0 %v1328, 32
    %v1346 = vpop.permute.xlu0 %1345
    %1347 = vrot.lane.b32.xlu0 %v1329, 32
    %v1348 = vpop.permute.xlu0 %1347
    %1349 = vrot.lane.b32.xlu0 %v1330, 32
    %v1350 = vpop.permute.xlu0 %1349
    %1351 = vrot.lane.b32.xlu0 %v1331, 32
    %v1352 = vpop.permute.xlu0 %1351
    %1353 = vrot.lane.b32.xlu0 %v1332, 32
    %v1354 = vpop.permute.xlu0 %1353
    %1355 = vrot.lane.b32.xlu0 %v1333, 32
    %v1356 = vpop.permute.xlu0 %1355
    %1357 = vrot.lane.b32.xlu0 %v1334, 32
    %v1358 = vpop.permute.xlu0 %1357
    %v1367 = vmul.f32 %v1207, %v1344
    %v1368 = vmul.f32 %v1208, %v1346
    %v1369 = vmul.f32 %v1209, %v1348
    %v1370 = vmul.f32 %v1210, %v1350
    %v1371 = vmul.f32 %v1211, %v1352
    %v1372 = vmul.f32 %v1212, %v1354
    %v1373 = vmul.f32 %v1213, %v1356
    %v1374 = vmul.f32 %v1214, %v1358
    %v1383 = vrot.slane %v1368, 7
    %v1384 = vsel %vm537, %v1383, %v1367
    %v1385 = vrot.slane %v1369, 6
    %v1386 = vsel %vm540, %v1385, %v1384
    %v1387 = vrot.slane %v1370, 5
    %v1388 = vsel %vm543, %v1387, %v1386
    %v1389 = vrot.slane %v1371, 4
    %v1390 = vsel %vm546, %v1389, %v1388
    %v1391 = vrot.slane %v1372, 3
    %v1392 = vsel %vm549, %v1391, %v1390
    %v1393 = vrot.slane %v1373, 2
    %v1394 = vrot.slane %v1374, 1
    %v1395 = vsel %vm531, %v1394, %v1393
    %1396 = vrot.lane.b32.xlu0 %v1392, 80
    %v1397 = vpop.permute.xlu0 %1396
    %1398 = vrot.lane.b32.xlu0 %v1395, 80
    %v1399 = vpop.permute.xlu0 %1398
    %v1403 = vrot.slane %v1070, 6
    %1404 = vrot.lane.b32.xlu0 %v1403, 96
    %v1405 = vpop.permute.xlu0 %1404
    %v1407 = vsel %vm256, %v1397, %v1405
    %v1408 = vsel %vm256, %v1399, %v1405
    %v1411 = vrot.slane %v1407, 2
    %v1412 = vrot.slane %v1408, 2
    %v1413 = vsel %vm127, %v1411, %v1412
    %v1414 = vsel %vm555, %v1413, 0
    %1416 = vmatprep.subr.mxu0 0.0
    %1417 = vmatpush1.msra.mxu0 %v238
    %1418 = vmatprep.subr.mxu0 0.0
    %1419 = vmatpush1.msra.mxu0 %v239
    %1420 = vmatprep.subr.mxu0 0.0
    %1421 = vmatpush1.msra.mxu0 %v240
    %1422 = vmatprep.subr.mxu0 0.0
    %1423 = vmatpush1.msra.mxu0 %v241
    %1424 = vmatprep.subr.mxu0 0.0
    %1425 = vmatpush1.msra.mxu0 0.0
    %1426 = vmatprep.subr.mxu0 0.0
    %1427 = vmatpush1.msra.mxu0 0.0
    %1428 = vmatprep.subr.mxu0 0.0
    %1429 = vmatpush1.msra.mxu0 0.0
    %1430 = vmatprep.subr.mxu0 0.0
    %1431 = vmatpush1.msra.mxu0 0.0
    %1432 = vmatprep.subr.mxu0 0.0
    %1433 = vmatpush1.msra.mxu0 0.0
    %1434 = vmatprep.subr.mxu0 0.0
    %1435 = vmatpush1.msra.mxu0 0.0
    %1436 = vmatprep.subr.mxu0 0.0
    %1437 = vmatpush1.msra.mxu0 0.0
    %1438 = vmatprep.subr.mxu0 0.0
    %1439 = vmatpush1.msra.mxu0 0.0
    %1440 = vmatprep.subr.mxu0 0.0
    %1441 = vmatpush1.msra.mxu0 0.0
    %1442 = vmatprep.subr.mxu0 0.0
    %1443 = vmatpush1.msra.mxu0 0.0
    %1444 = vmatprep.subr.mxu0 0.0
    %1445 = vmatpush1.msra.mxu0 0.0
    %1446 = vmatprep.subr.mxu0 0.0
    %1447 = vmatpush1.msra.mxu0 0.0
    %1448 = vmatprep.subr.mxu0 0.0
    %1449 = vmatpush1.msra.mxu0 0.0
    %1450 = vmatprep.subr.mxu0 0.0
    %1451 = vmatpush1.msra.mxu0 0.0
    %1452 = vmatprep.subr.mxu0 0.0
    %1453 = vmatpush1.msra.mxu0 0.0
    %1454 = vmatprep.subr.mxu0 0.0
    %1455 = vmatpush1.msra.mxu0 0.0
    %1456 = vmatprep.subr.mxu0 0.0
    %1457 = vmatpush1.msra.mxu0 0.0
    %1458 = vmatprep.subr.mxu0 0.0
    %1459 = vmatpush1.msra.mxu0 0.0
    %1460 = vmatprep.subr.mxu0 0.0
    %1461 = vmatpush1.msra.mxu0 0.0
    %1462 = vmatprep.subr.mxu0 0.0
    %1463 = vmatpush1.msra.mxu0 0.0
    %1464 = vmatprep.subr.mxu0 0.0
    %1465 = vmatpush1.msra.mxu0 0.0
    %1466 = vmatprep.subr.mxu0 0.0
    %1467 = vmatpush1.msra.mxu0 0.0
    %1468 = vmatprep.subr.mxu0 0.0
    %1469 = vmatpush1.msra.mxu0 0.0
    %1470 = vmatprep.subr.mxu0 0.0
    %1471 = vmatpush1.msra.mxu0 0.0
    %1472 = vmatprep.subr.mxu0 0.0
    %1473 = vmatpush1.msra.mxu0 0.0
    %1474 = vmatprep.subr.mxu0 0.0
    %1475 = vmatpush1.msra.mxu0 0.0
    %1476 = vmatprep.subr.mxu0 0.0
    %1477 = vmatpush1.msra.mxu0 0.0
    %1478 = vmatprep.subr.mxu0 0.0
    %1479 = vmatpush1.msra.mxu0 0.0
    %1480 = vmatprep.mubr.f32.mxu0 0.0
    %1481 = vmatmul.mubr.f32.gmra.mrb[0].mxu0 %v1414
    %v1482 = vpop.f32.mrb[0].mxu0
    %v1483 = vadd.f32 %v247, %v1482
    %v1484 = vpop.f32.mrb[0].mxu0
    %1485 = vdwg.mxu0
    %v1486 = vmul.f32 %v1483, %v254
    %v1487 = vtanh.pop %v1486
    %v1488 = vmul.f32 %v1487, %v254
    %v1489 = vadd.f32 %v1488, %v255
    %v1490 = vmul.f32 %v1489, %v1064
    %1492 = vrot.lane.b32.xlu0 %v1489, 96
    %v1493 = vpop.permute.xlu0 %1492
    %v1495 = vmul.f32 %v1489, %v1493
    %1497 = vrot.lane.b32.xlu0 %v1495, 16
    %v1498 = vpop.permute.xlu0 %1497
    %v1500 = vadd.f32 %v1490, %v1498
    %v1501 = vtanh.pop %v1500
    %1503 = vrot.lane.b32.xlu0 %v1501, 32
    %v1504 = vpop.permute.xlu0 %1503
    %v1506 = vmul.f32 %v1489, %v1504
    %v1507 = vrot.slane %v1367, 2
    %v1508 = vrot.slane %v1368, 1
    %v1509 = vsel %vm531, %v1508, %v1507
    %v1510 = vsel %vm534, %v1369, %v1509
    %v1511 = vrot.slane %v1370, 7
    %v1512 = vsel %vm537, %v1511, %v1510
    %v1513 = vrot.slane %v1371, 6
    %v1514 = vsel %vm540, %v1513, %v1512
    %v1515 = vrot.slane %v1372, 5
    %v1516 = vsel %vm543, %v1515, %v1514
    %v1517 = vrot.slane %v1373, 4
    %v1518 = vsel %vm546, %v1517, %v1516
    %v1519 = vrot.slane %v1374, 3
    %v1520 = vsel %vm549, %v1519, %v1518
    %1521 = vrot.lane.b32.xlu0 %v1520, 80
    %v1522 = vpop.permute.xlu0 %1521
    %v1523 = vsel %vm256, %v1522, 0
    %1525 = vmatprep.subr.mxu0 0.0
    %1526 = vmatpush1.msra.mxu0 %v236
    %1527 = vmatprep.subr.mxu0 0.0
    %1528 = vmatpush1.msra.mxu0 %v237
    %1529 = vmatprep.subr.mxu0 0.0
    %1530 = vmatpush1.msra.mxu0 0.0
    %1531 = vmatprep.subr.mxu0 0.0
    %1532 = vmatpush1.msra.mxu0 0.0
    %1533 = vmatprep.subr.mxu0 0.0
    %1534 = vmatpush1.msra.mxu0 0.0
    %1535 = vmatprep.subr.mxu0 0.0
    %1536 = vmatpush1.msra.mxu0 0.0
    %1537 = vmatprep.subr.mxu0 0.0
    %1538 = vmatpush1.msra.mxu0 0.0
    %1539 = vmatprep.subr.mxu0 0.0
    %1540 = vmatpush1.msra.mxu0 0.0
    %1541 = vmatprep.subr.mxu0 0.0
    %1542 = vmatpush1.msra.mxu0 0.0
    %1543 = vmatprep.subr.mxu0 0.0
    %1544 = vmatpush1.msra.mxu0 0.0
    %1545 = vmatprep.subr.mxu0 0.0
    %1546 = vmatpush1.msra.mxu0 0.0
    %1547 = vmatprep.subr.mxu0 0.0
    %1548 = vmatpush1.msra.mxu0 0.0
    %1549 = vmatprep.subr.mxu0 0.0
    %1550 = vmatpush1.msra.mxu0 0.0
    %1551 = vmatprep.subr.mxu0 0.0
    %1552 = vmatpush1.msra.mxu0 0.0
    %1553 = vmatprep.subr.mxu0 0.0
    %1554 = vmatpush1.msra.mxu0 0.0
    %1555 = vmatprep.subr.mxu0 0.0
    %1556 = vmatpush1.msra.mxu0 0.0
    %1557 = vmatprep.subr.mxu0 0.0
    %1558 = vmatpush1.msra.mxu0 0.0
    %1559 = vmatprep.subr.mxu0 0.0
    %1560 = vmatpush1.msra.mxu0 0.0
    %1561 = vmatprep.subr.mxu0 0.0
    %1562 = vmatpush1.msra.mxu0 0.0
    %1563 = vmatprep.subr.mxu0 0.0
    %1564 = vmatpush1.msra.mxu0 0.0
    %1565 = vmatprep.subr.mxu0 0.0
    %1566 = vmatpush1.msra.mxu0 0.0
    %1567 = vmatprep.subr.mxu0 0.0
    %1568 = vmatpush1.msra.mxu0 0.0
    %1569 = vmatprep.subr.mxu0 0.0
    %1570 = vmatpush1.msra.mxu0 0.0
    %1571 = vmatprep.subr.mxu0 0.0
    %1572 = vmatpush1.msra.mxu0 0.0
    %1573 = vmatprep.subr.mxu0 0.0
    %1574 = vmatpush1.msra.mxu0 0.0
    %1575 = vmatprep.subr.mxu0 0.0
    %1576 = vmatpush1.msra.mxu0 0.0
    %1577 = vmatprep.subr.mxu0 0.0
    %1578 = vmatpush1.msra.mxu0 0.0
    %1579 = vmatprep.subr.mxu0 0.0
    %1580 = vmatpush1.msra.mxu0 0.0
    %1581 = vmatprep.subr.mxu0 0.0
    %1582 = vmatpush1.msra.mxu0 0.0
    %1583 = vmatprep.subr.mxu0 0.0
    %1584 = vmatpush1.msra.mxu0 0.0
    %1585 = vmatprep.subr.mxu0 0.0
    %1586 = vmatpush1.msra.mxu0 0.0
    %1587 = vmatprep.subr.mxu0 0.0
    %1588 = vmatpush1.msra.mxu0 0.0
    %1589 = vmatprep.mubr.f32.mxu0 0.0
    %1590 = vmatmul.mubr.f32.gmra.mrb[0].mxu0 %v1523
    %v1591 = vpop.f32.mrb[0].mxu0
    %v1592 = vadd.f32 0.0, %v1591
    %v1593 = vpop.f32.mrb[0].mxu0
    %1594 = vdwg.mxu0
    %v1596 = vrot.slane %v1592, 5
    %v1597 = vrot.slane %v1592, 6
    %v1598 = vrot.slane %v1592, 7
    %v1599 = vrot.slane %v1592, 1
    %v1600 = vrot.slane %v1592, 2
    %v1601 = vrot.slane %v1592, 3
    %v1602 = vrot.slane %v1592, 4
    %v1611 = vadd.f32 %v198, %v1596
    %v1612 = vadd.f32 %v203, %v1597
    %v1613 = vadd.f32 %v208, %v1598
    %v1614 = vadd.f32 %v213, %v1592
    %v1615 = vadd.f32 %v218, %v1599
    %v1616 = vadd.f32 %v223, %v1600
    %v1617 = vadd.f32 %v228, %v1601
    %v1618 = vadd.f32 %v233, %v1602
    %v1619 = vmul.f32 %v1611, %v254
    %v1620 = vmul.f32 %v1612, %v254
    %v1621 = vmul.f32 %v1613, %v254
    %v1622 = vmul.f32 %v1614, %v254
    %v1623 = vmul.f32 %v1615, %v254
    %v1624 = vmul.f32 %v1616, %v254
    %v1625 = vmul.f32 %v1617, %v254
    %v1626 = vmul.f32 %v1618, %v254
    %v1627 = vtanh.pop %v1619
    %v1628 = vtanh.pop %v1620
    %v1629 = vtanh.pop %v1621
    %v1630 = vtanh.pop %v1622
    %v1631 = vtanh.pop %v1623
    %v1632 = vtanh.pop %v1624
    %v1633 = vtanh.pop %v1625
    %v1634 = vtanh.pop %v1626
    %v1635 = vmul.f32 %v1627, %v254
    %v1636 = vmul.f32 %v1628, %v254
    %v1637 = vmul.f32 %v1629, %v254
    %v1638 = vmul.f32 %v1630, %v254
    %v1639 = vmul.f32 %v1631, %v254
    %v1640 = vmul.f32 %v1632, %v254
    %v1641 = vmul.f32 %v1633, %v254
    %v1642 = vmul.f32 %v1634, %v254
    %v1643 = vadd.f32 %v1635, %v255
    %v1644 = vadd.f32 %v1636, %v255
    %v1645 = vadd.f32 %v1637, %v255
    %v1646 = vadd.f32 %v1638, %v255
    %v1647 = vadd.f32 %v1639, %v255
    %v1648 = vadd.f32 %v1640, %v255
    %v1649 = vadd.f32 %v1641, %v255
    %v1650 = vadd.f32 %v1642, %v255
    %v1659 = vrot.slane %v1319, 7
    %v1660 = vrot.slane %v1320, 7
    %v1661 = vrot.slane %v1321, 7
    %v1662 = vrot.slane %v1322, 7
    %v1663 = vrot.slane %v1323, 7
    %v1664 = vrot.slane %v1324, 7
    %v1665 = vrot.slane %v1325, 7
    %v1666 = vrot.slane %v1326, 7
    %v1675 = vmul.f32 %v1643, %v1659
    %v1676 = vmul.f32 %v1644, %v1660
    %v1677 = vmul.f32 %v1645, %v1661
    %v1678 = vmul.f32 %v1646, %v1662
    %v1679 = vmul.f32 %v1647, %v1663
    %v1680 = vmul.f32 %v1648, %v1664
    %v1681 = vmul.f32 %v1649, %v1665
    %v1682 = vmul.f32 %v1650, %v1666
    %1691 = vrot.lane.b32.xlu0 %v1643, 96
    %v1692 = vpop.permute.xlu0 %1691
    %1693 = vrot.lane.b32.xlu0 %v1644, 96
    %v1694 = vpop.permute.xlu0 %1693
    %1695 = vrot.lane.b32.xlu0 %v1645, 96
    %v1696 = vpop.permute.xlu0 %1695
    %1697 = vrot.lane.b32.xlu0 %v1646, 96
    %v1698 = vpop.permute.xlu0 %1697
    %1699 = vrot.lane.b32.xlu0 %v1647, 96
    %v1700 = vpop.permute.xlu0 %1699
    %1701 = vrot.lane.b32.xlu0 %v1648, 96
    %v1702 = vpop.permute.xlu0 %1701
    %1703 = vrot.lane.b32.xlu0 %v1649, 96
    %v1704 = vpop.permute.xlu0 %1703
    %1705 = vrot.lane.b32.xlu0 %v1650, 96
    %v1706 = vpop.permute.xlu0 %1705
    %v1715 = vmul.f32 %v1643, %v1692
    %v1716 = vmul.f32 %v1644, %v1694
    %v1717 = vmul.f32 %v1645, %v1696
    %v1718 = vmul.f32 %v1646, %v1698
    %v1719 = vmul.f32 %v1647, %v1700
    %v1720 = vmul.f32 %v1648, %v1702
    %v1721 = vmul.f32 %v1649, %v1704
    %v1722 = vmul.f32 %v1650, %v1706
    %1731 = vrot.lane.b32.xlu0 %v1715, 16
    %v1732 = vpop.permute.xlu0 %1731
    %1733 = vrot.lane.b32.xlu0 %v1716, 16
    %v1734 = vpop.permute.xlu0 %1733
    %1735 = vrot.lane.b32.xlu0 %v1717, 16
    %v1736 = vpop.permute.xlu0 %1735
    %1737 = vrot.lane.b32.xlu0 %v1718, 16
    %v1738 = vpop.permute.xlu0 %1737
    %1739 = vrot.lane.b32.xlu0 %v1719, 16
    %v1740 = vpop.permute.xlu0 %1739
    %1741 = vrot.lane.b32.xlu0 %v1720, 16
    %v1742 = vpop.permute.xlu0 %1741
    %1743 = vrot.lane.b32.xlu0 %v1721, 16
    %v1744 = vpop.permute.xlu0 %1743
    %1745 = vrot.lane.b32.xlu0 %v1722, 16
    %v1746 = vpop.permute.xlu0 %1745
    %v1755 = vadd.f32 %v1675, %v1732
    %v1756 = vadd.f32 %v1676, %v1734
    %v1757 = vadd.f32 %v1677, %v1736
    %v1758 = vadd.f32 %v1678, %v1738
    %v1759 = vadd.f32 %v1679, %v1740
    %v1760 = vadd.f32 %v1680, %v1742
    %v1761 = vadd.f32 %v1681, %v1744
    %v1762 = vadd.f32 %v1682, %v1746
    %v1763 = vtanh.pop %v1755
    %v1764 = vtanh.pop %v1756
    %v1765 = vtanh.pop %v1757
    %v1766 = vtanh.pop %v1758
    %v1767 = vtanh.pop %v1759
    %v1768 = vtanh.pop %v1760
    %v1769 = vtanh.pop %v1761
    %v1770 = vtanh.pop %v1762
    %1779 = vrot.lane.b32.xlu0 %v1763, 32
    %v1780 = vpop.permute.xlu0 %1779
    %1781 = vrot.lane.b32.xlu0 %v1764, 32
    %v1782 = vpop.permute.xlu0 %1781
    %1783 = vrot.lane.b32.xlu0 %v1765, 32
    %v1784 = vpop.permute.xlu0 %1783
    %1785 = vrot.lane.b32.xlu0 %v1766, 32
    %v1786 = vpop.permute.xlu0 %1785
    %1787 = vrot.lane.b32.xlu0 %v1767, 32
    %v1788 = vpop.permute.xlu0 %1787
    %1789 = vrot.lane.b32.xlu0 %v1768, 32
    %v1790 = vpop.permute.xlu0 %1789
    %1791 = vrot.lane.b32.xlu0 %v1769, 32
    %v1792 = vpop.permute.xlu0 %1791
    %1793 = vrot.lane.b32.xlu0 %v1770, 32
    %v1794 = vpop.permute.xlu0 %1793
    %v1803 = vmul.f32 %v1643, %v1780
    %v1804 = vmul.f32 %v1644, %v1782
    %v1805 = vmul.f32 %v1645, %v1784
    %v1806 = vmul.f32 %v1646, %v1786
    %v1807 = vmul.f32 %v1647, %v1788
    %v1808 = vmul.f32 %v1648, %v1790
    %v1809 = vmul.f32 %v1649, %v1792
    %v1810 = vmul.f32 %v1650, %v1794
    %v1819 = vrot.slane %v1804, 7
    %v1820 = vsel %vm540, %v1819, %v1803
    %v1821 = vrot.slane %v1805, 6
    %v1822 = vsel %vm543, %v1821, %v1820
    %v1823 = vrot.slane %v1806, 5
    %v1824 = vsel %vm546, %v1823, %v1822
    %v1825 = vrot.slane %v1807, 4
    %v1826 = vsel %vm549, %v1825, %v1824
    %v1827 = vrot.slane %v1808, 3
    %v1828 = vrot.slane %v1809, 2
    %v1829 = vsel %vm531, %v1828, %v1827
    %v1830 = vrot.slane %v1810, 1
    %v1831 = vsel %vm534, %v1830, %v1829
    %1832 = vrot.lane.b32.xlu0 %v1826, 80
    %v1833 = vpop.permute.xlu0 %1832
    %1834 = vrot.lane.b32.xlu0 %v1831, 80
    %v1835 = vpop.permute.xlu0 %1834
    %v1839 = vrot.slane %v1506, 5
    %1840 = vrot.lane.b32.xlu0 %v1839, 96
    %v1841 = vpop.permute.xlu0 %1840
    %v1843 = vsel %vm256, %v1833, %v1841
    %v1844 = vsel %vm256, %v1835, %v1841
    %vm1847 = vcmask 1044480
    %v1848 = vrot.slane %v1843, 3
    %v1849 = vrot.slane %v1844, 3
    %v1850 = vsel %vm1847, %v1848, %v1849
    %v1851 = vsel %vm555, %v1850, 0
    %1853 = vmatprep.subr.mxu0 0.0
    %1854 = vmatpush1.msra.mxu0 %v238
    %1855 = vmatprep.subr.mxu0 0.0
    %1856 = vmatpush1.msra.mxu0 %v239
    %1857 = vmatprep.subr.mxu0 0.0
    %1858 = vmatpush1.msra.mxu0 %v240
    %1859 = vmatprep.subr.mxu0 0.0
    %1860 = vmatpush1.msra.mxu0 %v241
    %1861 = vmatprep.subr.mxu0 0.0
    %1862 = vmatpush1.msra.mxu0 0.0
    %1863 = vmatprep.subr.mxu0 0.0
    %1864 = vmatpush1.msra.mxu0 0.0
    %1865 = vmatprep.subr.mxu0 0.0
    %1866 = vmatpush1.msra.mxu0 0.0
    %1867 = vmatprep.subr.mxu0 0.0
    %1868 = vmatpush1.msra.mxu0 0.0
    %1869 = vmatprep.subr.mxu0 0.0
    %1870 = vmatpush1.msra.mxu0 0.0
    %1871 = vmatprep.subr.mxu0 0.0
    %1872 = vmatpush1.msra.mxu0 0.0
    %1873 = vmatprep.subr.mxu0 0.0
    %1874 = vmatpush1.msra.mxu0 0.0
    %1875 = vmatprep.subr.mxu0 0.0
    %1876 = vmatpush1.msra.mxu0 0.0
    %1877 = vmatprep.subr.mxu0 0.0
    %1878 = vmatpush1.msra.mxu0 0.0
    %1879 = vmatprep.subr.mxu0 0.0
    %1880 = vmatpush1.msra.mxu0 0.0
    %1881 = vmatprep.subr.mxu0 0.0
    %1882 = vmatpush1.msra.mxu0 0.0
    %1883 = vmatprep.subr.mxu0 0.0
    %1884 = vmatpush1.msra.mxu0 0.0
    %1885 = vmatprep.subr.mxu0 0.0
    %1886 = vmatpush1.msra.mxu0 0.0
    %1887 = vmatprep.subr.mxu0 0.0
    %1888 = vmatpush1.msra.mxu0 0.0
    %1889 = vmatprep.subr.mxu0 0.0
    %1890 = vmatpush1.msra.mxu0 0.0
    %1891 = vmatprep.subr.mxu0 0.0
    %1892 = vmatpush1.msra.mxu0 0.0
    %1893 = vmatprep.subr.mxu0 0.0
    %1894 = vmatpush1.msra.mxu0 0.0
    %1895 = vmatprep.subr.mxu0 0.0
    %1896 = vmatpush1.msra.mxu0 0.0
    %1897 = vmatprep.subr.mxu0 0.0
    %1898 = vmatpush1.msra.mxu0 0.0
    %1899 = vmatprep.subr.mxu0 0.0
    %1900 = vmatpush1.msra.mxu0 0.0
    %1901 = vmatprep.subr.mxu0 0.0
    %1902 = vmatpush1.msra.mxu0 0.0
    %1903 = vmatprep.subr.mxu0 0.0
    %1904 = vmatpush1.msra.mxu0 0.0
    %1905 = vmatprep.subr.mxu0 0.0
    %1906 = vmatpush1.msra.mxu0 0.0
    %1907 = vmatprep.subr.mxu0 0.0
    %1908 = vmatpush1.msra.mxu0 0.0
    %1909 = vmatprep.subr.mxu0 0.0
    %1910 = vmatpush1.msra.mxu0 0.0
    %1911 = vmatprep.subr.mxu0 0.0
    %1912 = vmatpush1.msra.mxu0 0.0
    %1913 = vmatprep.subr.mxu0 0.0
    %1914 = vmatpush1.msra.mxu0 0.0
    %1915 = vmatprep.subr.mxu0 0.0
    %1916 = vmatpush1.msra.mxu0 0.0
    %1917 = vmatprep.mubr.f32.mxu0 0.0
    %1918 = vmatmul.mubr.f32.gmra.mrb[0].mxu0 %v1851
    %v1919 = vpop.f32.mrb[0].mxu0
    %v1920 = vadd.f32 %v247, %v1919
    %v1921 = vpop.f32.mrb[0].mxu0
    %1922 = vdwg.mxu0
    %v1923 = vmul.f32 %v1920, %v254
    %v1924 = vtanh.pop %v1923
    %v1925 = vmul.f32 %v1924, %v254
    %v1926 = vadd.f32 %v1925, %v255
    %v1927 = vmul.f32 %v1926, %v1500
    %1929 = vrot.lane.b32.xlu0 %v1926, 96
    %v1930 = vpop.permute.xlu0 %1929
    %v1932 = vmul.f32 %v1926, %v1930
    %1934 = vrot.lane.b32.xlu0 %v1932, 16
    %v1935 = vpop.permute.xlu0 %1934
    %v1937 = vadd.f32 %v1927, %v1935
    %v1938 = vtanh.pop %v1937
    %1940 = vrot.lane.b32.xlu0 %v1938, 32
    %v1941 = vpop.permute.xlu0 %1940
    %v1943 = vmul.f32 %v1926, %v1941
    %v1944 = vrot.slane %v1803, 3
    %v1945 = vrot.slane %v1804, 2
    %v1946 = vsel %vm531, %v1945, %v1944
    %v1947 = vrot.slane %v1805, 1
    %v1948 = vsel %vm534, %v1947, %v1946
    %v1949 = vsel %vm537, %v1806, %v1948
    %v1950 = vrot.slane %v1807, 7
    %v1951 = vsel %vm540, %v1950, %v1949
    %v1952 = vrot.slane %v1808, 6
    %v1953 = vsel %vm543, %v1952, %v1951
    %v1954 = vrot.slane %v1809, 5
    %v1955 = vsel %vm546, %v1954, %v1953
    %v1956 = vrot.slane %v1810, 4
    %v1957 = vsel %vm549, %v1956, %v1955
    %1958 = vrot.lane.b32.xlu0 %v1957, 80
    %v1959 = vpop.permute.xlu0 %1958
    %v1960 = vsel %vm256, %v1959, 0
    %1962 = vmatprep.subr.mxu0 0.0
    %1963 = vmatpush1.msra.mxu0 %v236
    %1964 = vmatprep.subr.mxu0 0.0
    %1965 = vmatpush1.msra.mxu0 %v237
    %1966 = vmatprep.subr.mxu0 0.0
    %1967 = vmatpush1.msra.mxu0 0.0
    %1968 = vmatprep.subr.mxu0 0.0
    %1969 = vmatpush1.msra.mxu0 0.0
    %1970 = vmatprep.subr.mxu0 0.0
    %1971 = vmatpush1.msra.mxu0 0.0
    %1972 = vmatprep.subr.mxu0 0.0
    %1973 = vmatpush1.msra.mxu0 0.0
    %1974 = vmatprep.subr.mxu0 0.0
    %1975 = vmatpush1.msra.mxu0 0.0
    %1976 = vmatprep.subr.mxu0 0.0
    %1977 = vmatpush1.msra.mxu0 0.0
    %1978 = vmatprep.subr.mxu0 0.0
    %1979 = vmatpush1.msra.mxu0 0.0
    %1980 = vmatprep.subr.mxu0 0.0
    %1981 = vmatpush1.msra.mxu0 0.0
    %1982 = vmatprep.subr.mxu0 0.0
    %1983 = vmatpush1.msra.mxu0 0.0
    %1984 = vmatprep.subr.mxu0 0.0
    %1985 = vmatpush1.msra.mxu0 0.0
    %1986 = vmatprep.subr.mxu0 0.0
    %1987 = vmatpush1.msra.mxu0 0.0
    %1988 = vmatprep.subr.mxu0 0.0
    %1989 = vmatpush1.msra.mxu0 0.0
    %1990 = vmatprep.subr.mxu0 0.0
    %1991 = vmatpush1.msra.mxu0 0.0
    %1992 = vmatprep.subr.mxu0 0.0
    %1993 = vmatpush1.msra.mxu0 0.0
    %1994 = vmatprep.subr.mxu0 0.0
    %1995 = vmatpush1.msra.mxu0 0.0
    %1996 = vmatprep.subr.mxu0 0.0
    %1997 = vmatpush1.msra.mxu0 0.0
    %1998 = vmatprep.subr.mxu0 0.0
    %1999 = vmatpush1.msra.mxu0 0.0
    %2000 = vmatprep.subr.mxu0 0.0
    %2001 = vmatpush1.msra.mxu0 0.0
    %2002 = vmatprep.subr.mxu0 0.0
    %2003 = vmatpush1.msra.mxu0 0.0
    %2004 = vmatprep.subr.mxu0 0.0
    %2005 = vmatpush1.msra.mxu0 0.0
    %2006 = vmatprep.subr.mxu0 0.0
    %2007 = vmatpush1.msra.mxu0 0.0
    %2008 = vmatprep.subr.mxu0 0.0
    %2009 = vmatpush1.msra.mxu0 0.0
    %2010 = vmatprep.subr.mxu0 0.0
    %2011 = vmatpush1.msra.mxu0 0.0
    %2012 = vmatprep.subr.mxu0 0.0
    %2013 = vmatpush1.msra.mxu0 0.0
    %2014 = vmatprep.subr.mxu0 0.0
    %2015 = vmatpush1.msra.mxu0 0.0
    %2016 = vmatprep.subr.mxu0 0.0
    %2017 = vmatpush1.msra.mxu0 0.0
    %2018 = vmatprep.subr.mxu0 0.0
    %2019 = vmatpush1.msra.mxu0 0.0
    %2020 = vmatprep.subr.mxu0 0.0
    %2021 = vmatpush1.msra.mxu0 0.0
    %2022 = vmatprep.subr.mxu0 0.0
    %2023 = vmatpush1.msra.mxu0 0.0
    %2024 = vmatprep.subr.mxu0 0.0
    %2025 = vmatpush1.msra.mxu0 0.0
    %2026 = vmatprep.mubr.f32.mxu0 0.0
    %2027 = vmatmul.mubr.f32.gmra.mrb[0].mxu0 %v1960
    %v2028 = vpop.f32.mrb[0].mxu0
    %v2029 = vadd.f32 0.0, %v2028
    %v2030 = vpop.f32.mrb[0].mxu0
    %2031 = vdwg.mxu0
    %v2033 = vrot.slane %v2029, 4
    %v2034 = vrot.slane %v2029, 5
    %v2035 = vrot.slane %v2029, 6
    %v2036 = vrot.slane %v2029, 7
    %v2037 = vrot.slane %v2029, 1
    %v2038 = vrot.slane %v2029, 2
    %v2039 = vrot.slane %v2029, 3
    %v2048 = vadd.f32 %v198, %v2033
    %v2049 = vadd.f32 %v203, %v2034
    %v2050 = vadd.f32 %v208, %v2035
    %v2051 = vadd.f32 %v213, %v2036
    %v2052 = vadd.f32 %v218, %v2029
    %v2053 = vadd.f32 %v223, %v2037
    %v2054 = vadd.f32 %v228, %v2038
    %v2055 = vadd.f32 %v233, %v2039
    %v2056 = vmul.f32 %v2048, %v254
    %v2057 = vmul.f32 %v2049, %v254
    %v2058 = vmul.f32 %v2050, %v254
    %v2059 = vmul.f32 %v2051, %v254
    %v2060 = vmul.f32 %v2052, %v254
    %v2061 = vmul.f32 %v2053, %v254
    %v2062 = vmul.f32 %v2054, %v254
    %v2063 = vmul.f32 %v2055, %v254
    %v2064 = vtanh.pop %v2056
    %v2065 = vtanh.pop %v2057
    %v2066 = vtanh.pop %v2058
    %v2067 = vtanh.pop %v2059
    %v2068 = vtanh.pop %v2060
    %v2069 = vtanh.pop %v2061
    %v2070 = vtanh.pop %v2062
    %v2071 = vtanh.pop %v2063
    %v2072 = vmul.f32 %v2064, %v254
    %v2073 = vmul.f32 %v2065, %v254
    %v2074 = vmul.f32 %v2066, %v254
    %v2075 = vmul.f32 %v2067, %v254
    %v2076 = vmul.f32 %v2068, %v254
    %v2077 = vmul.f32 %v2069, %v254
    %v2078 = vmul.f32 %v2070, %v254
    %v2079 = vmul.f32 %v2071, %v254
    %v2080 = vadd.f32 %v2072, %v255
    %v2081 = vadd.f32 %v2073, %v255
    %v2082 = vadd.f32 %v2074, %v255
    %v2083 = vadd.f32 %v2075, %v255
    %v2084 = vadd.f32 %v2076, %v255
    %v2085 = vadd.f32 %v2077, %v255
    %v2086 = vadd.f32 %v2078, %v255
    %v2087 = vadd.f32 %v2079, %v255
    %v2096 = vrot.slane %v1755, 7
    %v2097 = vrot.slane %v1756, 7
    %v2098 = vrot.slane %v1757, 7
    %v2099 = vrot.slane %v1758, 7
    %v2100 = vrot.slane %v1759, 7
    %v2101 = vrot.slane %v1760, 7
    %v2102 = vrot.slane %v1761, 7
    %v2103 = vrot.slane %v1762, 7
    %v2112 = vmul.f32 %v2080, %v2096
    %v2113 = vmul.f32 %v2081, %v2097
    %v2114 = vmul.f32 %v2082, %v2098
    %v2115 = vmul.f32 %v2083, %v2099
    %v2116 = vmul.f32 %v2084, %v2100
    %v2117 = vmul.f32 %v2085, %v2101
    %v2118 = vmul.f32 %v2086, %v2102
    %v2119 = vmul.f32 %v2087, %v2103
    %2128 = vrot.lane.b32.xlu0 %v2080, 96
    %v2129 = vpop.permute.xlu0 %2128
    %2130 = vrot.lane.b32.xlu0 %v2081, 96
    %v2131 = vpop.permute.xlu0 %2130
    %2132 = vrot.lane.b32.xlu0 %v2082, 96
    %v2133 = vpop.permute.xlu0 %2132
    %2134 = vrot.lane.b32.xlu0 %v2083, 96
    %v2135 = vpop.permute.xlu0 %2134
    %2136 = vrot.lane.b32.xlu0 %v2084, 96
    %v2137 = vpop.permute.xlu0 %2136
    %2138 = vrot.lane.b32.xlu0 %v2085, 96
    %v2139 = vpop.permute.xlu0 %2138
    %2140 = vrot.lane.b32.xlu0 %v2086, 96
    %v2141 = vpop.permute.xlu0 %2140
    %2142 = vrot.lane.b32.xlu0 %v2087, 96
    %v2143 = vpop.permute.xlu0 %2142
    %v2152 = vmul.f32 %v2080, %v2129
    %v2153 = vmul.f32 %v2081, %v2131
    %v2154 = vmul.f32 %v2082, %v2133
    %v2155 = vmul.f32 %v2083, %v2135
    %v2156 = vmul.f32 %v2084, %v2137
    %v2157 = vmul.f32 %v2085, %v2139
    %v2158 = vmul.f32 %v2086, %v2141
    %v2159 = vmul.f32 %v2087, %v2143
    %2168 = vrot.lane.b32.xlu0 %v2152, 16
    %v2169 = vpop.permute.xlu0 %2168
    %2170 = vrot.lane.b32.xlu0 %v2153, 16
    %v2171 = vpop.permute.xlu0 %2170
    %2172 = vrot.lane.b32.xlu0 %v2154, 16
    %v2173 = vpop.permute.xlu0 %2172
    %2174 = vrot.lane.b32.xlu0 %v2155, 16
    %v2175 = vpop.permute.xlu0 %2174
    %2176 = vrot.lane.b32.xlu0 %v2156, 16
    %v2177 = vpop.permute.xlu0 %2176
    %2178 = vrot.lane.b32.xlu0 %v2157, 16
    %v2179 = vpop.permute.xlu0 %2178
    %2180 = vrot.lane.b32.xlu0 %v2158, 16
    %v2181 = vpop.permute.xlu0 %2180
    %2182 = vrot.lane.b32.xlu0 %v2159, 16
    %v2183 = vpop.permute.xlu0 %2182
    %v2192 = vadd.f32 %v2112, %v2169
    %v2193 = vadd.f32 %v2113, %v2171
    %v2194 = vadd.f32 %v2114, %v2173
    %v2195 = vadd.f32 %v2115, %v2175
    %v2196 = vadd.f32 %v2116, %v2177
    %v2197 = vadd.f32 %v2117, %v2179
    %v2198 = vadd.f32 %v2118, %v2181
    %v2199 = vadd.f32 %v2119, %v2183
    %v2200 = vtanh.pop %v2192
    %v2201 = vtanh.pop %v2193
    %v2202 = vtanh.pop %v2194
    %v2203 = vtanh.pop %v2195
    %v2204 = vtanh.pop %v2196
    %v2205 = vtanh.pop %v2197
    %v2206 = vtanh.pop %v2198
    %v2207 = vtanh.pop %v2199
    %2216 = vrot.lane.b32.xlu0 %v2200, 32
    %v2217 = vpop.permute.xlu0 %2216
    %2218 = vrot.lane.b32.xlu0 %v2201, 32
    %v2219 = vpop.permute.xlu0 %2218
    %2220 = vrot.lane.b32.xlu0 %v2202, 32
    %v2221 = vpop.permute.xlu0 %2220
    %2222 = vrot.lane.b32.xlu0 %v2203, 32
    %v2223 = vpop.permute.xlu0 %2222
    %2224 = vrot.lane.b32.xlu0 %v2204, 32
    %v2225 = vpop.permute.xlu0 %2224
    %2226 = vrot.lane.b32.xlu0 %v2205, 32
    %v2227 = vpop.permute.xlu0 %2226
    %2228 = vrot.lane.b32.xlu0 %v2206, 32
    %v2229 = vpop.permute.xlu0 %2228
    %2230 = vrot.lane.b32.xlu0 %v2207, 32
    %v2231 = vpop.permute.xlu0 %2230
    %v2240 = vmul.f32 %v2080, %v2217
    %v2241 = vmul.f32 %v2081, %v2219
    %v2242 = vmul.f32 %v2082, %v2221
    %v2243 = vmul.f32 %v2083, %v2223
    %v2244 = vmul.f32 %v2084, %v2225
    %v2245 = vmul.f32 %v2085, %v2227
    %v2246 = vmul.f32 %v2086, %v2229
    %v2247 = vmul.f32 %v2087, %v2231
    %v2256 = vrot.slane %v2241, 7
    %v2257 = vsel %vm543, %v2256, %v2240
    %v2258 = vrot.slane %v2242, 6
    %v2259 = vsel %vm546, %v2258, %v2257
    %v2260 = vrot.slane %v2243, 5
    %v2261 = vsel %vm549, %v2260, %v2259
    %v2262 = vrot.slane %v2244, 4
    %v2263 = vrot.slane %v2245, 3
    %v2264 = vsel %vm531, %v2263, %v2262
    %v2265 = vrot.slane %v2246, 2
    %v2266 = vsel %vm534, %v2265, %v2264
    %v2267 = vrot.slane %v2247, 1
    %v2268 = vsel %vm537, %v2267, %v2266
    %2269 = vrot.lane.b32.xlu0 %v2261, 80
    %v2270 = vpop.permute.xlu0 %2269
    %2271 = vrot.lane.b32.xlu0 %v2268, 80
    %v2272 = vpop.permute.xlu0 %2271
    %v2276 = vrot.slane %v1943, 4
    %2277 = vrot.lane.b32.xlu0 %v2276, 96
    %v2278 = vpop.permute.xlu0 %2277
    %v2280 = vsel %vm256, %v2270, %v2278
    %v2281 = vsel %vm256, %v2272, %v2278
    %vm2284 = vcmask 1043456
    %v2285 = vrot.slane %v2280, 4
    %v2286 = vrot.slane %v2281, 4
    %v2287 = vsel %vm2284, %v2285, %v2286
    %v2288 = vsel %vm555, %v2287, 0
    %2290 = vmatprep.subr.mxu0 0.0
    %2291 = vmatpush1.msra.mxu0 %v238
    %2292 = vmatprep.subr.mxu0 0.0
    %2293 = vmatpush1.msra.mxu0 %v239
    %2294 = vmatprep.subr.mxu0 0.0
    %2295 = vmatpush1.msra.mxu0 %v240
    %2296 = vmatprep.subr.mxu0 0.0
    %2297 = vmatpush1.msra.mxu0 %v241
    %2298 = vmatprep.subr.mxu0 0.0
    %2299 = vmatpush1.msra.mxu0 0.0
    %2300 = vmatprep.subr.mxu0 0.0
    %2301 = vmatpush1.msra.mxu0 0.0
    %2302 = vmatprep.subr.mxu0 0.0
    %2303 = vmatpush1.msra.mxu0 0.0
    %2304 = vmatprep.subr.mxu0 0.0
    %2305 = vmatpush1.msra.mxu0 0.0
    %2306 = vmatprep.subr.mxu0 0.0
    %2307 = vmatpush1.msra.mxu0 0.0
    %2308 = vmatprep.subr.mxu0 0.0
    %2309 = vmatpush1.msra.mxu0 0.0
    %2310 = vmatprep.subr.mxu0 0.0
    %2311 = vmatpush1.msra.mxu0 0.0
    %2312 = vmatprep.subr.mxu0 0.0
    %2313 = vmatpush1.msra.mxu0 0.0
    %2314 = vmatprep.subr.mxu0 0.0
    %2315 = vmatpush1.msra.mxu0 0.0
    %2316 = vmatprep.subr.mxu0 0.0
    %2317 = vmatpush1.msra.mxu0 0.0
    %2318 = vmatprep.subr.mxu0 0.0
    %2319 = vmatpush1.msra.mxu0 0.0
    %2320 = vmatprep.subr.mxu0 0.0
    %2321 = vmatpush1.msra.mxu0 0.0
    %2322 = vmatprep.subr.mxu0 0.0
    %2323 = vmatpush1.msra.mxu0 0.0
    %2324 = vmatprep.subr.mxu0 0.0
    %2325 = vmatpush1.msra.mxu0 0.0
    %2326 = vmatprep.subr.mxu0 0.0
    %2327 = vmatpush1.msra.mxu0 0.0
    %2328 = vmatprep.subr.mxu0 0.0
    %2329 = vmatpush1.msra.mxu0 0.0
    %2330 = vmatprep.subr.mxu0 0.0
    %2331 = vmatpush1.msra.mxu0 0.0
    %2332 = vmatprep.subr.mxu0 0.0
    %2333 = vmatpush1.msra.mxu0 0.0
    %2334 = vmatprep.subr.mxu0 0.0
    %2335 = vmatpush1.msra.mxu0 0.0
    %2336 = vmatprep.subr.mxu0 0.0
    %2337 = vmatpush1.msra.mxu0 0.0
    %2338 = vmatprep.subr.mxu0 0.0
    %2339 = vmatpush1.msra.mxu0 0.0
    %2340 = vmatprep.subr.mxu0 0.0
    %2341 = vmatpush1.msra.mxu0 0.0
    %2342 = vmatprep.subr.mxu0 0.0
    %2343 = vmatpush1.msra.mxu0 0.0
    %2344 = vmatprep.subr.mxu0 0.0
    %2345 = vmatpush1.msra.mxu0 0.0
    %2346 = vmatprep.subr.mxu0 0.0
    %2347 = vmatpush1.msra.mxu0 0.0
    %2348 = vmatprep.subr.mxu0 0.0
    %2349 = vmatpush1.msra.mxu0 0.0
    %2350 = vmatprep.subr.mxu0 0.0
    %2351 = vmatpush1.msra.mxu0 0.0
    %2352 = vmatprep.subr.mxu0 0.0
    %2353 = vmatpush1.msra.mxu0 0.0
    %2354 = vmatprep.mubr.f32.mxu0 0.0
    %2355 = vmatmul.mubr.f32.gmra.mrb[0].mxu0 %v2288
    %v2356 = vpop.f32.mrb[0].mxu0
    %v2357 = vadd.f32 %v247, %v2356
    %v2358 = vpop.f32.mrb[0].mxu0
    %2359 = vdwg.mxu0
    %v2360 = vmul.f32 %v2357, %v254
    %v2361 = vtanh.pop %v2360
    %v2362 = vmul.f32 %v2361, %v254
    %v2363 = vadd.f32 %v2362, %v255
    %v2364 = vmul.f32 %v2363, %v1937
    %2366 = vrot.lane.b32.xlu0 %v2363, 96
    %v2367 = vpop.permute.xlu0 %2366
    %v2369 = vmul.f32 %v2363, %v2367
    %2371 = vrot.lane.b32.xlu0 %v2369, 16
    %v2372 = vpop.permute.xlu0 %2371
    %v2374 = vadd.f32 %v2364, %v2372
    %v2375 = vtanh.pop %v2374
    %2377 = vrot.lane.b32.xlu0 %v2375, 32
    %v2378 = vpop.permute.xlu0 %2377
    %v2380 = vmul.f32 %v2363, %v2378
    %v2381 = vrot.slane %v2240, 4
    %v2382 = vrot.slane %v2241, 3
    %v2383 = vsel %vm531, %v2382, %v2381
    %v2384 = vrot.slane %v2242, 2
    %v2385 = vsel %vm534, %v2384, %v2383
    %v2386 = vrot.slane %v2243, 1
    %v2387 = vsel %vm537, %v2386, %v2385
    %v2388 = vsel %vm540, %v2244, %v2387
    %v2389 = vrot.slane %v2245, 7
    %v2390 = vsel %vm543, %v2389, %v2388
    %v2391 = vrot.slane %v2246, 6
    %v2392 = vsel %vm546, %v2391, %v2390
    %v2393 = vrot.slane %v2247, 5
    %v2394 = vsel %vm549, %v2393, %v2392
    %2395 = vrot.lane.b32.xlu0 %v2394, 80
    %v2396 = vpop.permute.xlu0 %2395
    %v2397 = vsel %vm256, %v2396, 0
    %2399 = vmatprep.subr.mxu0 0.0
    %2400 = vmatpush1.msra.mxu0 %v236
    %2401 = vmatprep.subr.mxu0 0.0
    %2402 = vmatpush1.msra.mxu0 %v237
    %2403 = vmatprep.subr.mxu0 0.0
    %2404 = vmatpush1.msra.mxu0 0.0
    %2405 = vmatprep.subr.mxu0 0.0
    %2406 = vmatpush1.msra.mxu0 0.0
    %2407 = vmatprep.subr.mxu0 0.0
    %2408 = vmatpush1.msra.mxu0 0.0
    %2409 = vmatprep.subr.mxu0 0.0
    %2410 = vmatpush1.msra.mxu0 0.0
    %2411 = vmatprep.subr.mxu0 0.0
    %2412 = vmatpush1.msra.mxu0 0.0
    %2413 = vmatprep.subr.mxu0 0.0
    %2414 = vmatpush1.msra.mxu0 0.0
    %2415 = vmatprep.subr.mxu0 0.0
    %2416 = vmatpush1.msra.mxu0 0.0
    %2417 = vmatprep.subr.mxu0 0.0
    %2418 = vmatpush1.msra.mxu0 0.0
    %2419 = vmatprep.subr.mxu0 0.0
    %2420 = vmatpush1.msra.mxu0 0.0
    %2421 = vmatprep.subr.mxu0 0.0
    %2422 = vmatpush1.msra.mxu0 0.0
    %2423 = vmatprep.subr.mxu0 0.0
    %2424 = vmatpush1.msra.mxu0 0.0
    %2425 = vmatprep.subr.mxu0 0.0
    %2426 = vmatpush1.msra.mxu0 0.0
    %2427 = vmatprep.subr.mxu0 0.0
    %2428 = vmatpush1.msra.mxu0 0.0
    %2429 = vmatprep.subr.mxu0 0.0
    %2430 = vmatpush1.msra.mxu0 0.0
    %2431 = vmatprep.subr.mxu0 0.0
    %2432 = vmatpush1.msra.mxu0 0.0
    %2433 = vmatprep.subr.mxu0 0.0
    %2434 = vmatpush1.msra.mxu0 0.0
    %2435 = vmatprep.subr.mxu0 0.0
    %2436 = vmatpush1.msra.mxu0 0.0
    %2437 = vmatprep.subr.mxu0 0.0
    %2438 = vmatpush1.msra.mxu0 0.0
    %2439 = vmatprep.subr.mxu0 0.0
    %2440 = vmatpush1.msra.mxu0 0.0
    %2441 = vmatprep.subr.mxu0 0.0
    %2442 = vmatpush1.msra.mxu0 0.0
    %2443 = vmatprep.subr.mxu0 0.0
    %2444 = vmatpush1.msra.mxu0 0.0
    %2445 = vmatprep.subr.mxu0 0.0
    %2446 = vmatpush1.msra.mxu0 0.0
    %2447 = vmatprep.subr.mxu0 0.0
    %2448 = vmatpush1.msra.mxu0 0.0
    %2449 = vmatprep.subr.mxu0 0.0
    %2450 = vmatpush1.msra.mxu0 0.0
    %2451 = vmatprep.subr.mxu0 0.0
    %2452 = vmatpush1.msra.mxu0 0.0
    %2453 = vmatprep.subr.mxu0 0.0
    %2454 = vmatpush1.msra.mxu0 0.0
    %2455 = vmatprep.subr.mxu0 0.0
    %2456 = vmatpush1.msra.mxu0 0.0
    %2457 = vmatprep.subr.mxu0 0.0
    %2458 = vmatpush1.msra.mxu0 0.0
    %2459 = vmatprep.subr.mxu0 0.0
    %2460 = vmatpush1.msra.mxu0 0.0
    %2461 = vmatprep.subr.mxu0 0.0
    %2462 = vmatpush1.msra.mxu0 0.0
    %2463 = vmatprep.mubr.f32.mxu0 0.0
    %2464 = vmatmul.mubr.f32.gmra.mrb[0].mxu0 %v2397
    %v2465 = vpop.f32.mrb[0].mxu0
    %v2466 = vadd.f32 0.0, %v2465
    %v2467 = vpop.f32.mrb[0].mxu0
    %2468 = vdwg.mxu0
    %v2470 = vrot.slane %v2466, 3
    %v2471 = vrot.slane %v2466, 4
    %v2472 = vrot.slane %v2466, 5
    %v2473 = vrot.slane %v2466, 6
    %v2474 = vrot.slane %v2466, 7
    %v2475 = vrot.slane %v2466, 1
    %v2476 = vrot.slane %v2466, 2
    %v2485 = vadd.f32 %v198, %v2470
    %v2486 = vadd.f32 %v203, %v2471
    %v2487 = vadd.f32 %v208, %v2472
    %v2488 = vadd.f32 %v213, %v2473
    %v2489 = vadd.f32 %v218, %v2474
    %v2490 = vadd.f32 %v223, %v2466
    %v2491 = vadd.f32 %v228, %v2475
    %v2492 = vadd.f32 %v233, %v2476
    %v2493 = vmul.f32 %v2485, %v254
    %v2494 = vmul.f32 %v2486, %v254
    %v2495 = vmul.f32 %v2487, %v254
    %v2496 = vmul.f32 %v2488, %v254
    %v2497 = vmul.f32 %v2489, %v254
    %v2498 = vmul.f32 %v2490, %v254
    %v2499 = vmul.f32 %v2491, %v254
    %v2500 = vmul.f32 %v2492, %v254
    %v2501 = vtanh.pop %v2493
    %v2502 = vtanh.pop %v2494
    %v2503 = vtanh.pop %v2495
    %v2504 = vtanh.pop %v2496
    %v2505 = vtanh.pop %v2497
    %v2506 = vtanh.pop %v2498
    %v2507 = vtanh.pop %v2499
    %v2508 = vtanh.pop %v2500
    %v2509 = vmul.f32 %v2501, %v254
    %v2510 = vmul.f32 %v2502, %v254
    %v2511 = vmul.f32 %v2503, %v254
    %v2512 = vmul.f32 %v2504, %v254
    %v2513 = vmul.f32 %v2505, %v254
    %v2514 = vmul.f32 %v2506, %v254
    %v2515 = vmul.f32 %v2507, %v254
    %v2516 = vmul.f32 %v2508, %v254
    %v2517 = vadd.f32 %v2509, %v255
    %v2518 = vadd.f32 %v2510, %v255
    %v2519 = vadd.f32 %v2511, %v255
    %v2520 = vadd.f32 %v2512, %v255
    %v2521 = vadd.f32 %v2513, %v255
    %v2522 = vadd.f32 %v2514, %v255
    %v2523 = vadd.f32 %v2515, %v255
    %v2524 = vadd.f32 %v2516, %v255
    %v2533 = vrot.slane %v2192, 7
    %v2534 = vrot.slane %v2193, 7
    %v2535 = vrot.slane %v2194, 7
    %v2536 = vrot.slane %v2195, 7
    %v2537 = vrot.slane %v2196, 7
    %v2538 = vrot.slane %v2197, 7
    %v2539 = vrot.slane %v2198, 7
    %v2540 = vrot.slane %v2199, 7
    %v2549 = vmul.f32 %v2517, %v2533
    %v2550 = vmul.f32 %v2518, %v2534
    %v2551 = vmul.f32 %v2519, %v2535
    %v2552 = vmul.f32 %v2520, %v2536
    %v2553 = vmul.f32 %v2521, %v2537
    %v2554 = vmul.f32 %v2522, %v2538
    %v2555 = vmul.f32 %v2523, %v2539
    %v2556 = vmul.f32 %v2524, %v2540
    %2565 = vrot.lane.b32.xlu0 %v2517, 96
    %v2566 = vpop.permute.xlu0 %2565
    %2567 = vrot.lane.b32.xlu0 %v2518, 96
    %v2568 = vpop.permute.xlu0 %2567
    %2569 = vrot.lane.b32.xlu0 %v2519, 96
    %v2570 = vpop.permute.xlu0 %2569
    %2571 = vrot.lane.b32.xlu0 %v2520, 96
    %v2572 = vpop.permute.xlu0 %2571
    %2573 = vrot.lane.b32.xlu0 %v2521, 96
    %v2574 = vpop.permute.xlu0 %2573
    %2575 = vrot.lane.b32.xlu0 %v2522, 96
    %v2576 = vpop.permute.xlu0 %2575
    %2577 = vrot.lane.b32.xlu0 %v2523, 96
    %v2578 = vpop.permute.xlu0 %2577
    %2579 = vrot.lane.b32.xlu0 %v2524, 96
    %v2580 = vpop.permute.xlu0 %2579
    %v2589 = vmul.f32 %v2517, %v2566
    %v2590 = vmul.f32 %v2518, %v2568
    %v2591 = vmul.f32 %v2519, %v2570
    %v2592 = vmul.f32 %v2520, %v2572
    %v2593 = vmul.f32 %v2521, %v2574
    %v2594 = vmul.f32 %v2522, %v2576
    %v2595 = vmul.f32 %v2523, %v2578
    %v2596 = vmul.f32 %v2524, %v2580
    %2605 = vrot.lane.b32.xlu0 %v2589, 16
    %v2606 = vpop.permute.xlu0 %2605
    %2607 = vrot.lane.b32.xlu0 %v2590, 16
    %v2608 = vpop.permute.xlu0 %2607
    %2609 = vrot.lane.b32.xlu0 %v2591, 16
    %v2610 = vpop.permute.xlu0 %2609
    %2611 = vrot.lane.b32.xlu0 %v2592, 16
    %v2612 = vpop.permute.xlu0 %2611
    %2613 = vrot.lane.b32.xlu0 %v2593, 16
    %v2614 = vpop.permute.xlu0 %2613
    %2615 = vrot.lane.b32.xlu0 %v2594, 16
    %v2616 = vpop.permute.xlu0 %2615
    %2617 = vrot.lane.b32.xlu0 %v2595, 16
    %v2618 = vpop.permute.xlu0 %2617
    %2619 = vrot.lane.b32.xlu0 %v2596, 16
    %v2620 = vpop.permute.xlu0 %2619
    %v2629 = vadd.f32 %v2549, %v2606
    %v2630 = vadd.f32 %v2550, %v2608
    %v2631 = vadd.f32 %v2551, %v2610
    %v2632 = vadd.f32 %v2552, %v2612
    %v2633 = vadd.f32 %v2553, %v2614
    %v2634 = vadd.f32 %v2554, %v2616
    %v2635 = vadd.f32 %v2555, %v2618
    %v2636 = vadd.f32 %v2556, %v2620
    %v2637 = vtanh.pop %v2629
    %v2638 = vtanh.pop %v2630
    %v2639 = vtanh.pop %v2631
    %v2640 = vtanh.pop %v2632
    %v2641 = vtanh.pop %v2633
    %v2642 = vtanh.pop %v2634
    %v2643 = vtanh.pop %v2635
    %v2644 = vtanh.pop %v2636
    %2653 = vrot.lane.b32.xlu0 %v2637, 32
    %v2654 = vpop.permute.xlu0 %2653
    %2655 = vrot.lane.b32.xlu0 %v2638, 32
    %v2656 = vpop.permute.xlu0 %2655
    %2657 = vrot.lane.b32.xlu0 %v2639, 32
    %v2658 = vpop.permute.xlu0 %2657
    %2659 = vrot.lane.b32.xlu0 %v2640, 32
    %v2660 = vpop.permute.xlu0 %2659
    %2661 = vrot.lane.b32.xlu0 %v2641, 32
    %v2662 = vpop.permute.xlu0 %2661
    %2663 = vrot.lane.b32.xlu0 %v2642, 32
    %v2664 = vpop.permute.xlu0 %2663
    %2665 = vrot.lane.b32.xlu0 %v2643, 32
    %v2666 = vpop.permute.xlu0 %2665
    %2667 = vrot.lane.b32.xlu0 %v2644, 32
    %v2668 = vpop.permute.xlu0 %2667
    %v2677 = vmul.f32 %v2517, %v2654
    %v2678 = vmul.f32 %v2518, %v2656
    %v2679 = vmul.f32 %v2519, %v2658
    %v2680 = vmul.f32 %v2520, %v2660
    %v2681 = vmul.f32 %v2521, %v2662
    %v2682 = vmul.f32 %v2522, %v2664
    %v2683 = vmul.f32 %v2523, %v2666
    %v2684 = vmul.f32 %v2524, %v2668
    %v2693 = vrot.slane %v2678, 7
    %v2694 = vsel %vm546, %v2693, %v2677
    %v2695 = vrot.slane %v2679, 6
    %v2696 = vsel %vm549, %v2695, %v2694
    %v2697 = vrot.slane %v2680, 5
    %v2698 = vrot.slane %v2681, 4
    %v2699 = vsel %vm531, %v2698, %v2697
    %v2700 = vrot.slane %v2682, 3
    %v2701 = vsel %vm534, %v2700, %v2699
    %v2702 = vrot.slane %v2683, 2
    %v2703 = vsel %vm537, %v2702, %v2701
    %v2704 = vrot.slane %v2684, 1
    %v2705 = vsel %vm540, %v2704, %v2703
    %2706 = vrot.lane.b32.xlu0 %v2696, 80
    %v2707 = vpop.permute.xlu0 %2706
    %2708 = vrot.lane.b32.xlu0 %v2705, 80
    %v2709 = vpop.permute.xlu0 %2708
    %v2713 = vrot.slane %v2380, 3
    %2714 = vrot.lane.b32.xlu0 %v2713, 96
    %v2715 = vpop.permute.xlu0 %2714
    %v2717 = vsel %vm256, %v2707, %v2715
    %v2718 = vsel %vm256, %v2709, %v2715
    %vm2721 = vcmask 1042432
    %v2722 = vrot.slane %v2717, 5
    %v2723 = vrot.slane %v2718, 5
    %v2724 = vsel %vm2721, %v2722, %v2723
    %v2725 = vsel %vm555, %v2724, 0
    %2727 = vmatprep.subr.mxu0 0.0
    %2728 = vmatpush1.msra.mxu0 %v238
    %2729 = vmatprep.subr.mxu0 0.0
    %2730 = vmatpush1.msra.mxu0 %v239
    %2731 = vmatprep.subr.mxu0 0.0
    %2732 = vmatpush1.msra.mxu0 %v240
    %2733 = vmatprep.subr.mxu0 0.0
    %2734 = vmatpush1.msra.mxu0 %v241
    %2735 = vmatprep.subr.mxu0 0.0
    %2736 = vmatpush1.msra.mxu0 0.0
    %2737 = vmatprep.subr.mxu0 0.0
    %2738 = vmatpush1.msra.mxu0 0.0
    %2739 = vmatprep.subr.mxu0 0.0
    %2740 = vmatpush1.msra.mxu0 0.0
    %2741 = vmatprep.subr.mxu0 0.0
    %2742 = vmatpush1.msra.mxu0 0.0
    %2743 = vmatprep.subr.mxu0 0.0
    %2744 = vmatpush1.msra.mxu0 0.0
    %2745 = vmatprep.subr.mxu0 0.0
    %2746 = vmatpush1.msra.mxu0 0.0
    %2747 = vmatprep.subr.mxu0 0.0
    %2748 = vmatpush1.msra.mxu0 0.0
    %2749 = vmatprep.subr.mxu0 0.0
    %2750 = vmatpush1.msra.mxu0 0.0
    %2751 = vmatprep.subr.mxu0 0.0
    %2752 = vmatpush1.msra.mxu0 0.0
    %2753 = vmatprep.subr.mxu0 0.0
    %2754 = vmatpush1.msra.mxu0 0.0
    %2755 = vmatprep.subr.mxu0 0.0
    %2756 = vmatpush1.msra.mxu0 0.0
    %2757 = vmatprep.subr.mxu0 0.0
    %2758 = vmatpush1.msra.mxu0 0.0
    %2759 = vmatprep.subr.mxu0 0.0
    %2760 = vmatpush1.msra.mxu0 0.0
    %2761 = vmatprep.subr.mxu0 0.0
    %2762 = vmatpush1.msra.mxu0 0.0
    %2763 = vmatprep.subr.mxu0 0.0
    %2764 = vmatpush1.msra.mxu0 0.0
    %2765 = vmatprep.subr.mxu0 0.0
    %2766 = vmatpush1.msra.mxu0 0.0
    %2767 = vmatprep.subr.mxu0 0.0
    %2768 = vmatpush1.msra.mxu0 0.0
    %2769 = vmatprep.subr.mxu0 0.0
    %2770 = vmatpush1.msra.mxu0 0.0
    %2771 = vmatprep.subr.mxu0 0.0
    %2772 = vmatpush1.msra.mxu0 0.0
    %2773 = vmatprep.subr.mxu0 0.0
    %2774 = vmatpush1.msra.mxu0 0.0
    %2775 = vmatprep.subr.mxu0 0.0
    %2776 = vmatpush1.msra.mxu0 0.0
    %2777 = vmatprep.subr.mxu0 0.0
    %2778 = vmatpush1.msra.mxu0 0.0
    %2779 = vmatprep.subr.mxu0 0.0
    %2780 = vmatpush1.msra.mxu0 0.0
    %2781 = vmatprep.subr.mxu0 0.0
    %2782 = vmatpush1.msra.mxu0 0.0
    %2783 = vmatprep.subr.mxu0 0.0
    %2784 = vmatpush1.msra.mxu0 0.0
    %2785 = vmatprep.subr.mxu0 0.0
    %2786 = vmatpush1.msra.mxu0 0.0
    %2787 = vmatprep.subr.mxu0 0.0
    %2788 = vmatpush1.msra.mxu0 0.0
    %2789 = vmatprep.subr.mxu0 0.0
    %2790 = vmatpush1.msra.mxu0 0.0
    %2791 = vmatprep.mubr.f32.mxu0 0.0
    %2792 = vmatmul.mubr.f32.gmra.mrb[0].mxu0 %v2725
    %v2793 = vpop.f32.mrb[0].mxu0
    %v2794 = vadd.f32 %v247, %v2793
    %v2795 = vpop.f32.mrb[0].mxu0
    %2796 = vdwg.mxu0
    %v2797 = vmul.f32 %v2794, %v254
    %v2798 = vtanh.pop %v2797
    %v2799 = vmul.f32 %v2798, %v254
    %v2800 = vadd.f32 %v2799, %v255
    %v2801 = vmul.f32 %v2800, %v2374
    %2803 = vrot.lane.b32.xlu0 %v2800, 96
    %v2804 = vpop.permute.xlu0 %2803
    %v2806 = vmul.f32 %v2800, %v2804
    %2808 = vrot.lane.b32.xlu0 %v2806, 16
    %v2809 = vpop.permute.xlu0 %2808
    %v2811 = vadd.f32 %v2801, %v2809
    %v2812 = vtanh.pop %v2811
    %2814 = vrot.lane.b32.xlu0 %v2812, 32
    %v2815 = vpop.permute.xlu0 %2814
    %v2817 = vmul.f32 %v2800, %v2815
    %v2818 = vrot.slane %v2677, 5
    %v2819 = vrot.slane %v2678, 4
    %v2820 = vsel %vm531, %v2819, %v2818
    %v2821 = vrot.slane %v2679, 3
    %v2822 = vsel %vm534, %v2821, %v2820
    %v2823 = vrot.slane %v2680, 2
    %v2824 = vsel %vm537, %v2823, %v2822
    %v2825 = vrot.slane %v2681, 1
    %v2826 = vsel %vm540, %v2825, %v2824
    %v2827 = vsel %vm543, %v2682, %v2826
    %v2828 = vrot.slane %v2683, 7
    %v2829 = vsel %vm546, %v2828, %v2827
    %v2830 = vrot.slane %v2684, 6
    %v2831 = vsel %vm549, %v2830, %v2829
    %2832 = vrot.lane.b32.xlu0 %v2831, 80
    %v2833 = vpop.permute.xlu0 %2832
    %v2834 = vsel %vm256, %v2833, 0
    %2836 = vmatprep.subr.mxu0 0.0
    %2837 = vmatpush1.msra.mxu0 %v236
    %2838 = vmatprep.subr.mxu0 0.0
    %2839 = vmatpush1.msra.mxu0 %v237
    %2840 = vmatprep.subr.mxu0 0.0
    %2841 = vmatpush1.msra.mxu0 0.0
    %2842 = vmatprep.subr.mxu0 0.0
    %2843 = vmatpush1.msra.mxu0 0.0
    %2844 = vmatprep.subr.mxu0 0.0
    %2845 = vmatpush1.msra.mxu0 0.0
    %2846 = vmatprep.subr.mxu0 0.0
    %2847 = vmatpush1.msra.mxu0 0.0
    %2848 = vmatprep.subr.mxu0 0.0
    %2849 = vmatpush1.msra.mxu0 0.0
    %2850 = vmatprep.subr.mxu0 0.0
    %2851 = vmatpush1.msra.mxu0 0.0
    %2852 = vmatprep.subr.mxu0 0.0
    %2853 = vmatpush1.msra.mxu0 0.0
    %2854 = vmatprep.subr.mxu0 0.0
    %2855 = vmatpush1.msra.mxu0 0.0
    %2856 = vmatprep.subr.mxu0 0.0
    %2857 = vmatpush1.msra.mxu0 0.0
    %2858 = vmatprep.subr.mxu0 0.0
    %2859 = vmatpush1.msra.mxu0 0.0
    %2860 = vmatprep.subr.mxu0 0.0
    %2861 = vmatpush1.msra.mxu0 0.0
    %2862 = vmatprep.subr.mxu0 0.0
    %2863 = vmatpush1.msra.mxu0 0.0
    %2864 = vmatprep.subr.mxu0 0.0
    %2865 = vmatpush1.msra.mxu0 0.0
    %2866 = vmatprep.subr.mxu0 0.0
    %2867 = vmatpush1.msra.mxu0 0.0
    %2868 = vmatprep.subr.mxu0 0.0
    %2869 = vmatpush1.msra.mxu0 0.0
    %2870 = vmatprep.subr.mxu0 0.0
    %2871 = vmatpush1.msra.mxu0 0.0
    %2872 = vmatprep.subr.mxu0 0.0
    %2873 = vmatpush1.msra.mxu0 0.0
    %2874 = vmatprep.subr.mxu0 0.0
    %2875 = vmatpush1.msra.mxu0 0.0
    %2876 = vmatprep.subr.mxu0 0.0
    %2877 = vmatpush1.msra.mxu0 0.0
    %2878 = vmatprep.subr.mxu0 0.0
    %2879 = vmatpush1.msra.mxu0 0.0
    %2880 = vmatprep.subr.mxu0 0.0
    %2881 = vmatpush1.msra.mxu0 0.0
    %2882 = vmatprep.subr.mxu0 0.0
    %2883 = vmatpush1.msra.mxu0 0.0
    %2884 = vmatprep.subr.mxu0 0.0
    %2885 = vmatpush1.msra.mxu0 0.0
    %2886 = vmatprep.subr.mxu0 0.0
    %2887 = vmatpush1.msra.mxu0 0.0
    %2888 = vmatprep.subr.mxu0 0.0
    %2889 = vmatpush1.msra.mxu0 0.0
    %2890 = vmatprep.subr.mxu0 0.0
    %2891 = vmatpush1.msra.mxu0 0.0
    %2892 = vmatprep.subr.mxu0 0.0
    %2893 = vmatpush1.msra.mxu0 0.0
    %2894 = vmatprep.subr.mxu0 0.0
    %2895 = vmatpush1.msra.mxu0 0.0
    %2896 = vmatprep.subr.mxu0 0.0
    %2897 = vmatpush1.msra.mxu0 0.0
    %2898 = vmatprep.subr.mxu0 0.0
    %2899 = vmatpush1.msra.mxu0 0.0
    %2900 = vmatprep.mubr.f32.mxu0 0.0
    %2901 = vmatmul.mubr.f32.gmra.mrb[0].mxu0 %v2834
    %v2902 = vpop.f32.mrb[0].mxu0
    %v2903 = vadd.f32 0.0, %v2902
    %v2904 = vpop.f32.mrb[0].mxu0
    %2905 = vdwg.mxu0
    %v2907 = vrot.slane %v2903, 2
    %v2908 = vrot.slane %v2903, 3
    %v2909 = vrot.slane %v2903, 4
    %v2910 = vrot.slane %v2903, 5
    %v2911 = vrot.slane %v2903, 6
    %v2912 = vrot.slane %v2903, 7
    %v2913 = vrot.slane %v2903, 1
    %v2922 = vadd.f32 %v198, %v2907
    %v2923 = vadd.f32 %v203, %v2908
    %v2924 = vadd.f32 %v208, %v2909
    %v2925 = vadd.f32 %v213, %v2910
    %v2926 = vadd.f32 %v218, %v2911
    %v2927 = vadd.f32 %v223, %v2912
    %v2928 = vadd.f32 %v228, %v2903
    %v2929 = vadd.f32 %v233, %v2913
    %v2930 = vmul.f32 %v2922, %v254
    %v2931 = vmul.f32 %v2923, %v254
    %v2932 = vmul.f32 %v2924, %v254
    %v2933 = vmul.f32 %v2925, %v254
    %v2934 = vmul.f32 %v2926, %v254
    %v2935 = vmul.f32 %v2927, %v254
    %v2936 = vmul.f32 %v2928, %v254
    %v2937 = vmul.f32 %v2929, %v254
    %v2938 = vtanh.pop %v2930
    %v2939 = vtanh.pop %v2931
    %v2940 = vtanh.pop %v2932
    %v2941 = vtanh.pop %v2933
    %v2942 = vtanh.pop %v2934
    %v2943 = vtanh.pop %v2935
    %v2944 = vtanh.pop %v2936
    %v2945 = vtanh.pop %v2937
    %v2946 = vmul.f32 %v2938, %v254
    %v2947 = vmul.f32 %v2939, %v254
    %v2948 = vmul.f32 %v2940, %v254
    %v2949 = vmul.f32 %v2941, %v254
    %v2950 = vmul.f32 %v2942, %v254
    %v2951 = vmul.f32 %v2943, %v254
    %v2952 = vmul.f32 %v2944, %v254
    %v2953 = vmul.f32 %v2945, %v254
    %v2954 = vadd.f32 %v2946, %v255
    %v2955 = vadd.f32 %v2947, %v255
    %v2956 = vadd.f32 %v2948, %v255
    %v2957 = vadd.f32 %v2949, %v255
    %v2958 = vadd.f32 %v2950, %v255
    %v2959 = vadd.f32 %v2951, %v255
    %v2960 = vadd.f32 %v2952, %v255
    %v2961 = vadd.f32 %v2953, %v255
    %v2970 = vrot.slane %v2629, 7
    %v2971 = vrot.slane %v2630, 7
    %v2972 = vrot.slane %v2631, 7
    %v2973 = vrot.slane %v2632, 7
    %v2974 = vrot.slane %v2633, 7
    %v2975 = vrot.slane %v2634, 7
    %v2976 = vrot.slane %v2635, 7
    %v2977 = vrot.slane %v2636, 7
    %v2986 = vmul.f32 %v2954, %v2970
    %v2987 = vmul.f32 %v2955, %v2971
    %v2988 = vmul.f32 %v2956, %v2972
    %v2989 = vmul.f32 %v2957, %v2973
    %v2990 = vmul.f32 %v2958, %v2974
    %v2991 = vmul.f32 %v2959, %v2975
    %v2992 = vmul.f32 %v2960, %v2976
    %v2993 = vmul.f32 %v2961, %v2977
    %3002 = vrot.lane.b32.xlu0 %v2954, 96
    %v3003 = vpop.permute.xlu0 %3002
    %3004 = vrot.lane.b32.xlu0 %v2955, 96
    %v3005 = vpop.permute.xlu0 %3004
    %3006 = vrot.lane.b32.xlu0 %v2956, 96
    %v3007 = vpop.permute.xlu0 %3006
    %3008 = vrot.lane.b32.xlu0 %v2957, 96
    %v3009 = vpop.permute.xlu0 %3008
    %3010 = vrot.lane.b32.xlu0 %v2958, 96
    %v3011 = vpop.permute.xlu0 %3010
    %3012 = vrot.lane.b32.xlu0 %v2959, 96
    %v3013 = vpop.permute.xlu0 %3012
    %3014 = vrot.lane.b32.xlu0 %v2960, 96
    %v3015 = vpop.permute.xlu0 %3014
    %3016 = vrot.lane.b32.xlu0 %v2961, 96
    %v3017 = vpop.permute.xlu0 %3016
    %v3026 = vmul.f32 %v2954, %v3003
    %v3027 = vmul.f32 %v2955, %v3005
    %v3028 = vmul.f32 %v2956, %v3007
    %v3029 = vmul.f32 %v2957, %v3009
    %v3030 = vmul.f32 %v2958, %v3011
    %v3031 = vmul.f32 %v2959, %v3013
    %v3032 = vmul.f32 %v2960, %v3015
    %v3033 = vmul.f32 %v2961, %v3017
    %3042 = vrot.lane.b32.xlu0 %v3026, 16
    %v3043 = vpop.permute.xlu0 %3042
    %3044 = vrot.lane.b32.xlu0 %v3027, 16
    %v3045 = vpop.permute.xlu0 %3044
    %3046 = vrot.lane.b32.xlu0 %v3028, 16
    %v3047 = vpop.permute.xlu0 %3046
    %3048 = vrot.lane.b32.xlu0 %v3029, 16
    %v3049 = vpop.permute.xlu0 %3048
    %3050 = vrot.lane.b32.xlu0 %v3030, 16
    %v3051 = vpop.permute.xlu0 %3050
    %3052 = vrot.lane.b32.xlu0 %v3031, 16
    %v3053 = vpop.permute.xlu0 %3052
    %3054 = vrot.lane.b32.xlu0 %v3032, 16
    %v3055 = vpop.permute.xlu0 %3054
    %3056 = vrot.lane.b32.xlu0 %v3033, 16
    %v3057 = vpop.permute.xlu0 %3056
    %v3066 = vadd.f32 %v2986, %v3043
    %v3067 = vadd.f32 %v2987, %v3045
    %v3068 = vadd.f32 %v2988, %v3047
    %v3069 = vadd.f32 %v2989, %v3049
    %v3070 = vadd.f32 %v2990, %v3051
    %v3071 = vadd.f32 %v2991, %v3053
    %v3072 = vadd.f32 %v2992, %v3055
    %v3073 = vadd.f32 %v2993, %v3057
    %v3074 = vtanh.pop %v3066
    %v3075 = vtanh.pop %v3067
    %v3076 = vtanh.pop %v3068
    %v3077 = vtanh.pop %v3069
    %v3078 = vtanh.pop %v3070
    %v3079 = vtanh.pop %v3071
    %v3080 = vtanh.pop %v3072
    %v3081 = vtanh.pop %v3073
    %3090 = vrot.lane.b32.xlu0 %v3074, 32
    %v3091 = vpop.permute.xlu0 %3090
    %3092 = vrot.lane.b32.xlu0 %v3075, 32
    %v3093 = vpop.permute.xlu0 %3092
    %3094 = vrot.lane.b32.xlu0 %v3076, 32
    %v3095 = vpop.permute.xlu0 %3094
    %3096 = vrot.lane.b32.xlu0 %v3077, 32
    %v3097 = vpop.permute.xlu0 %3096
    %3098 = vrot.lane.b32.xlu0 %v3078, 32
    %v3099 = vpop.permute.xlu0 %3098
    %3100 = vrot.lane.b32.xlu0 %v3079, 32
    %v3101 = vpop.permute.xlu0 %3100
    %3102 = vrot.lane.b32.xlu0 %v3080, 32
    %v3103 = vpop.permute.xlu0 %3102
    %3104 = vrot.lane.b32.xlu0 %v3081, 32
    %v3105 = vpop.permute.xlu0 %3104
    %v3114 = vmul.f32 %v2954, %v3091
    %v3115 = vmul.f32 %v2955, %v3093
    %v3116 = vmul.f32 %v2956, %v3095
    %v3117 = vmul.f32 %v2957, %v3097
    %v3118 = vmul.f32 %v2958, %v3099
    %v3119 = vmul.f32 %v2959, %v3101
    %v3120 = vmul.f32 %v2960, %v3103
    %v3121 = vmul.f32 %v2961, %v3105
    %v3130 = vrot.slane %v3115, 7
    %v3131 = vsel %vm549, %v3130, %v3114
    %v3132 = vrot.slane %v3116, 6
    %v3133 = vrot.slane %v3117, 5
    %v3134 = vsel %vm531, %v3133, %v3132
    %v3135 = vrot.slane %v3118, 4
    %v3136 = vsel %vm534, %v3135, %v3134
    %v3137 = vrot.slane %v3119, 3
    %v3138 = vsel %vm537, %v3137, %v3136
    %v3139 = vrot.slane %v3120, 2
    %v3140 = vsel %vm540, %v3139, %v3138
    %v3141 = vrot.slane %v3121, 1
    %v3142 = vsel %vm543, %v3141, %v3140
    %3143 = vrot.lane.b32.xlu0 %v3131, 80
    %v3144 = vpop.permute.xlu0 %3143
    %3145 = vrot.lane.b32.xlu0 %v3142, 80
    %v3146 = vpop.permute.xlu0 %3145
    %v3150 = vrot.slane %v2817, 2
    %3151 = vrot.lane.b32.xlu0 %v3150, 96
    %v3152 = vpop.permute.xlu0 %3151
    %v3154 = vsel %vm256, %v3144, %v3152
    %v3155 = vsel %vm256, %v3146, %v3152
    %vm3158 = vcmask 1041408
    %v3159 = vrot.slane %v3154, 6
    %v3160 = vrot.slane %v3155, 6
    %v3161 = vsel %vm3158, %v3159, %v3160
    %v3162 = vsel %vm555, %v3161, 0
    %3164 = vmatprep.subr.mxu0 0.0
    %3165 = vmatpush1.msra.mxu0 %v238
    %3166 = vmatprep.subr.mxu0 0.0
    %3167 = vmatpush1.msra.mxu0 %v239
    %3168 = vmatprep.subr.mxu0 0.0
    %3169 = vmatpush1.msra.mxu0 %v240
    %3170 = vmatprep.subr.mxu0 0.0
    %3171 = vmatpush1.msra.mxu0 %v241
    %3172 = vmatprep.subr.mxu0 0.0
    %3173 = vmatpush1.msra.mxu0 0.0
    %3174 = vmatprep.subr.mxu0 0.0
    %3175 = vmatpush1.msra.mxu0 0.0
    %3176 = vmatprep.subr.mxu0 0.0
    %3177 = vmatpush1.msra.mxu0 0.0
    %3178 = vmatprep.subr.mxu0 0.0
    %3179 = vmatpush1.msra.mxu0 0.0
    %3180 = vmatprep.subr.mxu0 0.0
    %3181 = vmatpush1.msra.mxu0 0.0
    %3182 = vmatprep.subr.mxu0 0.0
    %3183 = vmatpush1.msra.mxu0 0.0
    %3184 = vmatprep.subr.mxu0 0.0
    %3185 = vmatpush1.msra.mxu0 0.0
    %3186 = vmatprep.subr.mxu0 0.0
    %3187 = vmatpush1.msra.mxu0 0.0
    %3188 = vmatprep.subr.mxu0 0.0
    %3189 = vmatpush1.msra.mxu0 0.0
    %3190 = vmatprep.subr.mxu0 0.0
    %3191 = vmatpush1.msra.mxu0 0.0
    %3192 = vmatprep.subr.mxu0 0.0
    %3193 = vmatpush1.msra.mxu0 0.0
    %3194 = vmatprep.subr.mxu0 0.0
    %3195 = vmatpush1.msra.mxu0 0.0
    %3196 = vmatprep.subr.mxu0 0.0
    %3197 = vmatpush1.msra.mxu0 0.0
    %3198 = vmatprep.subr.mxu0 0.0
    %3199 = vmatpush1.msra.mxu0 0.0
    %3200 = vmatprep.subr.mxu0 0.0
    %3201 = vmatpush1.msra.mxu0 0.0
    %3202 = vmatprep.subr.mxu0 0.0
    %3203 = vmatpush1.msra.mxu0 0.0
    %3204 = vmatprep.subr.mxu0 0.0
    %3205 = vmatpush1.msra.mxu0 0.0
    %3206 = vmatprep.subr.mxu0 0.0
    %3207 = vmatpush1.msra.mxu0 0.0
    %3208 = vmatprep.subr.mxu0 0.0
    %3209 = vmatpush1.msra.mxu0 0.0
    %3210 = vmatprep.subr.mxu0 0.0
    %3211 = vmatpush1.msra.mxu0 0.0
    %3212 = vmatprep.subr.mxu0 0.0
    %3213 = vmatpush1.msra.mxu0 0.0
    %3214 = vmatprep.subr.mxu0 0.0
    %3215 = vmatpush1.msra.mxu0 0.0
    %3216 = vmatprep.subr.mxu0 0.0
    %3217 = vmatpush1.msra.mxu0 0.0
    %3218 = vmatprep.subr.mxu0 0.0
    %3219 = vmatpush1.msra.mxu0 0.0
    %3220 = vmatprep.subr.mxu0 0.0
    %3221 = vmatpush1.msra.mxu0 0.0
    %3222 = vmatprep.subr.mxu0 0.0
    %3223 = vmatpush1.msra.mxu0 0.0
    %3224 = vmatprep.subr.mxu0 0.0
    %3225 = vmatpush1.msra.mxu0 0.0
    %3226 = vmatprep.subr.mxu0 0.0
    %3227 = vmatpush1.msra.mxu0 0.0
    %3228 = vmatprep.mubr.f32.mxu0 0.0
    %3229 = vmatmul.mubr.f32.gmra.mrb[0].mxu0 %v3162
    %v3230 = vpop.f32.mrb[0].mxu0
    %v3231 = vadd.f32 %v247, %v3230
    %v3232 = vpop.f32.mrb[0].mxu0
    %3233 = vdwg.mxu0
    %v3234 = vmul.f32 %v3231, %v254
    %v3235 = vtanh.pop %v3234
    %v3236 = vmul.f32 %v3235, %v254
    %v3237 = vadd.f32 %v3236, %v255
    %v3238 = vmul.f32 %v3237, %v2811
    %3240 = vrot.lane.b32.xlu0 %v3237, 96
    %v3241 = vpop.permute.xlu0 %3240
    %v3243 = vmul.f32 %v3237, %v3241
    %3245 = vrot.lane.b32.xlu0 %v3243, 16
    %v3246 = vpop.permute.xlu0 %3245
    %v3248 = vadd.f32 %v3238, %v3246
    %v3249 = vtanh.pop %v3248
    %3251 = vrot.lane.b32.xlu0 %v3249, 32
    %v3252 = vpop.permute.xlu0 %3251
    %v3254 = vmul.f32 %v3237, %v3252
    %v3255 = vrot.slane %v3114, 6
    %v3256 = vrot.slane %v3115, 5
    %v3257 = vsel %vm531, %v3256, %v3255
    %v3258 = vrot.slane %v3116, 4
    %v3259 = vsel %vm534, %v3258, %v3257
    %v3260 = vrot.slane %v3117, 3
    %v3261 = vsel %vm537, %v3260, %v3259
    %v3262 = vrot.slane %v3118, 2
    %v3263 = vsel %vm540, %v3262, %v3261
    %v3264 = vrot.slane %v3119, 1
    %v3265 = vsel %vm543, %v3264, %v3263
    %v3266 = vsel %vm546, %v3120, %v3265
    %v3267 = vrot.slane %v3121, 7
    %v3268 = vsel %vm549, %v3267, %v3266
    %3269 = vrot.lane.b32.xlu0 %v3268, 80
    %v3270 = vpop.permute.xlu0 %3269
    %v3271 = vsel %vm256, %v3270, 0
    %3273 = vmatprep.subr.mxu0 0.0
    %3274 = vmatpush1.msra.mxu0 %v236
    %3275 = vmatprep.subr.mxu0 0.0
    %3276 = vmatpush1.msra.mxu0 %v237
    %3277 = vmatprep.subr.mxu0 0.0
    %3278 = vmatpush1.msra.mxu0 0.0
    %3279 = vmatprep.subr.mxu0 0.0
    %3280 = vmatpush1.msra.mxu0 0.0
    %3281 = vmatprep.subr.mxu0 0.0
    %3282 = vmatpush1.msra.mxu0 0.0
    %3283 = vmatprep.subr.mxu0 0.0
    %3284 = vmatpush1.msra.mxu0 0.0
    %3285 = vmatprep.subr.mxu0 0.0
    %3286 = vmatpush1.msra.mxu0 0.0
    %3287 = vmatprep.subr.mxu0 0.0
    %3288 = vmatpush1.msra.mxu0 0.0
    %3289 = vmatprep.subr.mxu0 0.0
    %3290 = vmatpush1.msra.mxu0 0.0
    %3291 = vmatprep.subr.mxu0 0.0
    %3292 = vmatpush1.msra.mxu0 0.0
    %3293 = vmatprep.subr.mxu0 0.0
    %3294 = vmatpush1.msra.mxu0 0.0
    %3295 = vmatprep.subr.mxu0 0.0
    %3296 = vmatpush1.msra.mxu0 0.0
    %3297 = vmatprep.subr.mxu0 0.0
    %3298 = vmatpush1.msra.mxu0 0.0
    %3299 = vmatprep.subr.mxu0 0.0
    %3300 = vmatpush1.msra.mxu0 0.0
    %3301 = vmatprep.subr.mxu0 0.0
    %3302 = vmatpush1.msra.mxu0 0.0
    %3303 = vmatprep.subr.mxu0 0.0
    %3304 = vmatpush1.msra.mxu0 0.0
    %3305 = vmatprep.subr.mxu0 0.0
    %3306 = vmatpush1.msra.mxu0 0.0
    %3307 = vmatprep.subr.mxu0 0.0
    %3308 = vmatpush1.msra.mxu0 0.0
    %3309 = vmatprep.subr.mxu0 0.0
    %3310 = vmatpush1.msra.mxu0 0.0
    %3311 = vmatprep.subr.mxu0 0.0
    %3312 = vmatpush1.msra.mxu0 0.0
    %3313 = vmatprep.subr.mxu0 0.0
    %3314 = vmatpush1.msra.mxu0 0.0
    %3315 = vmatprep.subr.mxu0 0.0
    %3316 = vmatpush1.msra.mxu0 0.0
    %3317 = vmatprep.subr.mxu0 0.0
    %3318 = vmatpush1.msra.mxu0 0.0
    %3319 = vmatprep.subr.mxu0 0.0
    %3320 = vmatpush1.msra.mxu0 0.0
    %3321 = vmatprep.subr.mxu0 0.0
    %3322 = vmatpush1.msra.mxu0 0.0
    %3323 = vmatprep.subr.mxu0 0.0
    %3324 = vmatpush1.msra.mxu0 0.0
    %3325 = vmatprep.subr.mxu0 0.0
    %3326 = vmatpush1.msra.mxu0 0.0
    %3327 = vmatprep.subr.mxu0 0.0
    %3328 = vmatpush1.msra.mxu0 0.0
    %3329 = vmatprep.subr.mxu0 0.0
    %3330 = vmatpush1.msra.mxu0 0.0
    %3331 = vmatprep.subr.mxu0 0.0
    %3332 = vmatpush1.msra.mxu0 0.0
    %3333 = vmatprep.subr.mxu0 0.0
    %3334 = vmatpush1.msra.mxu0 0.0
    %3335 = vmatprep.subr.mxu0 0.0
    %3336 = vmatpush1.msra.mxu0 0.0
    %3337 = vmatprep.mubr.f32.mxu0 0.0
    %3338 = vmatmul.mubr.f32.gmra.mrb[0].mxu0 %v3271
    %v3339 = vpop.f32.mrb[0].mxu0
    %v3340 = vadd.f32 0.0, %v3339
    %v3341 = vpop.f32.mrb[0].mxu0
    %3342 = vdwg.mxu0
    %v3344 = vrot.slane %v3340, 1
    %v3345 = vrot.slane %v3340, 2
    %v3346 = vrot.slane %v3340, 3
    %v3347 = vrot.slane %v3340, 4
    %v3348 = vrot.slane %v3340, 5
    %v3349 = vrot.slane %v3340, 6
    %v3350 = vrot.slane %v3340, 7
    %v3359 = vadd.f32 %v198, %v3344
    %v3360 = vadd.f32 %v203, %v3345
    %v3361 = vadd.f32 %v208, %v3346
    %v3362 = vadd.f32 %v213, %v3347
    %v3363 = vadd.f32 %v218, %v3348
    %v3364 = vadd.f32 %v223, %v3349
    %v3365 = vadd.f32 %v228, %v3350
    %v3366 = vadd.f32 %v233, %v3340
    %v3367 = vmul.f32 %v3359, %v254
    %v3368 = vmul.f32 %v3360, %v254
    %v3369 = vmul.f32 %v3361, %v254
    %v3370 = vmul.f32 %v3362, %v254
    %v3371 = vmul.f32 %v3363, %v254
    %v3372 = vmul.f32 %v3364, %v254
    %v3373 = vmul.f32 %v3365, %v254
    %v3374 = vmul.f32 %v3366, %v254
    %v3375 = vtanh.pop %v3367
    %v3376 = vtanh.pop %v3368
    %v3377 = vtanh.pop %v3369
    %v3378 = vtanh.pop %v3370
    %v3379 = vtanh.pop %v3371
    %v3380 = vtanh.pop %v3372
    %v3381 = vtanh.pop %v3373
    %v3382 = vtanh.pop %v3374
    %v3383 = vmul.f32 %v3375, %v254
    %v3384 = vmul.f32 %v3376, %v254
    %v3385 = vmul.f32 %v3377, %v254
    %v3386 = vmul.f32 %v3378, %v254
    %v3387 = vmul.f32 %v3379, %v254
    %v3388 = vmul.f32 %v3380, %v254
    %v3389 = vmul.f32 %v3381, %v254
    %v3390 = vmul.f32 %v3382, %v254
    %v3391 = vadd.f32 %v3383, %v255
    %v3392 = vadd.f32 %v3384, %v255
    %v3393 = vadd.f32 %v3385, %v255
    %v3394 = vadd.f32 %v3386, %v255
    %v3395 = vadd.f32 %v3387, %v255
    %v3396 = vadd.f32 %v3388, %v255
    %v3397 = vadd.f32 %v3389, %v255
    %v3398 = vadd.f32 %v3390, %v255
    %v3407 = vrot.slane %v3066, 7
    %v3408 = vrot.slane %v3067, 7
    %v3409 = vrot.slane %v3068, 7
    %v3410 = vrot.slane %v3069, 7
    %v3411 = vrot.slane %v3070, 7
    %v3412 = vrot.slane %v3071, 7
    %v3413 = vrot.slane %v3072, 7
    %v3414 = vrot.slane %v3073, 7
    %v3423 = vmul.f32 %v3391, %v3407
    %v3424 = vmul.f32 %v3392, %v3408
    %v3425 = vmul.f32 %v3393, %v3409
    %v3426 = vmul.f32 %v3394, %v3410
    %v3427 = vmul.f32 %v3395, %v3411
    %v3428 = vmul.f32 %v3396, %v3412
    %v3429 = vmul.f32 %v3397, %v3413
    %v3430 = vmul.f32 %v3398, %v3414
    %3439 = vrot.lane.b32.xlu0 %v3391, 96
    %v3440 = vpop.permute.xlu0 %3439
    %3441 = vrot.lane.b32.xlu0 %v3392, 96
    %v3442 = vpop.permute.xlu0 %3441
    %3443 = vrot.lane.b32.xlu0 %v3393, 96
    %v3444 = vpop.permute.xlu0 %3443
    %3445 = vrot.lane.b32.xlu0 %v3394, 96
    %v3446 = vpop.permute.xlu0 %3445
    %3447 = vrot.lane.b32.xlu0 %v3395, 96
    %v3448 = vpop.permute.xlu0 %3447
    %3449 = vrot.lane.b32.xlu0 %v3396, 96
    %v3450 = vpop.permute.xlu0 %3449
    %3451 = vrot.lane.b32.xlu0 %v3397, 96
    %v3452 = vpop.permute.xlu0 %3451
    %3453 = vrot.lane.b32.xlu0 %v3398, 96
    %v3454 = vpop.permute.xlu0 %3453
    %v3463 = vmul.f32 %v3391, %v3440
    %v3464 = vmul.f32 %v3392, %v3442
    %v3465 = vmul.f32 %v3393, %v3444
    %v3466 = vmul.f32 %v3394, %v3446
    %v3467 = vmul.f32 %v3395, %v3448
    %v3468 = vmul.f32 %v3396, %v3450
    %v3469 = vmul.f32 %v3397, %v3452
    %v3470 = vmul.f32 %v3398, %v3454
    %3479 = vrot.lane.b32.xlu0 %v3463, 16
    %v3480 = vpop.permute.xlu0 %3479
    %3481 = vrot.lane.b32.xlu0 %v3464, 16
    %v3482 = vpop.permute.xlu0 %3481
    %3483 = vrot.lane.b32.xlu0 %v3465, 16
    %v3484 = vpop.permute.xlu0 %3483
    %3485 = vrot.lane.b32.xlu0 %v3466, 16
    %v3486 = vpop.permute.xlu0 %3485
    %3487 = vrot.lane.b32.xlu0 %v3467, 16
    %v3488 = vpop.permute.xlu0 %3487
    %3489 = vrot.lane.b32.xlu0 %v3468, 16
    %v3490 = vpop.permute.xlu0 %3489
    %3491 = vrot.lane.b32.xlu0 %v3469, 16
    %v3492 = vpop.permute.xlu0 %3491
    %3493 = vrot.lane.b32.xlu0 %v3470, 16
    %v3494 = vpop.permute.xlu0 %3493
    %v3503 = vadd.f32 %v3423, %v3480
    %v3504 = vadd.f32 %v3424, %v3482
    %v3505 = vadd.f32 %v3425, %v3484
    %v3506 = vadd.f32 %v3426, %v3486
    %v3507 = vadd.f32 %v3427, %v3488
    %v3508 = vadd.f32 %v3428, %v3490
    %v3509 = vadd.f32 %v3429, %v3492
    %v3510 = vadd.f32 %v3430, %v3494
    %v3511 = vtanh.pop %v3503
    %v3512 = vtanh.pop %v3504
    %v3513 = vtanh.pop %v3505
    %v3514 = vtanh.pop %v3506
    %v3515 = vtanh.pop %v3507
    %v3516 = vtanh.pop %v3508
    %v3517 = vtanh.pop %v3509
    %v3518 = vtanh.pop %v3510
    %3527 = vrot.lane.b32.xlu0 %v3511, 32
    %v3528 = vpop.permute.xlu0 %3527
    %3529 = vrot.lane.b32.xlu0 %v3512, 32
    %v3530 = vpop.permute.xlu0 %3529
    %3531 = vrot.lane.b32.xlu0 %v3513, 32
    %v3532 = vpop.permute.xlu0 %3531
    %3533 = vrot.lane.b32.xlu0 %v3514, 32
    %v3534 = vpop.permute.xlu0 %3533
    %3535 = vrot.lane.b32.xlu0 %v3515, 32
    %v3536 = vpop.permute.xlu0 %3535
    %3537 = vrot.lane.b32.xlu0 %v3516, 32
    %v3538 = vpop.permute.xlu0 %3537
    %3539 = vrot.lane.b32.xlu0 %v3517, 32
    %v3540 = vpop.permute.xlu0 %3539
    %3541 = vrot.lane.b32.xlu0 %v3518, 32
    %v3542 = vpop.permute.xlu0 %3541
    %v3551 = vmul.f32 %v3391, %v3528
    %v3552 = vmul.f32 %v3392, %v3530
    %v3553 = vmul.f32 %v3393, %v3532
    %v3554 = vmul.f32 %v3394, %v3534
    %v3555 = vmul.f32 %v3395, %v3536
    %v3556 = vmul.f32 %v3396, %v3538
    %v3557 = vmul.f32 %v3397, %v3540
    %v3558 = vmul.f32 %v3398, %v3542
    %v3567 = vrot.slane %v3552, 7
    %v3568 = vrot.slane %v3553, 6
    %v3569 = vsel %vm531, %v3568, %v3567
    %v3570 = vrot.slane %v3554, 5
    %v3571 = vsel %vm534, %v3570, %v3569
    %v3572 = vrot.slane %v3555, 4
    %v3573 = vsel %vm537, %v3572, %v3571
    %v3574 = vrot.slane %v3556, 3
    %v3575 = vsel %vm540, %v3574, %v3573
    %v3576 = vrot.slane %v3557, 2
    %v3577 = vsel %vm543, %v3576, %v3575
    %v3578 = vrot.slane %v3558, 1
    %v3579 = vsel %vm546, %v3578, %v3577
    %3580 = vrot.lane.b32.xlu0 %v3551, 80
    %v3581 = vpop.permute.xlu0 %3580
    %3582 = vrot.lane.b32.xlu0 %v3579, 80
    %v3583 = vpop.permute.xlu0 %3582
    %v3587 = vrot.slane %v3254, 1
    %3588 = vrot.lane.b32.xlu0 %v3587, 96
    %v3589 = vpop.permute.xlu0 %3588
    %v3591 = vsel %vm256, %v3581, %v3589
    %v3592 = vsel %vm256, %v3583, %v3589
    %vm3595 = vcmask 1040384
    %v3596 = vrot.slane %v3591, 7
    %v3597 = vrot.slane %v3592, 7
    %v3598 = vsel %vm3595, %v3596, %v3597
    %v3599 = vsel %vm555, %v3598, 0
    %3601 = vmatprep.subr.mxu0 0.0
    %3602 = vmatpush1.msra.mxu0 %v238
    %3603 = vmatprep.subr.mxu0 0.0
    %3604 = vmatpush1.msra.mxu0 %v239
    %3605 = vmatprep.subr.mxu0 0.0
    %3606 = vmatpush1.msra.mxu0 %v240
    %3607 = vmatprep.subr.mxu0 0.0
    %3608 = vmatpush1.msra.mxu0 %v241
    %3609 = vmatprep.subr.mxu0 0.0
    %3610 = vmatpush1.msra.mxu0 0.0
    %3611 = vmatprep.subr.mxu0 0.0
    %3612 = vmatpush1.msra.mxu0 0.0
    %3613 = vmatprep.subr.mxu0 0.0
    %3614 = vmatpush1.msra.mxu0 0.0
    %3615 = vmatprep.subr.mxu0 0.0
    %3616 = vmatpush1.msra.mxu0 0.0
    %3617 = vmatprep.subr.mxu0 0.0
    %3618 = vmatpush1.msra.mxu0 0.0
    %3619 = vmatprep.subr.mxu0 0.0
    %3620 = vmatpush1.msra.mxu0 0.0
    %3621 = vmatprep.subr.mxu0 0.0
    %3622 = vmatpush1.msra.mxu0 0.0
    %3623 = vmatprep.subr.mxu0 0.0
    %3624 = vmatpush1.msra.mxu0 0.0
    %3625 = vmatprep.subr.mxu0 0.0
    %3626 = vmatpush1.msra.mxu0 0.0
    %3627 = vmatprep.subr.mxu0 0.0
    %3628 = vmatpush1.msra.mxu0 0.0
    %3629 = vmatprep.subr.mxu0 0.0
    %3630 = vmatpush1.msra.mxu0 0.0
    %3631 = vmatprep.subr.mxu0 0.0
    %3632 = vmatpush1.msra.mxu0 0.0
    %3633 = vmatprep.subr.mxu0 0.0
    %3634 = vmatpush1.msra.mxu0 0.0
    %3635 = vmatprep.subr.mxu0 0.0
    %3636 = vmatpush1.msra.mxu0 0.0
    %3637 = vmatprep.subr.mxu0 0.0
    %3638 = vmatpush1.msra.mxu0 0.0
    %3639 = vmatprep.subr.mxu0 0.0
    %3640 = vmatpush1.msra.mxu0 0.0
    %3641 = vmatprep.subr.mxu0 0.0
    %3642 = vmatpush1.msra.mxu0 0.0
    %3643 = vmatprep.subr.mxu0 0.0
    %3644 = vmatpush1.msra.mxu0 0.0
    %3645 = vmatprep.subr.mxu0 0.0
    %3646 = vmatpush1.msra.mxu0 0.0
    %3647 = vmatprep.subr.mxu0 0.0
    %3648 = vmatpush1.msra.mxu0 0.0
    %3649 = vmatprep.subr.mxu0 0.0
    %3650 = vmatpush1.msra.mxu0 0.0
    %3651 = vmatprep.subr.mxu0 0.0
    %3652 = vmatpush1.msra.mxu0 0.0
    %3653 = vmatprep.subr.mxu0 0.0
    %3654 = vmatpush1.msra.mxu0 0.0
    %3655 = vmatprep.subr.mxu0 0.0
    %3656 = vmatpush1.msra.mxu0 0.0
    %3657 = vmatprep.subr.mxu0 0.0
    %3658 = vmatpush1.msra.mxu0 0.0
    %3659 = vmatprep.subr.mxu0 0.0
    %3660 = vmatpush1.msra.mxu0 0.0
    %3661 = vmatprep.subr.mxu0 0.0
    %3662 = vmatpush1.msra.mxu0 0.0
    %3663 = vmatprep.subr.mxu0 0.0
    %3664 = vmatpush1.msra.mxu0 0.0
    %3665 = vmatprep.mubr.f32.mxu0 0.0
    %3666 = vmatmul.mubr.f32.gmra.mrb[0].mxu0 %v3599
    %v3667 = vpop.f32.mrb[0].mxu0
    %v3668 = vadd.f32 %v247, %v3667
    %v3669 = vpop.f32.mrb[0].mxu0
    %3670 = vdwg.mxu0
    %v3671 = vmul.f32 %v3668, %v254
    %v3672 = vtanh.pop %v3671
    %v3673 = vmul.f32 %v3672, %v254
    %v3674 = vadd.f32 %v3673, %v255
    %v3675 = vmul.f32 %v3674, %v3248
    %3677 = vrot.lane.b32.xlu0 %v3674, 96
    %v3678 = vpop.permute.xlu0 %3677
    %v3680 = vmul.f32 %v3674, %v3678
    %3682 = vrot.lane.b32.xlu0 %v3680, 16
    %v3683 = vpop.permute.xlu0 %3682
    %v3685 = vadd.f32 %v3675, %v3683
    %v3686 = vtanh.pop %v3685
    %3688 = vrot.lane.b32.xlu0 %v3686, 32
    %v3689 = vpop.permute.xlu0 %3688
    %v3691 = vmul.f32 %v3674, %v3689
    %v3692 = vcombine.high %v649, %v649
    %v3694 = vunpack.c.l.s4 1966171168
    %v3695 = vunpack.c.0.s8 %v3694
    %v3696 = vlaneseq
    %v3697 = vshrl.u32 %v3696, 7
    %v3698 = vsub.s32 %v3695, %v3697
    %v3699 = vrot.slane %v649, %v3698
    %v3701 = vunpack.c.l.s4 1966171168
    %v3702 = vunpack.c.0.s8 %v3701
    %v3703 = vlaneseq
    %v3704 = vshrl.u32 %v3703, 7
    %v3705 = vsub.s32 %v3702, %v3704
    %v3706 = vrot.slane %v3692, %v3705
    %v3707 = vcombine.high %v3699, %v3699
    %v3708 = vcombine.high %v3706, %v3706
    %v3710 = vunpack.c.l.s4 1966171168
    %v3711 = vunpack.c.0.s8 %v3710
    %v3712 = vlaneseq
    %v3713 = vshrl.u32 %v3712, 7
    %v3714 = vsub.s32 %v3711, %v3713
    %v3715 = vrot.slane %v3699, %v3714
    %v3717 = vunpack.c.l.s4 1966171168
    %v3718 = vunpack.c.0.s8 %v3717
    %v3719 = vlaneseq
    %v3720 = vshrl.u32 %v3719, 7
    %v3721 = vsub.s32 %v3718, %v3720
    %v3722 = vrot.slane %v3706, %v3721
    %v3724 = vunpack.c.l.s4 1966171168
    %v3725 = vunpack.c.0.s8 %v3724
    %v3726 = vlaneseq
    %v3727 = vshrl.u32 %v3726, 7
    %v3728 = vsub.s32 %v3725, %v3727
    %v3729 = vrot.slane %v3707, %v3728
    %v3731 = vunpack.c.l.s4 1966171168
    %v3732 = vunpack.c.0.s8 %v3731
    %v3733 = vlaneseq
    %v3734 = vshrl.u32 %v3733, 7
    %v3735 = vsub.s32 %v3732, %v3734
    %v3736 = vrot.slane %v3708, %v3735
    %v3737 = vcombine.high %v3715, %v3715
    %v3738 = vcombine.high %v3722, %v3722
    %v3739 = vcombine.high %v3729, %v3729
    %v3740 = vcombine.high %v3736, %v3736
    %v3749 = vcombine.high %v1070, %v1070
    %v3751 = vunpack.c.l.s4 1966171168
    %v3752 = vunpack.c.0.s8 %v3751
    %v3753 = vlaneseq
    %v3754 = vshrl.u32 %v3753, 7
    %v3755 = vsub.s32 %v3752, %v3754
    %v3756 = vrot.slane %v1070, %v3755
    %v3758 = vunpack.c.l.s4 1966171168
    %v3759 = vunpack.c.0.s8 %v3758
    %v3760 = vlaneseq
    %v3761 = vshrl.u32 %v3760, 7
    %v3762 = vsub.s32 %v3759, %v3761
    %v3763 = vrot.slane %v3749, %v3762
    %v3764 = vcombine.high %v3756, %v3756
    %v3765 = vcombine.high %v3763, %v3763
    %v3767 = vunpack.c.l.s4 1966171168
    %v3768 = vunpack.c.0.s8 %v3767
    %v3769 = vlaneseq
    %v3770 = vshrl.u32 %v3769, 7
    %v3771 = vsub.s32 %v3768, %v3770
    %v3772 = vrot.slane %v3756, %v3771
    %v3774 = vunpack.c.l.s4 1966171168
    %v3775 = vunpack.c.0.s8 %v3774
    %v3776 = vlaneseq
    %v3777 = vshrl.u32 %v3776, 7
    %v3778 = vsub.s32 %v3775, %v3777
    %v3779 = vrot.slane %v3763, %v3778
    %v3781 = vunpack.c.l.s4 1966171168
    %v3782 = vunpack.c.0.s8 %v3781
    %v3783 = vlaneseq
    %v3784 = vshrl.u32 %v3783, 7
    %v3785 = vsub.s32 %v3782, %v3784
    %v3786 = vrot.slane %v3764, %v3785
    %v3788 = vunpack.c.l.s4 1966171168
    %v3789 = vunpack.c.0.s8 %v3788
    %v3790 = vlaneseq
    %v3791 = vshrl.u32 %v3790, 7
    %v3792 = vsub.s32 %v3789, %v3791
    %v3793 = vrot.slane %v3765, %v3792
    %v3794 = vcombine.high %v3772, %v3772
    %v3795 = vcombine.high %v3779, %v3779
    %v3796 = vcombine.high %v3786, %v3786
    %v3797 = vcombine.high %v3793, %v3793
    %v3798 = vcombine.high %v1506, %v1506
    %v3800 = vunpack.c.l.s4 1966171168
    %v3801 = vunpack.c.0.s8 %v3800
    %v3802 = vlaneseq
    %v3803 = vshrl.u32 %v3802, 7
    %v3804 = vsub.s32 %v3801, %v3803
    %v3805 = vrot.slane %v1506, %v3804
    %v3807 = vunpack.c.l.s4 1966171168
    %v3808 = vunpack.c.0.s8 %v3807
    %v3809 = vlaneseq
    %v3810 = vshrl.u32 %v3809, 7
    %v3811 = vsub.s32 %v3808, %v3810
    %v3812 = vrot.slane %v3798, %v3811
    %v3813 = vcombine.high %v3805, %v3805
    %v3814 = vcombine.high %v3812, %v3812
    %v3816 = vunpack.c.l.s4 1966171168
    %v3817 = vunpack.c.0.s8 %v3816
    %v3818 = vlaneseq
    %v3819 = vshrl.u32 %v3818, 7
    %v3820 = vsub.s32 %v3817, %v3819
    %v3821 = vrot.slane %v3805, %v3820
    %v3823 = vunpack.c.l.s4 1966171168
    %v3824 = vunpack.c.0.s8 %v3823
    %v3825 = vlaneseq
    %v3826 = vshrl.u32 %v3825, 7
    %v3827 = vsub.s32 %v3824, %v3826
    %v3828 = vrot.slane %v3812, %v3827
    %v3830 = vunpack.c.l.s4 1966171168
    %v3831 = vunpack.c.0.s8 %v3830
    %v3832 = vlaneseq
    %v3833 = vshrl.u32 %v3832, 7
    %v3834 = vsub.s32 %v3831, %v3833
    %v3835 = vrot.slane %v3813, %v3834
    %v3837 = vunpack.c.l.s4 1966171168
    %v3838 = vunpack.c.0.s8 %v3837
    %v3839 = vlaneseq
    %v3840 = vshrl.u32 %v3839, 7
    %v3841 = vsub.s32 %v3838, %v3840
    %v3842 = vrot.slane %v3814, %v3841
    %v3843 = vcombine.high %v3821, %v3821
    %v3844 = vcombine.high %v3828, %v3828
    %v3845 = vcombine.high %v3835, %v3835
    %v3846 = vcombine.high %v3842, %v3842
    %v3847 = vcombine.high %v1943, %v1943
    %v3849 = vunpack.c.l.s4 1966171168
    %v3850 = vunpack.c.0.s8 %v3849
    %v3851 = vlaneseq
    %v3852 = vshrl.u32 %v3851, 7
    %v3853 = vsub.s32 %v3850, %v3852
    %v3854 = vrot.slane %v1943, %v3853
    %v3856 = vunpack.c.l.s4 1966171168
    %v3857 = vunpack.c.0.s8 %v3856
    %v3858 = vlaneseq
    %v3859 = vshrl.u32 %v3858, 7
    %v3860 = vsub.s32 %v3857, %v3859
    %v3861 = vrot.slane %v3847, %v3860
    %v3862 = vcombine.high %v3854, %v3854
    %v3863 = vcombine.high %v3861, %v3861
    %v3865 = vunpack.c.l.s4 1966171168
    %v3866 = vunpack.c.0.s8 %v3865
    %v3867 = vlaneseq
    %v3868 = vshrl.u32 %v3867, 7
    %v3869 = vsub.s32 %v3866, %v3868
    %v3870 = vrot.slane %v3854, %v3869
    %v3872 = vunpack.c.l.s4 1966171168
    %v3873 = vunpack.c.0.s8 %v3872
    %v3874 = vlaneseq
    %v3875 = vshrl.u32 %v3874, 7
    %v3876 = vsub.s32 %v3873, %v3875
    %v3877 = vrot.slane %v3861, %v3876
    %v3879 = vunpack.c.l.s4 1966171168
    %v3880 = vunpack.c.0.s8 %v3879
    %v3881 = vlaneseq
    %v3882 = vshrl.u32 %v3881, 7
    %v3883 = vsub.s32 %v3880, %v3882
    %v3884 = vrot.slane %v3862, %v3883
    %v3886 = vunpack.c.l.s4 1966171168
    %v3887 = vunpack.c.0.s8 %v3886
    %v3888 = vlaneseq
    %v3889 = vshrl.u32 %v3888, 7
    %v3890 = vsub.s32 %v3887, %v3889
    %v3891 = vrot.slane %v3863, %v3890
    %v3892 = vcombine.high %v3870, %v3870
    %v3893 = vcombine.high %v3877, %v3877
    %v3894 = vcombine.high %v3884, %v3884
    %v3895 = vcombine.high %v3891, %v3891
    %v3896 = vcombine.high %v2380, %v2380
    %v3898 = vunpack.c.l.s4 1966171168
    %v3899 = vunpack.c.0.s8 %v3898
    %v3900 = vlaneseq
    %v3901 = vshrl.u32 %v3900, 7
    %v3902 = vsub.s32 %v3899, %v3901
    %v3903 = vrot.slane %v2380, %v3902
    %v3905 = vunpack.c.l.s4 1966171168
    %v3906 = vunpack.c.0.s8 %v3905
    %v3907 = vlaneseq
    %v3908 = vshrl.u32 %v3907, 7
    %v3909 = vsub.s32 %v3906, %v3908
    %v3910 = vrot.slane %v3896, %v3909
    %v3911 = vcombine.high %v3903, %v3903
    %v3912 = vcombine.high %v3910, %v3910
    %v3914 = vunpack.c.l.s4 1966171168
    %v3915 = vunpack.c.0.s8 %v3914
    %v3916 = vlaneseq
    %v3917 = vshrl.u32 %v3916, 7
    %v3918 = vsub.s32 %v3915, %v3917
    %v3919 = vrot.slane %v3903, %v3918
    %v3921 = vunpack.c.l.s4 1966171168
    %v3922 = vunpack.c.0.s8 %v3921
    %v3923 = vlaneseq
    %v3924 = vshrl.u32 %v3923, 7
    %v3925 = vsub.s32 %v3922, %v3924
    %v3926 = vrot.slane %v3910, %v3925
    %v3928 = vunpack.c.l.s4 1966171168
    %v3929 = vunpack.c.0.s8 %v3928
    %v3930 = vlaneseq
    %v3931 = vshrl.u32 %v3930, 7
    %v3932 = vsub.s32 %v3929, %v3931
    %v3933 = vrot.slane %v3911, %v3932
    %v3935 = vunpack.c.l.s4 1966171168
    %v3936 = vunpack.c.0.s8 %v3935
    %v3937 = vlaneseq
    %v3938 = vshrl.u32 %v3937, 7
    %v3939 = vsub.s32 %v3936, %v3938
    %v3940 = vrot.slane %v3912, %v3939
    %v3941 = vcombine.high %v3919, %v3919
    %v3942 = vcombine.high %v3926, %v3926
    %v3943 = vcombine.high %v3933, %v3933
    %v3944 = vcombine.high %v3940, %v3940
    %v3945 = vcombine.high %v2817, %v2817
    %v3947 = vunpack.c.l.s4 1966171168
    %v3948 = vunpack.c.0.s8 %v3947
    %v3949 = vlaneseq
    %v3950 = vshrl.u32 %v3949, 7
    %v3951 = vsub.s32 %v3948, %v3950
    %v3952 = vrot.slane %v2817, %v3951
    %v3954 = vunpack.c.l.s4 1966171168
    %v3955 = vunpack.c.0.s8 %v3954
    %v3956 = vlaneseq
    %v3957 = vshrl.u32 %v3956, 7
    %v3958 = vsub.s32 %v3955, %v3957
    %v3959 = vrot.slane %v3945, %v3958
    %v3960 = vcombine.high %v3952, %v3952
    %v3961 = vcombine.high %v3959, %v3959
    %v3963 = vunpack.c.l.s4 1966171168
    %v3964 = vunpack.c.0.s8 %v3963
    %v3965 = vlaneseq
    %v3966 = vshrl.u32 %v3965, 7
    %v3967 = vsub.s32 %v3964, %v3966
    %v3968 = vrot.slane %v3952, %v3967
    %v3970 = vunpack.c.l.s4 1966171168
    %v3971 = vunpack.c.0.s8 %v3970
    %v3972 = vlaneseq
    %v3973 = vshrl.u32 %v3972, 7
    %v3974 = vsub.s32 %v3971, %v3973
    %v3975 = vrot.slane %v3959, %v3974
    %v3977 = vunpack.c.l.s4 1966171168
    %v3978 = vunpack.c.0.s8 %v3977
    %v3979 = vlaneseq
    %v3980 = vshrl.u32 %v3979, 7
    %v3981 = vsub.s32 %v3978, %v3980
    %v3982 = vrot.slane %v3960, %v3981
    %v3984 = vunpack.c.l.s4 1966171168
    %v3985 = vunpack.c.0.s8 %v3984
    %v3986 = vlaneseq
    %v3987 = vshrl.u32 %v3986, 7
    %v3988 = vsub.s32 %v3985, %v3987
    %v3989 = vrot.slane %v3961, %v3988
    %v3990 = vcombine.high %v3968, %v3968
    %v3991 = vcombine.high %v3975, %v3975
    %v3992 = vcombine.high %v3982, %v3982
    %v3993 = vcombine.high %v3989, %v3989
    %v3994 = vcombine.high %v3254, %v3254
    %v3996 = vunpack.c.l.s4 1966171168
    %v3997 = vunpack.c.0.s8 %v3996
    %v3998 = vlaneseq
    %v3999 = vshrl.u32 %v3998, 7
    %v4000 = vsub.s32 %v3997, %v3999
    %v4001 = vrot.slane %v3254, %v4000
    %v4003 = vunpack.c.l.s4 1966171168
    %v4004 = vunpack.c.0.s8 %v4003
    %v4005 = vlaneseq
    %v4006 = vshrl.u32 %v4005, 7
    %v4007 = vsub.s32 %v4004, %v4006
    %v4008 = vrot.slane %v3994, %v4007
    %v4009 = vcombine.high %v4001, %v4001
    %v4010 = vcombine.high %v4008, %v4008
    %v4012 = vunpack.c.l.s4 1966171168
    %v4013 = vunpack.c.0.s8 %v4012
    %v4014 = vlaneseq
    %v4015 = vshrl.u32 %v4014, 7
    %v4016 = vsub.s32 %v4013, %v4015
    %v4017 = vrot.slane %v4001, %v4016
    %v4019 = vunpack.c.l.s4 1966171168
    %v4020 = vunpack.c.0.s8 %v4019
    %v4021 = vlaneseq
    %v4022 = vshrl.u32 %v4021, 7
    %v4023 = vsub.s32 %v4020, %v4022
    %v4024 = vrot.slane %v4008, %v4023
    %v4026 = vunpack.c.l.s4 1966171168
    %v4027 = vunpack.c.0.s8 %v4026
    %v4028 = vlaneseq
    %v4029 = vshrl.u32 %v4028, 7
    %v4030 = vsub.s32 %v4027, %v4029
    %v4031 = vrot.slane %v4009, %v4030
    %v4033 = vunpack.c.l.s4 1966171168
    %v4034 = vunpack.c.0.s8 %v4033
    %v4035 = vlaneseq
    %v4036 = vshrl.u32 %v4035, 7
    %v4037 = vsub.s32 %v4034, %v4036
    %v4038 = vrot.slane %v4010, %v4037
    %v4039 = vcombine.high %v4017, %v4017
    %v4040 = vcombine.high %v4024, %v4024
    %v4041 = vcombine.high %v4031, %v4031
    %v4042 = vcombine.high %v4038, %v4038
    %v4044 = vcombine.high %v3691, %v3691
    %v4046 = vunpack.c.l.s4 1966171168
    %v4047 = vunpack.c.0.s8 %v4046
    %v4048 = vlaneseq
    %v4049 = vshrl.u32 %v4048, 7
    %v4050 = vsub.s32 %v4047, %v4049
    %v4051 = vrot.slane %v3691, %v4050
    %v4053 = vunpack.c.l.s4 1966171168
    %v4054 = vunpack.c.0.s8 %v4053
    %v4055 = vlaneseq
    %v4056 = vshrl.u32 %v4055, 7
    %v4057 = vsub.s32 %v4054, %v4056
    %v4058 = vrot.slane %v4044, %v4057
    %v4059 = vcombine.high %v4051, %v4051
    %v4060 = vcombine.high %v4058, %v4058
    %v4062 = vunpack.c.l.s4 1966171168
    %v4063 = vunpack.c.0.s8 %v4062
    %v4064 = vlaneseq
    %v4065 = vshrl.u32 %v4064, 7
    %v4066 = vsub.s32 %v4063, %v4065
    %v4067 = vrot.slane %v4051, %v4066
    %v4069 = vunpack.c.l.s4 1966171168
    %v4070 = vunpack.c.0.s8 %v4069
    %v4071 = vlaneseq
    %v4072 = vshrl.u32 %v4071, 7
    %v4073 = vsub.s32 %v4070, %v4072
    %v4074 = vrot.slane %v4058, %v4073
    %v4076 = vunpack.c.l.s4 1966171168
    %v4077 = vunpack.c.0.s8 %v4076
    %v4078 = vlaneseq
    %v4079 = vshrl.u32 %v4078, 7
    %v4080 = vsub.s32 %v4077, %v4079
    %v4081 = vrot.slane %v4059, %v4080
    %v4083 = vunpack.c.l.s4 1966171168
    %v4084 = vunpack.c.0.s8 %v4083
    %v4085 = vlaneseq
    %v4086 = vshrl.u32 %v4085, 7
    %v4087 = vsub.s32 %v4084, %v4086
    %v4088 = vrot.slane %v4060, %v4087
    %v4089 = vcombine.high %v4067, %v4067
    %v4090 = vcombine.high %v4074, %v4074
    %v4091 = vcombine.high %v4081, %v4081
    %v4092 = vcombine.high %v4088, %v4088
    %v4093 = vlaneseq
    %v4094 = vshrl.u32 %v4093, 7
    %v4095 = vsub.s32 0, %v4094
    %v4096 = vrot.slane %v3772, %v4095
    %v4097 = vlaneseq
    %v4098 = vshrl.u32 %v4097, 7
    %v4099 = vsub.s32 0, %v4098
    %v4100 = vrot.slane %v3786, %v4099
    %v4101 = vlaneseq
    %v4102 = vshrl.u32 %v4101, 7
    %v4103 = vsub.s32 0, %v4102
    %v4104 = vrot.slane %v3794, %v4103
    %v4105 = vlaneseq
    %v4106 = vshrl.u32 %v4105, 7
    %v4107 = vsub.s32 0, %v4106
    %v4108 = vrot.slane %v3796, %v4107
    %v4109 = vlaneseq
    %v4110 = vshrl.u32 %v4109, 7
    %v4111 = vsub.s32 0, %v4110
    %v4112 = vrot.slane %v3779, %v4111
    %v4113 = vlaneseq
    %v4114 = vshrl.u32 %v4113, 7
    %v4115 = vsub.s32 0, %v4114
    %v4116 = vrot.slane %v3793, %v4115
    %v4117 = vlaneseq
    %v4118 = vshrl.u32 %v4117, 7
    %v4119 = vsub.s32 0, %v4118
    %v4120 = vrot.slane %v3795, %v4119
    %v4121 = vlaneseq
    %v4122 = vshrl.u32 %v4121, 7
    %v4123 = vsub.s32 0, %v4122
    %v4124 = vrot.slane %v3797, %v4123
    %v4133 = vlaneseq
    %v4134 = vshrl.u32 %v4133, 7
    %v4135 = vsub.s32 0, %v4134
    %v4136 = vrot.slane %v3821, %v4135
    %v4137 = vlaneseq
    %v4138 = vshrl.u32 %v4137, 7
    %v4139 = vsub.s32 0, %v4138
    %v4140 = vrot.slane %v3835, %v4139
    %v4141 = vlaneseq
    %v4142 = vshrl.u32 %v4141, 7
    %v4143 = vsub.s32 0, %v4142
    %v4144 = vrot.slane %v3843, %v4143
    %v4145 = vlaneseq
    %v4146 = vshrl.u32 %v4145, 7
    %v4147 = vsub.s32 0, %v4146
    %v4148 = vrot.slane %v3845, %v4147
    %v4149 = vlaneseq
    %v4150 = vshrl.u32 %v4149, 7
    %v4151 = vsub.s32 0, %v4150
    %v4152 = vrot.slane %v3828, %v4151
    %v4153 = vlaneseq
    %v4154 = vshrl.u32 %v4153, 7
    %v4155 = vsub.s32 0, %v4154
    %v4156 = vrot.slane %v3842, %v4155
    %v4157 = vlaneseq
    %v4158 = vshrl.u32 %v4157, 7
    %v4159 = vsub.s32 0, %v4158
    %v4160 = vrot.slane %v3844, %v4159
    %v4161 = vlaneseq
    %v4162 = vshrl.u32 %v4161, 7
    %v4163 = vsub.s32 0, %v4162
    %v4164 = vrot.slane %v3846, %v4163
    %v4173 = vlaneseq
    %v4174 = vshrl.u32 %v4173, 7
    %v4175 = vsub.s32 0, %v4174
    %v4176 = vrot.slane %v3870, %v4175
    %v4177 = vlaneseq
    %v4178 = vshrl.u32 %v4177, 7
    %v4179 = vsub.s32 0, %v4178
    %v4180 = vrot.slane %v3884, %v4179
    %v4181 = vlaneseq
    %v4182 = vshrl.u32 %v4181, 7
    %v4183 = vsub.s32 0, %v4182
    %v4184 = vrot.slane %v3892, %v4183
    %v4185 = vlaneseq
    %v4186 = vshrl.u32 %v4185, 7
    %v4187 = vsub.s32 0, %v4186
    %v4188 = vrot.slane %v3894, %v4187
    %v4189 = vlaneseq
    %v4190 = vshrl.u32 %v4189, 7
    %v4191 = vsub.s32 0, %v4190
    %v4192 = vrot.slane %v3877, %v4191
    %v4193 = vlaneseq
    %v4194 = vshrl.u32 %v4193, 7
    %v4195 = vsub.s32 0, %v4194
    %v4196 = vrot.slane %v3891, %v4195
    %v4197 = vlaneseq
    %v4198 = vshrl.u32 %v4197, 7
    %v4199 = vsub.s32 0, %v4198
    %v4200 = vrot.slane %v3893, %v4199
    %v4201 = vlaneseq
    %v4202 = vshrl.u32 %v4201, 7
    %v4203 = vsub.s32 0, %v4202
    %v4204 = vrot.slane %v3895, %v4203
    %v4213 = vlaneseq
    %v4214 = vshrl.u32 %v4213, 7
    %v4215 = vsub.s32 0, %v4214
    %v4216 = vrot.slane %v3919, %v4215
    %v4217 = vlaneseq
    %v4218 = vshrl.u32 %v4217, 7
    %v4219 = vsub.s32 0, %v4218
    %v4220 = vrot.slane %v3933, %v4219
    %v4221 = vlaneseq
    %v4222 = vshrl.u32 %v4221, 7
    %v4223 = vsub.s32 0, %v4222
    %v4224 = vrot.slane %v3941, %v4223
    %v4225 = vlaneseq
    %v4226 = vshrl.u32 %v4225, 7
    %v4227 = vsub.s32 0, %v4226
    %v4228 = vrot.slane %v3943, %v4227
    %v4229 = vlaneseq
    %v4230 = vshrl.u32 %v4229, 7
    %v4231 = vsub.s32 0, %v4230
    %v4232 = vrot.slane %v3926, %v4231
    %v4233 = vlaneseq
    %v4234 = vshrl.u32 %v4233, 7
    %v4235 = vsub.s32 0, %v4234
    %v4236 = vrot.slane %v3940, %v4235
    %v4237 = vlaneseq
    %v4238 = vshrl.u32 %v4237, 7
    %v4239 = vsub.s32 0, %v4238
    %v4240 = vrot.slane %v3942, %v4239
    %v4241 = vlaneseq
    %v4242 = vshrl.u32 %v4241, 7
    %v4243 = vsub.s32 0, %v4242
    %v4244 = vrot.slane %v3944, %v4243
    %v4253 = vlaneseq
    %v4254 = vshrl.u32 %v4253, 7
    %v4255 = vsub.s32 0, %v4254
    %v4256 = vrot.slane %v3968, %v4255
    %v4257 = vlaneseq
    %v4258 = vshrl.u32 %v4257, 7
    %v4259 = vsub.s32 0, %v4258
    %v4260 = vrot.slane %v3982, %v4259
    %v4261 = vlaneseq
    %v4262 = vshrl.u32 %v4261, 7
    %v4263 = vsub.s32 0, %v4262
    %v4264 = vrot.slane %v3990, %v4263
    %v4265 = vlaneseq
    %v4266 = vshrl.u32 %v4265, 7
    %v4267 = vsub.s32 0, %v4266
    %v4268 = vrot.slane %v3992, %v4267
    %v4269 = vlaneseq
    %v4270 = vshrl.u32 %v4269, 7
    %v4271 = vsub.s32 0, %v4270
    %v4272 = vrot.slane %v3975, %v4271
    %v4273 = vlaneseq
    %v4274 = vshrl.u32 %v4273, 7
    %v4275 = vsub.s32 0, %v4274
    %v4276 = vrot.slane %v3989, %v4275
    %v4277 = vlaneseq
    %v4278 = vshrl.u32 %v4277, 7
    %v4279 = vsub.s32 0, %v4278
    %v4280 = vrot.slane %v3991, %v4279
    %v4281 = vlaneseq
    %v4282 = vshrl.u32 %v4281, 7
    %v4283 = vsub.s32 0, %v4282
    %v4284 = vrot.slane %v3993, %v4283
    %v4293 = vlaneseq
    %v4294 = vshrl.u32 %v4293, 7
    %v4295 = vsub.s32 0, %v4294
    %v4296 = vrot.slane %v4017, %v4295
    %v4297 = vlaneseq
    %v4298 = vshrl.u32 %v4297, 7
    %v4299 = vsub.s32 0, %v4298
    %v4300 = vrot.slane %v4031, %v4299
    %v4301 = vlaneseq
    %v4302 = vshrl.u32 %v4301, 7
    %v4303 = vsub.s32 0, %v4302
    %v4304 = vrot.slane %v4039, %v4303
    %v4305 = vlaneseq
    %v4306 = vshrl.u32 %v4305, 7
    %v4307 = vsub.s32 0, %v4306
    %v4308 = vrot.slane %v4041, %v4307
    %v4309 = vlaneseq
    %v4310 = vshrl.u32 %v4309, 7
    %v4311 = vsub.s32 0, %v4310
    %v4312 = vrot.slane %v4024, %v4311
    %v4313 = vlaneseq
    %v4314 = vshrl.u32 %v4313, 7
    %v4315 = vsub.s32 0, %v4314
    %v4316 = vrot.slane %v4038, %v4315
    %v4317 = vlaneseq
    %v4318 = vshrl.u32 %v4317, 7
    %v4319 = vsub.s32 0, %v4318
    %v4320 = vrot.slane %v4040, %v4319
    %v4321 = vlaneseq
    %v4322 = vshrl.u32 %v4321, 7
    %v4323 = vsub.s32 0, %v4322
    %v4324 = vrot.slane %v4042, %v4323
    %v4333 = vlaneseq
    %v4334 = vshrl.u32 %v4333, 7
    %v4335 = vsub.s32 0, %v4334
    %v4336 = vrot.slane %v4067, %v4335
    %v4337 = vlaneseq
    %v4338 = vshrl.u32 %v4337, 7
    %v4339 = vsub.s32 0, %v4338
    %v4340 = vrot.slane %v4081, %v4339
    %v4341 = vlaneseq
    %v4342 = vshrl.u32 %v4341, 7
    %v4343 = vsub.s32 0, %v4342
    %v4344 = vrot.slane %v4089, %v4343
    %v4345 = vlaneseq
    %v4346 = vshrl.u32 %v4345, 7
    %v4347 = vsub.s32 0, %v4346
    %v4348 = vrot.slane %v4091, %v4347
    %v4349 = vlaneseq
    %v4350 = vshrl.u32 %v4349, 7
    %v4351 = vsub.s32 0, %v4350
    %v4352 = vrot.slane %v4074, %v4351
    %v4353 = vlaneseq
    %v4354 = vshrl.u32 %v4353, 7
    %v4355 = vsub.s32 0, %v4354
    %v4356 = vrot.slane %v4088, %v4355
    %v4357 = vlaneseq
    %v4358 = vshrl.u32 %v4357, 7
    %v4359 = vsub.s32 0, %v4358
    %v4360 = vrot.slane %v4090, %v4359
    %v4361 = vlaneseq
    %v4362 = vshrl.u32 %v4361, 7
    %v4363 = vsub.s32 0, %v4362
    %v4364 = vrot.slane %v4092, %v4363
    %v4373 = vsel %vm3595, %v3715, %v4096
    %v4374 = vsel %vm3595, %v3729, %v4100
    %v4375 = vsel %vm3595, %v3737, %v4104
    %v4376 = vsel %vm3595, %v3739, %v4108
    %v4377 = vsel %vm3595, %v3722, %v4112
    %v4378 = vsel %vm3595, %v3736, %v4116
    %v4379 = vsel %vm3595, %v3738, %v4120
    %v4380 = vsel %vm3595, %v3740, %v4124
    %v4381 = vsel %vm3158, %v4373, %v4136
    %v4382 = vsel %vm3158, %v4374, %v4140
    %v4383 = vsel %vm3158, %v4375, %v4144
    %v4384 = vsel %vm3158, %v4376, %v4148
    %v4385 = vsel %vm3158, %v4377, %v4152
    %v4386 = vsel %vm3158, %v4378, %v4156
    %v4387 = vsel %vm3158, %v4379, %v4160
    %v4388 = vsel %vm3158, %v4380, %v4164
    %v4389 = vsel %vm2721, %v4381, %v4176
    %v4390 = vsel %vm2721, %v4382, %v4180
    %v4391 = vsel %vm2721, %v4383, %v4184
    %v4392 = vsel %vm2721, %v4384, %v4188
    %v4393 = vsel %vm2721, %v4385, %v4192
    %v4394 = vsel %vm2721, %v4386, %v4196
    %v4395 = vsel %vm2721, %v4387, %v4200
    %v4396 = vsel %vm2721, %v4388, %v4204
    %v4397 = vsel %vm2284, %v4389, %v4216
    %v4398 = vsel %vm2284, %v4390, %v4220
    %v4399 = vsel %vm2284, %v4391, %v4224
    %v4400 = vsel %vm2284, %v4392, %v4228
    %v4401 = vsel %vm2284, %v4393, %v4232
    %v4402 = vsel %vm2284, %v4394, %v4236
    %v4403 = vsel %vm2284, %v4395, %v4240
    %v4404 = vsel %vm2284, %v4396, %v4244
    %v4405 = vsel %vm1847, %v4397, %v4256
    %v4406 = vsel %vm1847, %v4398, %v4260
    %v4407 = vsel %vm1847, %v4399, %v4264
    %v4408 = vsel %vm1847, %v4400, %v4268
    %v4409 = vsel %vm1847, %v4401, %v4272
    %v4410 = vsel %vm1847, %v4402, %v4276
    %v4411 = vsel %vm1847, %v4403, %v4280
    %v4412 = vsel %vm1847, %v4404, %v4284
    %v4413 = vsel %vm127, %v4405, %v4296
    %v4414 = vsel %vm127, %v4406, %v4300
    %v4415 = vsel %vm127, %v4407, %v4304
    %v4416 = vsel %vm127, %v4408, %v4308
    %v4417 = vsel %vm127, %v4409, %v4312
    %v4418 = vsel %vm127, %v4410, %v4316
    %v4419 = vsel %vm127, %v4411, %v4320
    %v4420 = vsel %vm127, %v4412, %v4324
    %v4421 = vsel %vm974, %v4413, %v4336
    %v4422 = vsel %vm974, %v4414, %v4340
    %v4423 = vsel %vm974, %v4415, %v4344
    %v4424 = vsel %vm974, %v4416, %v4348
    %v4425 = vsel %vm974, %v4417, %v4352
    %v4426 = vsel %vm974, %v4418, %v4356
    %v4427 = vsel %vm974, %v4419, %v4360
    %v4428 = vsel %vm974, %v4420, %v4364
    %v4429 = vld [vmem:[%s6] sm:$0xff]
    %v4430 = vld [vmem:[%s6 + $0x8] sm:$0xff]
    %v4431 = vld [vmem:[#allocation2] sm:$0x1]
    %v4433 = vlaneseq
    %v4434 = vshrl.u32 %v4433, 7
    %v4435 = vsub.s32 0, %v4434
    %v4436 = vrot.slane %v4431, %v4435
    %4446 = vrot.lane.b32.xlu0 %v4421, 80
    %v4447 = vpop.permute.xlu0 %4446
    %4448 = vrot.lane.b32.xlu0 %v4422, 80
    %v4449 = vpop.permute.xlu0 %4448
    %4450 = vrot.lane.b32.xlu0 %v4423, 80
    %v4451 = vpop.permute.xlu0 %4450
    %4452 = vrot.lane.b32.xlu0 %v4424, 80
    %v4453 = vpop.permute.xlu0 %4452
    %4454 = vrot.lane.b32.xlu0 %v4425, 80
    %v4455 = vpop.permute.xlu0 %4454
    %4456 = vrot.lane.b32.xlu0 %v4426, 80
    %v4457 = vpop.permute.xlu0 %4456
    %4458 = vrot.lane.b32.xlu0 %v4427, 80
    %v4459 = vpop.permute.xlu0 %4458
    %4460 = vrot.lane.b32.xlu0 %v4428, 80
    %v4461 = vpop.permute.xlu0 %4460
    %v4462 = vsel %vm256, %v4447, 0
    %v4464 = vsel %vm256, %v4449, 0
    %v4466 = vsel %vm256, %v4451, 0
    %v4468 = vsel %vm256, %v4453, 0
    %v4470 = vsel %vm256, %v4455, 0
    %v4472 = vsel %vm256, %v4457, 0
    %v4474 = vsel %vm256, %v4459, 0
    %v4476 = vsel %vm256, %v4461, 0
    %4478 = vmatprep.subr.mxu0 0.0
    %4479 = vmatpush1.msra.mxu0 %v4429
    %4480 = vmatprep.subr.mxu0 0.0
    %4481 = vmatpush1.msra.mxu0 %v4430
    %4482 = vmatprep.subr.mxu0 0.0
    %4483 = vmatpush1.msra.mxu0 0.0
    %4484 = vmatprep.subr.mxu0 0.0
    %4485 = vmatpush1.msra.mxu0 0.0
    %4486 = vmatprep.subr.mxu0 0.0
    %4487 = vmatpush1.msra.mxu0 0.0
    %4488 = vmatprep.subr.mxu0 0.0
    %4489 = vmatpush1.msra.mxu0 0.0
    %4490 = vmatprep.subr.mxu0 0.0
    %4491 = vmatpush1.msra.mxu0 0.0
    %4492 = vmatprep.subr.mxu0 0.0
    %4493 = vmatpush1.msra.mxu0 0.0
    %4494 = vmatprep.subr.mxu0 0.0
    %4495 = vmatpush1.msra.mxu0 0.0
    %4496 = vmatprep.subr.mxu0 0.0
    %4497 = vmatpush1.msra.mxu0 0.0
    %4498 = vmatprep.subr.mxu0 0.0
    %4499 = vmatpush1.msra.mxu0 0.0
    %4500 = vmatprep.subr.mxu0 0.0
    %4501 = vmatpush1.msra.mxu0 0.0
    %4502 = vmatprep.subr.mxu0 0.0
    %4503 = vmatpush1.msra.mxu0 0.0
    %4504 = vmatprep.subr.mxu0 0.0
    %4505 = vmatpush1.msra.mxu0 0.0
    %4506 = vmatprep.subr.mxu0 0.0
    %4507 = vmatpush1.msra.mxu0 0.0
    %4508 = vmatprep.subr.mxu0 0.0
    %4509 = vmatpush1.msra.mxu0 0.0
    %4510 = vmatprep.subr.mxu0 0.0
    %4511 = vmatpush1.msra.mxu0 0.0
    %4512 = vmatprep.subr.mxu0 0.0
    %4513 = vmatpush1.msra.mxu0 0.0
    %4514 = vmatprep.subr.mxu0 0.0
    %4515 = vmatpush1.msra.mxu0 0.0
    %4516 = vmatprep.subr.mxu0 0.0
    %4517 = vmatpush1.msra.mxu0 0.0
    %4518 = vmatprep.subr.mxu0 0.0
    %4519 = vmatpush1.msra.mxu0 0.0
    %4520 = vmatprep.subr.mxu0 0.0
    %4521 = vmatpush1.msra.mxu0 0.0
    %4522 = vmatprep.subr.mxu0 0.0
    %4523 = vmatpush1.msra.mxu0 0.0
    %4524 = vmatprep.subr.mxu0 0.0
    %4525 = vmatpush1.msra.mxu0 0.0
    %4526 = vmatprep.subr.mxu0 0.0
    %4527 = vmatpush1.msra.mxu0 0.0
    %4528 = vmatprep.subr.mxu0 0.0
    %4529 = vmatpush1.msra.mxu0 0.0
    %4530 = vmatprep.subr.mxu0 0.0
    %4531 = vmatpush1.msra.mxu0 0.0
    %4532 = vmatprep.subr.mxu0 0.0
    %4533 = vmatpush1.msra.mxu0 0.0
    %4534 = vmatprep.subr.mxu0 0.0
    %4535 = vmatpush1.msra.mxu0 0.0
    %4536 = vmatprep.subr.mxu0 0.0
    %4537 = vmatpush1.msra.mxu0 0.0
    %4538 = vmatprep.subr.mxu0 0.0
    %4539 = vmatpush1.msra.mxu0 0.0
    %4540 = vmatprep.subr.mxu0 0.0
    %4541 = vmatpush1.msra.mxu0 0.0
    %4542 = vmatprep.mubr.f32.mxu0 0.0
    %4543 = vmatmul.mubr.f32.gmra.mrb[0].mxu0 %v4462
    %v4544 = vpop.f32.mrb[0].mxu0
    %v4545 = vadd.f32 %v4436, %v4544
    %v4546 = vpop.f32.mrb[0].mxu0
    %4547 = vmatprep.mubr.f32.mxu0 0.0
    %4548 = vmatmul.mubr.f32.gmra.mrb[0].mxu0 %v4464
    %v4549 = vpop.f32.mrb[0].mxu0
    %v4550 = vadd.f32 %v4436, %v4549
    %v4551 = vpop.f32.mrb[0].mxu0
    %4552 = vmatprep.mubr.f32.mxu0 0.0
    %4553 = vmatmul.mubr.f32.gmra.mrb[0].mxu0 %v4466
    %v4554 = vpop.f32.mrb[0].mxu0
    %v4555 = vadd.f32 %v4436, %v4554
    %v4556 = vpop.f32.mrb[0].mxu0
    %4557 = vmatprep.mubr.f32.mxu0 0.0
    %4558 = vmatmul.mubr.f32.gmra.mrb[0].mxu0 %v4468
    %v4559 = vpop.f32.mrb[0].mxu0
    %v4560 = vadd.f32 %v4436, %v4559
    %v4561 = vpop.f32.mrb[0].mxu0
    %4562 = vmatprep.mubr.f32.mxu0 0.0
    %4563 = vmatmul.mubr.f32.gmra.mrb[0].mxu0 %v4470
    %v4564 = vpop.f32.mrb[0].mxu0
    %v4565 = vadd.f32 %v4436, %v4564
    %v4566 = vpop.f32.mrb[0].mxu0
    %4567 = vmatprep.mubr.f32.mxu0 0.0
    %4568 = vmatmul.mubr.f32.gmra.mrb[0].mxu0 %v4472
    %v4569 = vpop.f32.mrb[0].mxu0
    %v4570 = vadd.f32 %v4436, %v4569
    %v4571 = vpop.f32.mrb[0].mxu0
    %4572 = vmatprep.mubr.f32.mxu0 0.0
    %4573 = vmatmul.mubr.f32.gmra.mrb[0].mxu0 %v4474
    %v4574 = vpop.f32.mrb[0].mxu0
    %v4575 = vadd.f32 %v4436, %v4574
    %v4576 = vpop.f32.mrb[0].mxu0
    %4577 = vmatprep.mubr.f32.mxu0 0.0
    %4578 = vmatmul.mubr.f32.gmra.mrb[0].mxu0 %v4476
    %v4579 = vpop.f32.mrb[0].mxu0
    %v4580 = vadd.f32 %v4436, %v4579
    %v4581 = vpop.f32.mrb[0].mxu0
    %4582 = vdwg.mxu0
    %vm4583 = vcmask 7168
    %4584 = vst.msk [vmem:[%s8] sm:$0xff] %vm4583, %v4545
    %4585 = vst.msk [vmem:[%s8 + $0x8] sm:$0xff] %vm4583, %v4550
    %4586 = vst.msk [vmem:[%s8 + $0x10] sm:$0xff] %vm4583, %v4555
    %4587 = vst.msk [vmem:[%s8 + $0x18] sm:$0xff] %vm4583, %v4560
    %4588 = vst.msk [vmem:[%s8 + $0x20] sm:$0xff] %vm4583, %v4565
    %4589 = vst.msk [vmem:[%s8 + $0x28] sm:$0xff] %vm4583, %v4570
    %4590 = vst.msk [vmem:[%s8 + $0x30] sm:$0xff] %vm4583, %v4575
    %4591 = vst.msk [vmem:[%s8 + $0x38] sm:$0xff] %vm4583, %v4580
    // Predicated region
    $region50: #{fund_lstm_forward.1} parent=1 // pred_check
      _
    $region51: #{fund_lstm_forward.1} parent=1 // pred_check_branch
      %4593 = sbr.rel (0) target = $region53
    $region52: #{fund_lstm_forward.1} parent=1 // pred_region
      _
    $region53: #{fund_lstm_forward.1} parent=1 // pred_fallthru
      _
    // Predicated region
    $region54: #{fund_lstm_forward.1} parent=1 // pred_check
      _
    $region55: #{fund_lstm_forward.1} parent=1 // pred_check_branch
      %4595 = sbr.rel (0) target = $region57
    $region56: #{fund_lstm_forward.1} parent=1 // pred_region
      _
    $region57: #{fund_lstm_forward.1} parent=1 // pred_fallthru
      _
    %4596 = vsyncpa [#allocation4], 1
    %4597 = vsyncpa [#allocation6], 1
    %4598 = vsyncpa [#allocation9], 1

</llo_original>
